<compile_context>
chip_gen: v6e
topology: v6e:2x2x1
jax: 0.10.0
libtpu: 0.0.40
codegen_flags: <defaults>
</compile_context>

<pallas_src>
import math

import jax
import jax.numpy as jnp
from jax.experimental import pallas as pl
from jax.experimental.pallas import tpu as pltpu

_EPS = 1e-5                      # torch.nn.BatchNorm2d default eps
_KPAD = 16                       # bf16 sublane quantum (>= 8) for the K=Cin matmul
_GELU_K = math.sqrt(2.0 / math.pi)


def _gelu_tanh(x):
    # tanh-approximate GELU (== jax.nn.gelu(approximate=True)): the tanh runs on
    # the EUP, off the saturated VALU slot.  Numerics differ by ~1e-3 from the
    # exact-erf nn.GELU default — deliberate tradeoff per the perf review.
    k = jnp.asarray(_GELU_K, dtype=x.dtype)
    a = jnp.asarray(0.044715, dtype=x.dtype)
    return 0.5 * x * (1.0 + jnp.tanh(k * (x + a * (x * x) * x)))


def _make_edgeconv1_kernel(m_true, m_pad, w_dim, elem_dtype):
    """Fused conv1x1 -> BN(train stats) -> GELU (x3) -> mean-over-W, (C, N) layout."""
    n_true = m_true * w_dim
    inv_n = 1.0 / float(n_true)
    inv_w = 1.0 / float(w_dim)

    def kernel(x_ref, w1_ref, w2_ref, w3_ref, bn_ref, mask_ref, o_ref):
        c = o_ref.shape[0]
        mask = mask_ref[...]                      # (1, N_pad) 0/1 in elem_dtype

        def bn_gelu(y, layer, out_dtype, apply_mask):
            # BatchNorm2d, training mode: batch mean and *biased* variance over
            # (B, H, W) == the lane axis, folded into one per-channel scale and
            # shift.  Single fused pass for sum and sum-of-squares (stack on
            # sublanes, one cross-lane reduce).  Pad lanes hold exact zeros on
            # entry, so they drop out of both sums; divide by the true N.
            # TODO(synk): running-statistics buffer updates (a training-time
            # side effect of BatchNorm2d) are not reproduced; they do not
            # affect this forward output.
            stacked = jnp.concatenate([y, y * y], axis=0)           # (2C, N_pad)
            sums = jnp.sum(stacked, axis=1, keepdims=True) * inv_n  # (2C, 1)
            mu = sums[:c]
            var = jnp.maximum(sums[c:] - mu * mu, 0.0)   # guard f32 cancellation
            g = bn_ref[:, 2 * layer:2 * layer + 1]
            b = bn_ref[:, 2 * layer + 1:2 * layer + 2]
            s = g * jax.lax.rsqrt(var + _EPS)
            t = b - mu * s
            # Apply + GELU in the (bf16) elementwise dtype on v6e/v7x.
            h = _gelu_tanh(y.astype(out_dtype) * s.astype(out_dtype)
                           + t.astype(out_dtype))
            if apply_mask:
                h = h * mask.astype(out_dtype)   # keep pad lanes at exactly 0
            return h

        # conv1/2/3: (Cout, K) @ (K, N_pad) MXU matmuls, bf16 in / f32 accumulate.
        y = jnp.dot(w1_ref[...], x_ref[...], preferred_element_type=jnp.float32)
        h = bn_gelu(y, 0, elem_dtype, apply_mask=True)
        y = jnp.dot(w2_ref[...], h.astype(jnp.bfloat16),
                    preferred_element_type=jnp.float32)
        h = bn_gelu(y, 1, elem_dtype, apply_mask=True)
        y = jnp.dot(w3_ref[...], h.astype(jnp.bfloat16),
                    preferred_element_type=jnp.float32)
        # Layer 3 feeds only the output: keep f32, no mask (pad lanes discarded
        # by the wrapper slice).
        h = bn_gelu(y, 2, jnp.float32, apply_mask=False)

        # torch.mean(x, dim=3): lanes are W-major (n = w*M_pad + m), so the W
        # samples of output column m are W contiguous, 128-lane-aligned
        # (Cout, M_pad) slabs — pairwise tree sum on the VPU, unmasked
        # lane-dense store of the (Cout, M_pad) result.
        parts = [h[:, i * m_pad:(i + 1) * m_pad] for i in range(w_dim)]
        while len(parts) > 1:
            nxt = [parts[i] + parts[i + 1] for i in range(0, len(parts) - 1, 2)]
            if len(parts) % 2:
                nxt.append(parts[-1])
            parts = nxt
        o_ref[...] = (parts[0] * inv_w).astype(o_ref.dtype)

    return kernel


def edgeconv1_forward(x, params, *, elementwise_dtype=jnp.bfloat16):
    """x: (B, H, W, C_in) float32.  Returns (B, C_out, H) like the torch module.

    elementwise_dtype: bf16 exploits the v6e/v7x bf16 VPU/EUP datapath; pass
    jnp.float32 on v5e (no bf16 vector datapath).
    """
    B, H, W, Cin = x.shape
    Cout = params["w1"].shape[0]
    M = B * H
    Mp = -(-M // 128) * 128            # lane-align per-W slabs and output store
    Kp = -(-Cin // _KPAD) * _KPAD      # pad Cin for the bf16 MXU contraction
    Np = W * Mp

    # (B,H,W,Cin) -> (Cin, W, B*H) -> zero-pad to (Kp, W, Mp) -> (Kp, Np), with
    # W-major lane ordering n = w*Mp + (b*H + h); bf16 operands for the MXU.
    xt = jnp.transpose(x, (3, 2, 0, 1)).reshape(Cin, W, M)
    xt = jnp.pad(xt, ((0, Kp - Cin), (0, 0), (0, Mp - M)))
    xt = xt.reshape(Kp, Np).astype(jnp.bfloat16)

    w1 = jnp.pad(params["w1"], ((0, 0), (0, Kp - Cin))).astype(jnp.bfloat16)
    w2 = params["w2"].astype(jnp.bfloat16)
    w3 = params["w3"].astype(jnp.bfloat16)

    # Pack the six per-channel BN vectors into one (Cout, 8) f32 input
    # (columns g1,b1,g2,b2,g3,b3,0,0) -> one DMA instead of six tiny ones.
    bn = jnp.stack([params[k] for k in ("g1", "b1", "g2", "b2", "g3", "b3")],
                   axis=1).astype(jnp.float32)
    bn = jnp.pad(bn, ((0, 0), (0, 2)))

    # 0/1 validity mask over lanes: column m of each W-block is real iff m < M.
    mask = (jnp.arange(Mp) < M).astype(elementwise_dtype)
    mask = jnp.tile(mask, (W,)).reshape(1, Np)

    # Whole-problem VMEM residency: training-mode BN needs global statistics of
    # every layer's output, so the fused single pass keeps the (Cout, Np) slabs
    # resident.  Cap scoped VMEM from the actual chip capacity with headroom
    # for Mosaic internal scratch / DMA buffers (never the full physical VMEM).
    # TODO(synk): for N beyond this VMEM budget, restructure as a tiled
    # two-phase grid (per-tile stats accumulate, then normalize/apply) with a
    # "parallel" N axis so v7x's second TensorCore is used and DMA overlaps
    # compute; at EdgeConv-typical sizes the single fused pass fits easily.
    try:
        vmem_cap = int(pltpu.get_tpu_info().vmem_capacity_bytes)
    except Exception:
        vmem_cap = 64 << 20        # conservative fallback (v7x per-TC physical)
    act = 4 * Cout * Np
    need = 2 * 2 * Kp * Np + 10 * act + 4 * Cout * Mp + (1 << 20)
    vmem_bytes = int(min(max(need, 8 << 20), int(vmem_cap * 0.8)))

    cost = pl.CostEstimate(
        flops=int(2 * Np * Cout * (Kp + 2 * Cout) + 24 * Cout * Np),
        transcendentals=int(3 * Cout * Np + 6 * Cout),
        bytes_accessed=int(2 * Kp * Np + 2 * Cout * (Kp + 2 * Cout)
                           + 4 * 8 * Cout + 2 * Np + 4 * Cout * Mp),
    )

    kernel = _make_edgeconv1_kernel(M, Mp, W, elementwise_dtype)
    args = (xt, w1, w2, w3, bn, mask)
    vmem = pl.BlockSpec(memory_space=pltpu.MemorySpace.VMEM)
    out = pl.pallas_call(
        kernel,
        out_shape=jax.ShapeDtypeStruct((Cout, Mp), jnp.float32),
        in_specs=[vmem] * len(args),
        out_specs=vmem,
        compiler_params=pltpu.CompilerParams(vmem_limit_bytes=vmem_bytes),
        cost_estimate=cost,
    )(*args)

    # (Cout, Mp) -> drop pad lanes -> (Cout, B, H) -> (B, Cout, H)
    return out[:, :M].reshape(Cout, B, H).transpose(1, 0, 2)


def edgeconv1_reference(x, params, *, elementwise_dtype=jnp.bfloat16):
    """Pure-JAX mirror of the PyTorch forward (train-mode BN).

    Mirrors the kernel's deliberate precision choices so the comparison
    isolates layout / statistics / reduction bugs: bf16 matmul operands with
    f32 accumulation, folded BN scale/shift computed in f32, BN-apply and
    tanh-GELU in `elementwise_dtype` for layers 1-2 and f32 for layer 3.
    """
    B, H, W, Cin = x.shape
    h = x.reshape(-1, Cin)
    for i in (1, 2, 3):
        w = params[f"w{i}"].astype(jnp.bfloat16)            # (Cout, Cin_i)
        y = jnp.dot(h.astype(jnp.bfloat16), w.T, preferred_element_type=jnp.float32)
        mu = jnp.mean(y, axis=0, keepdims=True)
        var = jnp.maximum(jnp.mean(y * y, axis=0, keepdims=True) - mu * mu, 0.0)
        s = params[f"g{i}"][None, :] * jax.lax.rsqrt(var + _EPS)
        t = params[f"b{i}"][None, :] - mu * s
        dt = elementwise_dtype if i < 3 else jnp.float32
        h = _gelu_tanh(y.astype(dt) * s.astype(dt) + t.astype(dt))
    Cout = h.shape[-1]
    return (h.astype(jnp.float32).reshape(B, H, W, Cout)
            .mean(axis=2).transpose(0, 2, 1))


def make_params(key, c_in, c_out):
    """Deterministic synthetic parameters (shapes match the torch module)."""
    ks = jax.random.split(key, 9)
    # Conv2d(k=1, bias=False) weights (Cout, Cin, 1, 1) stored as (Cout, Cin).
    w1 = jax.random.normal(ks[0], (c_out, c_in), jnp.float32) / math.sqrt(c_in)
    w2 = jax.random.normal(ks[1], (c_out, c_out), jnp.float32) / math.sqrt(c_out)
    w3 = jax.random.normal(ks[2], (c_out, c_out), jnp.float32) / math.sqrt(c_out)
    p = {"w1": w1, "w2": w2, "w3": w3}
    for i, (kg, kb) in enumerate(((ks[3], ks[4]), (ks[5], ks[6]),
                                  (ks[7], ks[8])), start=1):
        p[f"g{i}"] = 1.0 + 0.1 * jax.random.normal(kg, (c_out,), jnp.float32)
        p[f"b{i}"] = 0.1 * jax.random.normal(kb, (c_out,), jnp.float32)
    return p


if __name__ == "__main__":
    B, H, W, C_IN, C_OUT = 2, 16, 16, 4, 32

    key = jax.random.PRNGKey(0)
    k_x, k_p = jax.random.split(key)
    x = jax.random.normal(k_x, (B, H, W, C_IN), jnp.float32)
    params = make_params(k_p, C_IN, C_OUT)

    fwd = jax.jit(edgeconv1_forward)
    out = jax.block_until_ready(fwd(x, params))
    ref = jax.block_until_ready(edgeconv1_reference(x, params))

    assert out.shape == (B, C_OUT, H), out.shape
    # Kernel and reference share the same precision decisions (bf16 matmul
    # operands, bf16 BN-apply/GELU for layers 1-2, f32 stats); residual
    # differences are reduction-order / bf16 rounding-boundary flips.  Any real
    # layout / BN / mean bug shows up as O(0.1)+ error.
    err = float(jnp.max(jnp.abs(out - ref)))
    assert err < 1e-2, err
    print("KERNEL_OK")
</pallas_src>

<mosaic_0001>
module attributes {stable_mosaic.version = 11 : i64} {
  func.func @kernel(%arg0: memref<16x2048xbf16, #tpu.memory_space<vmem>>, %arg1: memref<32x16xbf16, #tpu.memory_space<vmem>>, %arg2: memref<32x32xbf16, #tpu.memory_space<vmem>>, %arg3: memref<32x32xbf16, #tpu.memory_space<vmem>>, %arg4: memref<32x8xf32, #tpu.memory_space<vmem>>, %arg5: memref<1x2048xbf16, #tpu.memory_space<vmem>>, %arg6: memref<32x128xf32, #tpu.memory_space<vmem>>) attributes {dimension_semantics = [], scalar_prefetch = 0 : i64, scratch_operands = 0 : i64, tpu.core_type = #tpu.core_type<tc>} {
    %c0 = arith.constant 0 : index
    %c0_0 = arith.constant 0 : index
    %0 = vector.load %arg5[%c0, %c0_0] : memref<1x2048xbf16, #tpu.memory_space<vmem>>, vector<1x2048xbf16>
    %c0_1 = arith.constant 0 : index
    %c0_2 = arith.constant 0 : index
    %1 = vector.load %arg1[%c0_1, %c0_2] : memref<32x16xbf16, #tpu.memory_space<vmem>>, vector<32x16xbf16>
    %c0_3 = arith.constant 0 : index
    %c0_4 = arith.constant 0 : index
    %2 = vector.load %arg0[%c0_3, %c0_4] : memref<16x2048xbf16, #tpu.memory_space<vmem>>, vector<16x2048xbf16>
    %cst = arith.constant dense<0.000000e+00> : vector<32x2048xf32>
    %3 = tpu.matmul %1, %2, %cst {dimension_numbers = #tpu.dot_dimension_numbers<[1], [0], [0], [1], [0, 0, 1, 1], [], []>} : vector<32x16xbf16>, vector<16x2048xbf16>, vector<32x2048xf32> -> vector<32x2048xf32>
    %4 = arith.mulf %3, %3 : vector<32x2048xf32>
    %5 = tpu.concatenate %3, %4 in 0 : vector<32x2048xf32>, vector<32x2048xf32> -> vector<64x2048xf32>
    %cst_5 = arith.constant dense<0.000000e+00> : vector<64xf32>
    %6 = vector.multi_reduction <add>, %5, %cst_5 [1] : vector<64x2048xf32> to vector<64xf32>
    %7 = vector.shape_cast %6 : vector<64xf32> to vector<64x1xf32>
    %cst_6 = arith.constant 0.001953125 : f32
    %8 = vector.broadcast %cst_6 : f32 to vector<64x1xf32>
    %9 = arith.mulf %7, %8 : vector<64x1xf32>
    %10 = vector.extract_strided_slice %9 {offsets = [0, 0], sizes = [32, 1], strides = [1, 1]} : vector<64x1xf32> to vector<32x1xf32>
    %11 = vector.extract_strided_slice %9 {offsets = [32, 0], sizes = [32, 1], strides = [1, 1]} : vector<64x1xf32> to vector<32x1xf32>
    %12 = arith.mulf %10, %10 : vector<32x1xf32>
    %13 = arith.subf %11, %12 : vector<32x1xf32>
    %cst_7 = arith.constant 0.000000e+00 : f32
    %14 = vector.broadcast %cst_7 : f32 to vector<32x1xf32>
    %15 = arith.maximumf %13, %14 : vector<32x1xf32>
    %c0_8 = arith.constant 0 : index
    %c0_9 = arith.constant 0 : index
    %16 = vector.load %arg4[%c0_8, %c0_9] : memref<32x8xf32, #tpu.memory_space<vmem>>, vector<32x1xf32>
    %c0_10 = arith.constant 0 : index
    %c1 = arith.constant 1 : index
    %17 = vector.load %arg4[%c0_10, %c1] : memref<32x8xf32, #tpu.memory_space<vmem>>, vector<32x1xf32>
    %cst_11 = arith.constant 9.99999974E-6 : f32
    %18 = vector.broadcast %cst_11 : f32 to vector<32x1xf32>
    %19 = arith.addf %15, %18 : vector<32x1xf32>
    %20 = math.rsqrt %19 : vector<32x1xf32>
    %21 = arith.mulf %16, %20 : vector<32x1xf32>
    %22 = arith.mulf %10, %21 : vector<32x1xf32>
    %23 = arith.subf %17, %22 : vector<32x1xf32>
    %24 = arith.truncf %3 : vector<32x2048xf32> to vector<32x2048xbf16>
    %25 = arith.truncf %21 : vector<32x1xf32> to vector<32x1xbf16>
    %26 = vector.broadcast %25 : vector<32x1xbf16> to vector<32x2048xbf16>
    %27 = arith.mulf %24, %26 : vector<32x2048xbf16>
    %28 = arith.truncf %23 : vector<32x1xf32> to vector<32x1xbf16>
    %29 = vector.broadcast %28 : vector<32x1xbf16> to vector<32x2048xbf16>
    %30 = arith.addf %27, %29 : vector<32x2048xbf16>
    %cst_12 = arith.constant 5.000000e-01 : bf16
    %31 = vector.broadcast %cst_12 : bf16 to vector<32x2048xbf16>
    %32 = arith.mulf %31, %30 : vector<32x2048xbf16>
    %33 = arith.mulf %30, %30 : vector<32x2048xbf16>
    %cst_13 = arith.constant 4.467770e-02 : bf16
    %34 = vector.broadcast %cst_13 : bf16 to vector<32x2048xbf16>
    %35 = arith.mulf %34, %33 : vector<32x2048xbf16>
    %36 = arith.mulf %35, %30 : vector<32x2048xbf16>
    %37 = arith.addf %30, %36 : vector<32x2048xbf16>
    %cst_14 = arith.constant 7.968750e-01 : bf16
    %38 = vector.broadcast %cst_14 : bf16 to vector<32x2048xbf16>
    %39 = arith.mulf %38, %37 : vector<32x2048xbf16>
    %40 = math.tanh %39 : vector<32x2048xbf16>
    %cst_15 = arith.constant 1.000000e+00 : bf16
    %41 = vector.broadcast %cst_15 : bf16 to vector<32x2048xbf16>
    %42 = arith.addf %41, %40 : vector<32x2048xbf16>
    %43 = arith.mulf %32, %42 : vector<32x2048xbf16>
    %44 = vector.broadcast %0 : vector<1x2048xbf16> to vector<32x2048xbf16>
    %45 = arith.mulf %43, %44 : vector<32x2048xbf16>
    %c0_16 = arith.constant 0 : index
    %c0_17 = arith.constant 0 : index
    %46 = vector.load %arg2[%c0_16, %c0_17] : memref<32x32xbf16, #tpu.memory_space<vmem>>, vector<32x32xbf16>
    %cst_18 = arith.constant dense<0.000000e+00> : vector<32x2048xf32>
    %47 = tpu.matmul %46, %45, %cst_18 {dimension_numbers = #tpu.dot_dimension_numbers<[1], [0], [0], [1], [0, 0, 1, 1], [], []>} : vector<32x32xbf16>, vector<32x2048xbf16>, vector<32x2048xf32> -> vector<32x2048xf32>
    %48 = arith.mulf %47, %47 : vector<32x2048xf32>
    %49 = tpu.concatenate %47, %48 in 0 : vector<32x2048xf32>, vector<32x2048xf32> -> vector<64x2048xf32>
    %cst_19 = arith.constant dense<0.000000e+00> : vector<64xf32>
    %50 = vector.multi_reduction <add>, %49, %cst_19 [1] : vector<64x2048xf32> to vector<64xf32>
    %51 = vector.shape_cast %50 : vector<64xf32> to vector<64x1xf32>
    %cst_20 = arith.constant 0.001953125 : f32
    %52 = vector.broadcast %cst_20 : f32 to vector<64x1xf32>
    %53 = arith.mulf %51, %52 : vector<64x1xf32>
    %54 = vector.extract_strided_slice %53 {offsets = [0, 0], sizes = [32, 1], strides = [1, 1]} : vector<64x1xf32> to vector<32x1xf32>
    %55 = vector.extract_strided_slice %53 {offsets = [32, 0], sizes = [32, 1], strides = [1, 1]} : vector<64x1xf32> to vector<32x1xf32>
    %56 = arith.mulf %54, %54 : vector<32x1xf32>
    %57 = arith.subf %55, %56 : vector<32x1xf32>
    %cst_21 = arith.constant 0.000000e+00 : f32
    %58 = vector.broadcast %cst_21 : f32 to vector<32x1xf32>
    %59 = arith.maximumf %57, %58 : vector<32x1xf32>
    %c0_22 = arith.constant 0 : index
    %c2 = arith.constant 2 : index
    %60 = vector.load %arg4[%c0_22, %c2] : memref<32x8xf32, #tpu.memory_space<vmem>>, vector<32x1xf32>
    %c0_23 = arith.constant 0 : index
    %c3 = arith.constant 3 : index
    %61 = vector.load %arg4[%c0_23, %c3] : memref<32x8xf32, #tpu.memory_space<vmem>>, vector<32x1xf32>
    %cst_24 = arith.constant 9.99999974E-6 : f32
    %62 = vector.broadcast %cst_24 : f32 to vector<32x1xf32>
    %63 = arith.addf %59, %62 : vector<32x1xf32>
    %64 = math.rsqrt %63 : vector<32x1xf32>
    %65 = arith.mulf %60, %64 : vector<32x1xf32>
    %66 = arith.mulf %54, %65 : vector<32x1xf32>
    %67 = arith.subf %61, %66 : vector<32x1xf32>
    %68 = arith.truncf %47 : vector<32x2048xf32> to vector<32x2048xbf16>
    %69 = arith.truncf %65 : vector<32x1xf32> to vector<32x1xbf16>
    %70 = vector.broadcast %69 : vector<32x1xbf16> to vector<32x2048xbf16>
    %71 = arith.mulf %68, %70 : vector<32x2048xbf16>
    %72 = arith.truncf %67 : vector<32x1xf32> to vector<32x1xbf16>
    %73 = vector.broadcast %72 : vector<32x1xbf16> to vector<32x2048xbf16>
    %74 = arith.addf %71, %73 : vector<32x2048xbf16>
    %cst_25 = arith.constant 5.000000e-01 : bf16
    %75 = vector.broadcast %cst_25 : bf16 to vector<32x2048xbf16>
    %76 = arith.mulf %75, %74 : vector<32x2048xbf16>
    %77 = arith.mulf %74, %74 : vector<32x2048xbf16>
    %cst_26 = arith.constant 4.467770e-02 : bf16
    %78 = vector.broadcast %cst_26 : bf16 to vector<32x2048xbf16>
    %79 = arith.mulf %78, %77 : vector<32x2048xbf16>
    %80 = arith.mulf %79, %74 : vector<32x2048xbf16>
    %81 = arith.addf %74, %80 : vector<32x2048xbf16>
    %cst_27 = arith.constant 7.968750e-01 : bf16
    %82 = vector.broadcast %cst_27 : bf16 to vector<32x2048xbf16>
    %83 = arith.mulf %82, %81 : vector<32x2048xbf16>
    %84 = math.tanh %83 : vector<32x2048xbf16>
    %cst_28 = arith.constant 1.000000e+00 : bf16
    %85 = vector.broadcast %cst_28 : bf16 to vector<32x2048xbf16>
    %86 = arith.addf %85, %84 : vector<32x2048xbf16>
    %87 = arith.mulf %76, %86 : vector<32x2048xbf16>
    %88 = vector.broadcast %0 : vector<1x2048xbf16> to vector<32x2048xbf16>
    %89 = arith.mulf %87, %88 : vector<32x2048xbf16>
    %c0_29 = arith.constant 0 : index
    %c0_30 = arith.constant 0 : index
    %90 = vector.load %arg3[%c0_29, %c0_30] : memref<32x32xbf16, #tpu.memory_space<vmem>>, vector<32x32xbf16>
    %cst_31 = arith.constant dense<0.000000e+00> : vector<32x2048xf32>
    %91 = tpu.matmul %90, %89, %cst_31 {dimension_numbers = #tpu.dot_dimension_numbers<[1], [0], [0], [1], [0, 0, 1, 1], [], []>} : vector<32x32xbf16>, vector<32x2048xbf16>, vector<32x2048xf32> -> vector<32x2048xf32>
    %92 = arith.mulf %91, %91 : vector<32x2048xf32>
    %93 = tpu.concatenate %91, %92 in 0 : vector<32x2048xf32>, vector<32x2048xf32> -> vector<64x2048xf32>
    %cst_32 = arith.constant dense<0.000000e+00> : vector<64xf32>
    %94 = vector.multi_reduction <add>, %93, %cst_32 [1] : vector<64x2048xf32> to vector<64xf32>
    %95 = vector.shape_cast %94 : vector<64xf32> to vector<64x1xf32>
    %cst_33 = arith.constant 0.001953125 : f32
    %96 = vector.broadcast %cst_33 : f32 to vector<64x1xf32>
    %97 = arith.mulf %95, %96 : vector<64x1xf32>
    %98 = vector.extract_strided_slice %97 {offsets = [0, 0], sizes = [32, 1], strides = [1, 1]} : vector<64x1xf32> to vector<32x1xf32>
    %99 = vector.extract_strided_slice %97 {offsets = [32, 0], sizes = [32, 1], strides = [1, 1]} : vector<64x1xf32> to vector<32x1xf32>
    %100 = arith.mulf %98, %98 : vector<32x1xf32>
    %101 = arith.subf %99, %100 : vector<32x1xf32>
    %cst_34 = arith.constant 0.000000e+00 : f32
    %102 = vector.broadcast %cst_34 : f32 to vector<32x1xf32>
    %103 = arith.maximumf %101, %102 : vector<32x1xf32>
    %c0_35 = arith.constant 0 : index
    %c4 = arith.constant 4 : index
    %104 = vector.load %arg4[%c0_35, %c4] : memref<32x8xf32, #tpu.memory_space<vmem>>, vector<32x1xf32>
    %c0_36 = arith.constant 0 : index
    %c5 = arith.constant 5 : index
    %105 = vector.load %arg4[%c0_36, %c5] : memref<32x8xf32, #tpu.memory_space<vmem>>, vector<32x1xf32>
    %cst_37 = arith.constant 9.99999974E-6 : f32
    %106 = vector.broadcast %cst_37 : f32 to vector<32x1xf32>
    %107 = arith.addf %103, %106 : vector<32x1xf32>
    %108 = math.rsqrt %107 : vector<32x1xf32>
    %109 = arith.mulf %104, %108 : vector<32x1xf32>
    %110 = arith.mulf %98, %109 : vector<32x1xf32>
    %111 = arith.subf %105, %110 : vector<32x1xf32>
    %112 = vector.broadcast %109 : vector<32x1xf32> to vector<32x2048xf32>
    %113 = arith.mulf %91, %112 : vector<32x2048xf32>
    %114 = vector.broadcast %111 : vector<32x1xf32> to vector<32x2048xf32>
    %115 = arith.addf %113, %114 : vector<32x2048xf32>
    %cst_38 = arith.constant 5.000000e-01 : f32
    %116 = vector.broadcast %cst_38 : f32 to vector<32x2048xf32>
    %117 = arith.mulf %116, %115 : vector<32x2048xf32>
    %118 = arith.mulf %115, %115 : vector<32x2048xf32>
    %cst_39 = arith.constant 4.471500e-02 : f32
    %119 = vector.broadcast %cst_39 : f32 to vector<32x2048xf32>
    %120 = arith.mulf %119, %118 : vector<32x2048xf32>
    %121 = arith.mulf %120, %115 : vector<32x2048xf32>
    %122 = arith.addf %115, %121 : vector<32x2048xf32>
    %cst_40 = arith.constant 0.797884583 : f32
    %123 = vector.broadcast %cst_40 : f32 to vector<32x2048xf32>
    %124 = arith.mulf %123, %122 : vector<32x2048xf32>
    %125 = math.tanh %124 : vector<32x2048xf32>
    %cst_41 = arith.constant 1.000000e+00 : f32
    %126 = vector.broadcast %cst_41 : f32 to vector<32x2048xf32>
    %127 = arith.addf %126, %125 : vector<32x2048xf32>
    %128 = arith.mulf %117, %127 : vector<32x2048xf32>
    %129 = vector.extract_strided_slice %128 {offsets = [0, 0], sizes = [32, 128], strides = [1, 1]} : vector<32x2048xf32> to vector<32x128xf32>
    %130 = vector.extract_strided_slice %128 {offsets = [0, 128], sizes = [32, 128], strides = [1, 1]} : vector<32x2048xf32> to vector<32x128xf32>
    %131 = vector.extract_strided_slice %128 {offsets = [0, 256], sizes = [32, 128], strides = [1, 1]} : vector<32x2048xf32> to vector<32x128xf32>
    %132 = vector.extract_strided_slice %128 {offsets = [0, 384], sizes = [32, 128], strides = [1, 1]} : vector<32x2048xf32> to vector<32x128xf32>
    %133 = vector.extract_strided_slice %128 {offsets = [0, 512], sizes = [32, 128], strides = [1, 1]} : vector<32x2048xf32> to vector<32x128xf32>
    %134 = vector.extract_strided_slice %128 {offsets = [0, 640], sizes = [32, 128], strides = [1, 1]} : vector<32x2048xf32> to vector<32x128xf32>
    %135 = vector.extract_strided_slice %128 {offsets = [0, 768], sizes = [32, 128], strides = [1, 1]} : vector<32x2048xf32> to vector<32x128xf32>
    %136 = vector.extract_strided_slice %128 {offsets = [0, 896], sizes = [32, 128], strides = [1, 1]} : vector<32x2048xf32> to vector<32x128xf32>
    %137 = vector.extract_strided_slice %128 {offsets = [0, 1024], sizes = [32, 128], strides = [1, 1]} : vector<32x2048xf32> to vector<32x128xf32>
    %138 = vector.extract_strided_slice %128 {offsets = [0, 1152], sizes = [32, 128], strides = [1, 1]} : vector<32x2048xf32> to vector<32x128xf32>
    %139 = vector.extract_strided_slice %128 {offsets = [0, 1280], sizes = [32, 128], strides = [1, 1]} : vector<32x2048xf32> to vector<32x128xf32>
    %140 = vector.extract_strided_slice %128 {offsets = [0, 1408], sizes = [32, 128], strides = [1, 1]} : vector<32x2048xf32> to vector<32x128xf32>
    %141 = vector.extract_strided_slice %128 {offsets = [0, 1536], sizes = [32, 128], strides = [1, 1]} : vector<32x2048xf32> to vector<32x128xf32>
    %142 = vector.extract_strided_slice %128 {offsets = [0, 1664], sizes = [32, 128], strides = [1, 1]} : vector<32x2048xf32> to vector<32x128xf32>
    %143 = vector.extract_strided_slice %128 {offsets = [0, 1792], sizes = [32, 128], strides = [1, 1]} : vector<32x2048xf32> to vector<32x128xf32>
    %144 = vector.extract_strided_slice %128 {offsets = [0, 1920], sizes = [32, 128], strides = [1, 1]} : vector<32x2048xf32> to vector<32x128xf32>
    %145 = arith.addf %129, %130 : vector<32x128xf32>
    %146 = arith.addf %131, %132 : vector<32x128xf32>
    %147 = arith.addf %133, %134 : vector<32x128xf32>
    %148 = arith.addf %135, %136 : vector<32x128xf32>
    %149 = arith.addf %137, %138 : vector<32x128xf32>
    %150 = arith.addf %139, %140 : vector<32x128xf32>
    %151 = arith.addf %141, %142 : vector<32x128xf32>
    %152 = arith.addf %143, %144 : vector<32x128xf32>
    %153 = arith.addf %145, %146 : vector<32x128xf32>
    %154 = arith.addf %147, %148 : vector<32x128xf32>
    %155 = arith.addf %149, %150 : vector<32x128xf32>
    %156 = arith.addf %151, %152 : vector<32x128xf32>
    %157 = arith.addf %153, %154 : vector<32x128xf32>
    %158 = arith.addf %155, %156 : vector<32x128xf32>
    %159 = arith.addf %157, %158 : vector<32x128xf32>
    %cst_42 = arith.constant 6.250000e-02 : f32
    %160 = vector.broadcast %cst_42 : f32 to vector<32x128xf32>
    %161 = arith.mulf %159, %160 : vector<32x128xf32>
    %c0_43 = arith.constant 0 : index
    %c0_44 = arith.constant 0 : index
    %162 = vector.load %arg6[%c0_43, %c0_44] : memref<32x128xf32, #tpu.memory_space<vmem>>, vector<32x128xf32>
    tpu.vector_store %arg6[%c0_43, %c0_44], %161 {strides = array<i32>} : memref<32x128xf32, #tpu.memory_space<vmem>>, vector<32x128xf32>,
    return
  }
}

</mosaic_0001>

<llo_original>
// kernel: edgeconv1_forward.1
$region0: #{edgeconv1_forward.1}
  #allocation0 [shape = 'u32[]', space=smem, size = 0x4, offset = 0x4, fixed_abs, tag = 'smem constant byte address 0x4 - core index']
  #allocation1 [shape = 'u32[144,128]{1,0:T(1,128)}', space=vmem, size = 0x12000, scoped, tag = 'internal scratch']
  %s0 = inlined_call_operand.vmem [shape: bf16[16,2048], index: 0, kind: input, shape index: {}]
  %s1 = inlined_call_operand.vmem [shape: bf16[32,16], index: 1, kind: input, shape index: {}]
  %s2 = inlined_call_operand.vmem [shape: bf16[32,32], index: 2, kind: input, shape index: {}]
  %s3 = inlined_call_operand.vmem [shape: bf16[32,32], index: 3, kind: input, shape index: {}]
  %s4 = inlined_call_operand.vmem [shape: f32[32,8], index: 4, kind: input, shape index: {}]
  %s5 = inlined_call_operand.vmem [shape: bf16[1,2048], index: 5, kind: input, shape index: {}]
  %s6 = inlined_call_operand.vmem [shape: f32[32,128], index: 6, kind: output, shape index: {}]
  %s7 = sld [smem:[#allocation0]]
  $region34: #{edgeconv1_forward.1} parent=0
    _
  %s9 = ssub.s32 1, %s7
  %s10 = scalar_select 0, %s9, %s7
  // Predicated region
  $region2: #{edgeconv1_forward.1} parent=0 // pred_check
    _
  $region3: #{edgeconv1_forward.1} parent=0 // pred_check_branch
    %12 = sbr.rel (0) target = $region5
  $region4: #{edgeconv1_forward.1} parent=0 // pred_region
    _
  $region5: #{edgeconv1_forward.1} parent=0 // pred_fallthru
    _
  // Predicated region
  $region6: #{edgeconv1_forward.1} parent=0 // pred_check
    _
  $region7: #{edgeconv1_forward.1} parent=0 // pred_check_branch
    %14 = sbr.rel (0) target = $region9
  $region8: #{edgeconv1_forward.1} parent=0 // pred_region
    _
  $region9: #{edgeconv1_forward.1} parent=0 // pred_fallthru
    _
  // Predicated region
  $region10: #{edgeconv1_forward.1} parent=0 // pred_check
    _
  $region11: #{edgeconv1_forward.1} parent=0 // pred_check_branch
    %16 = sbr.rel (0) target = $region13
  $region12: #{edgeconv1_forward.1} parent=0 // pred_region
    _
  $region13: #{edgeconv1_forward.1} parent=0 // pred_fallthru
    _
  // Predicated region
  $region14: #{edgeconv1_forward.1} parent=0 // pred_check
    _
  $region15: #{edgeconv1_forward.1} parent=0 // pred_check_branch
    %18 = sbr.rel (0) target = $region17
  $region16: #{edgeconv1_forward.1} parent=0 // pred_region
    _
  $region17: #{edgeconv1_forward.1} parent=0 // pred_fallthru
    _
  // Predicated region
  $region18: #{edgeconv1_forward.1} parent=0 // pred_check
    _
  $region19: #{edgeconv1_forward.1} parent=0 // pred_check_branch
    %20 = sbr.rel (0) target = $region21
  $region20: #{edgeconv1_forward.1} parent=0 // pred_region
    _
  $region21: #{edgeconv1_forward.1} parent=0 // pred_fallthru
    _
  // Predicated region
  $region22: #{edgeconv1_forward.1} parent=0 // pred_check
    _
  $region23: #{edgeconv1_forward.1} parent=0 // pred_check_branch
    %22 = sbr.rel (0) target = $region25
  $region24: #{edgeconv1_forward.1} parent=0 // pred_region
    _
  $region25: #{edgeconv1_forward.1} parent=0 // pred_fallthru
    _
  %v28 = vld [vmem:[%s5] sm:$0xff]
  %v29 = vld [vmem:[%s5 + $0x8] sm:$0xff]
  %v30 = vld [vmem:[%s1] sm:$0xf]
  %v31 = vld [vmem:[%s1 + $0x4] sm:$0xf]
  %v32 = vld [vmem:[%s1 + $0x8] sm:$0xf]
  %v33 = vld [vmem:[%s1 + $0xc] sm:$0xf]
  %v34 = vld [vmem:[%s0] sm:$0xff]
  %v35 = vld [vmem:[%s0 + $0x8] sm:$0xff]
  %v36 = vld [vmem:[%s0 + $0x10] sm:$0xff]
  %v37 = vld [vmem:[%s0 + $0x18] sm:$0xff]
  %v38 = vld [vmem:[%s0 + $0x20] sm:$0xff]
  %v39 = vld [vmem:[%s0 + $0x28] sm:$0xff]
  %v40 = vld [vmem:[%s0 + $0x30] sm:$0xff]
  %v41 = vld [vmem:[%s0 + $0x38] sm:$0xff]
  %v42 = vld [vmem:[%s0 + $0x40] sm:$0xff]
  %v43 = vld [vmem:[%s0 + $0x48] sm:$0xff]
  %v44 = vld [vmem:[%s0 + $0x50] sm:$0xff]
  %v45 = vld [vmem:[%s0 + $0x58] sm:$0xff]
  %v46 = vld [vmem:[%s0 + $0x60] sm:$0xff]
  %v47 = vld [vmem:[%s0 + $0x68] sm:$0xff]
  %v48 = vld [vmem:[%s0 + $0x70] sm:$0xff]
  %v49 = vld [vmem:[%s0 + $0x78] sm:$0xff]
  %v54 = vunpack.c.l.b16 %v30
  %v55 = vunpack.c.l.b16 %v31
  %v56 = vunpack.c.l.b16 %v32
  %v57 = vunpack.c.l.b16 %v33
  %v58 = vpack.c.b16 %v55, %v54
  %v59 = vpack.c.b16 %v57, %v56
  %v76 = vunpack.c.l.b16 %v34
  %v77 = vunpack.c.h.b16 %v34
  %v78 = vunpack.c.l.b16 %v35
  %v79 = vunpack.c.h.b16 %v35
  %v80 = vunpack.c.l.b16 %v36
  %v81 = vunpack.c.h.b16 %v36
  %v82 = vunpack.c.l.b16 %v37
  %v83 = vunpack.c.h.b16 %v37
  %v84 = vunpack.c.l.b16 %v38
  %v85 = vunpack.c.h.b16 %v38
  %v86 = vunpack.c.l.b16 %v39
  %v87 = vunpack.c.h.b16 %v39
  %v88 = vunpack.c.l.b16 %v40
  %v89 = vunpack.c.h.b16 %v40
  %v90 = vunpack.c.l.b16 %v41
  %v91 = vunpack.c.h.b16 %v41
  %v92 = vunpack.c.l.b16 %v42
  %v93 = vunpack.c.h.b16 %v42
  %v94 = vunpack.c.l.b16 %v43
  %v95 = vunpack.c.h.b16 %v43
  %v96 = vunpack.c.l.b16 %v44
  %v97 = vunpack.c.h.b16 %v44
  %v98 = vunpack.c.l.b16 %v45
  %v99 = vunpack.c.h.b16 %v45
  %v100 = vunpack.c.l.b16 %v46
  %v101 = vunpack.c.h.b16 %v46
  %v102 = vunpack.c.l.b16 %v47
  %v103 = vunpack.c.h.b16 %v47
  %v104 = vunpack.c.l.b16 %v48
  %v105 = vunpack.c.h.b16 %v48
  %v106 = vunpack.c.l.b16 %v49
  %v107 = vunpack.c.h.b16 %v49
  %v108 = vpack.c.b16 %v92, %v76
  %v109 = vpack.c.b16 %v93, %v77
  %v110 = vpack.c.b16 %v94, %v78
  %v111 = vpack.c.b16 %v95, %v79
  %v112 = vpack.c.b16 %v96, %v80
  %v113 = vpack.c.b16 %v97, %v81
  %v114 = vpack.c.b16 %v98, %v82
  %v115 = vpack.c.b16 %v99, %v83
  %v116 = vpack.c.b16 %v100, %v84
  %v117 = vpack.c.b16 %v101, %v85
  %v118 = vpack.c.b16 %v102, %v86
  %v119 = vpack.c.b16 %v103, %v87
  %v120 = vpack.c.b16 %v104, %v88
  %v121 = vpack.c.b16 %v105, %v89
  %v122 = vpack.c.b16 %v106, %v90
  %v123 = vpack.c.b16 %v107, %v91
  %vm140 = vcmask 130048
  %v142 = vsel %vm140, %v58, 0
  %v145 = vsel %vm140, %v59, 0
  %147 = vmatprep.subr.bf16.mxu0 0
  %148 = vmatpush1.bf16.msra.mxu0 0
  %149 = vmatprep.subr.bf16.mxu0 0
  %150 = vmatpush1.bf16.msra.mxu0 0
  %151 = vmatprep.subr.bf16.mxu0 0
  %152 = vmatpush1.bf16.msra.mxu0 0
  %153 = vmatprep.subr.bf16.mxu0 0
  %154 = vmatpush1.bf16.msra.mxu0 0
  %155 = vmatprep.subr.bf16.mxu0 0
  %156 = vmatpush1.bf16.msra.mxu0 0
  %157 = vmatprep.subr.bf16.mxu0 0
  %158 = vmatpush1.bf16.msra.mxu0 0
  %159 = vmatprep.subr.bf16.mxu0 0
  %160 = vmatpush1.bf16.msra.mxu0 0
  %161 = vmatprep.subr.bf16.mxu0 %v109
  %162 = vmatpush1.bf16.msra.mxu0 %v108
  %163 = vmatprep.subr.bf16.mxu0 0
  %164 = vmatpush2.bf16.msra.mxu0 0
  %165 = vmatprep.subr.bf16.mxu0 0
  %166 = vmatpush2.bf16.msra.mxu0 0
  %167 = vmatprep.subr.bf16.mxu0 0
  %168 = vmatpush2.bf16.msra.mxu0 0
  %169 = vmatprep.subr.bf16.mxu0 0
  %170 = vmatpush2.bf16.msra.mxu0 0
  %171 = vmatprep.subr.bf16.mxu0 0
  %172 = vmatpush2.bf16.msra.mxu0 0
  %173 = vmatprep.subr.bf16.mxu0 0
  %174 = vmatpush2.bf16.msra.mxu0 0
  %175 = vmatprep.subr.bf16.mxu0 0
  %176 = vmatpush2.bf16.msra.mxu0 0
  %177 = vmatprep.subr.bf16.mxu0 0
  %178 = vmatpush2.bf16.msra.mxu0 0
  %179 = vmatprep.mubr.bf16.mxu0 0
  %180 = vmatmul.mubr.bf16.gmra.mxu0 %v142
  %v181 = vpop.f32.mrf.mxu0
  %v182 = vadd.f32 0.0, %v181
  %v183 = vpop.f32.mrf.mxu0
  %v184 = vadd.f32 0.0, %v183
  %v185 = vpop.f32.mrf.mxu0
  %v186 = vadd.f32 0.0, %v185
  %v187 = vpop.f32.mrf.mxu0
  %v188 = vadd.f32 0.0, %v187
  %189 = vmatprep.mubr.bf16.mxu0 0
  %190 = vmatmul.mubr.bf16.gmra.mxu0 %v145
  %v191 = vpop.f32.mrf.mxu0
  %v192 = vadd.f32 0.0, %v191
  %v193 = vpop.f32.mrf.mxu0
  %v194 = vadd.f32 0.0, %v193
  %v195 = vpop.f32.mrf.mxu0
  %v196 = vadd.f32 0.0, %v195
  %v197 = vpop.f32.mrf.mxu0
  %v198 = vadd.f32 0.0, %v197
  %199 = vdwg.mxu0
  %200 = vmatprep.subr.bf16.mxu0 0
  %201 = vmatpush1.bf16.msra.mxu0 0
  %202 = vmatprep.subr.bf16.mxu0 0
  %203 = vmatpush1.bf16.msra.mxu0 0
  %204 = vmatprep.subr.bf16.mxu0 0
  %205 = vmatpush1.bf16.msra.mxu0 0
  %206 = vmatprep.subr.bf16.mxu0 0
  %207 = vmatpush1.bf16.msra.mxu0 0
  %208 = vmatprep.subr.bf16.mxu0 0
  %209 = vmatpush1.bf16.msra.mxu0 0
  %210 = vmatprep.subr.bf16.mxu0 0
  %211 = vmatpush1.bf16.msra.mxu0 0
  %212 = vmatprep.subr.bf16.mxu0 0
  %213 = vmatpush1.bf16.msra.mxu0 0
  %214 = vmatprep.subr.bf16.mxu0 %v111
  %215 = vmatpush1.bf16.msra.mxu0 %v110
  %216 = vmatprep.subr.bf16.mxu0 0
  %217 = vmatpush2.bf16.msra.mxu0 0
  %218 = vmatprep.subr.bf16.mxu0 0
  %219 = vmatpush2.bf16.msra.mxu0 0
  %220 = vmatprep.subr.bf16.mxu0 0
  %221 = vmatpush2.bf16.msra.mxu0 0
  %222 = vmatprep.subr.bf16.mxu0 0
  %223 = vmatpush2.bf16.msra.mxu0 0
  %224 = vmatprep.subr.bf16.mxu0 0
  %225 = vmatpush2.bf16.msra.mxu0 0
  %226 = vmatprep.subr.bf16.mxu0 0
  %227 = vmatpush2.bf16.msra.mxu0 0
  %228 = vmatprep.subr.bf16.mxu0 0
  %229 = vmatpush2.bf16.msra.mxu0 0
  %230 = vmatprep.subr.bf16.mxu0 0
  %231 = vmatpush2.bf16.msra.mxu0 0
  %232 = vmatprep.mubr.bf16.mxu0 0
  %233 = vmatmul.mubr.bf16.gmra.mxu0 %v142
  %v234 = vpop.f32.mrf.mxu0
  %v235 = vadd.f32 0.0, %v234
  %v236 = vpop.f32.mrf.mxu0
  %v237 = vadd.f32 0.0, %v236
  %v238 = vpop.f32.mrf.mxu0
  %v239 = vadd.f32 0.0, %v238
  %v240 = vpop.f32.mrf.mxu0
  %v241 = vadd.f32 0.0, %v240
  %242 = vmatprep.mubr.bf16.mxu0 0
  %243 = vmatmul.mubr.bf16.gmra.mxu0 %v145
  %v244 = vpop.f32.mrf.mxu0
  %v245 = vadd.f32 0.0, %v244
  %v246 = vpop.f32.mrf.mxu0
  %v247 = vadd.f32 0.0, %v246
  %v248 = vpop.f32.mrf.mxu0
  %v249 = vadd.f32 0.0, %v248
  %v250 = vpop.f32.mrf.mxu0
  %v251 = vadd.f32 0.0, %v250
  %252 = vdwg.mxu0
  %253 = vmatprep.subr.bf16.mxu0 0
  %254 = vmatpush1.bf16.msra.mxu0 0
  %255 = vmatprep.subr.bf16.mxu0 0
  %256 = vmatpush1.bf16.msra.mxu0 0
  %257 = vmatprep.subr.bf16.mxu0 0
  %258 = vmatpush1.bf16.msra.mxu0 0
  %259 = vmatprep.subr.bf16.mxu0 0
  %260 = vmatpush1.bf16.msra.mxu0 0
  %261 = vmatprep.subr.bf16.mxu0 0
  %262 = vmatpush1.bf16.msra.mxu0 0
  %263 = vmatprep.subr.bf16.mxu0 0
  %264 = vmatpush1.bf16.msra.mxu0 0
  %265 = vmatprep.subr.bf16.mxu0 0
  %266 = vmatpush1.bf16.msra.mxu0 0
  %267 = vmatprep.subr.bf16.mxu0 %v113
  %268 = vmatpush1.bf16.msra.mxu0 %v112
  %269 = vmatprep.subr.bf16.mxu0 0
  %270 = vmatpush2.bf16.msra.mxu0 0
  %271 = vmatprep.subr.bf16.mxu0 0
  %272 = vmatpush2.bf16.msra.mxu0 0
  %273 = vmatprep.subr.bf16.mxu0 0
  %274 = vmatpush2.bf16.msra.mxu0 0
  %275 = vmatprep.subr.bf16.mxu0 0
  %276 = vmatpush2.bf16.msra.mxu0 0
  %277 = vmatprep.subr.bf16.mxu0 0
  %278 = vmatpush2.bf16.msra.mxu0 0
  %279 = vmatprep.subr.bf16.mxu0 0
  %280 = vmatpush2.bf16.msra.mxu0 0
  %281 = vmatprep.subr.bf16.mxu0 0
  %282 = vmatpush2.bf16.msra.mxu0 0
  %283 = vmatprep.subr.bf16.mxu0 0
  %284 = vmatpush2.bf16.msra.mxu0 0
  %285 = vmatprep.mubr.bf16.mxu0 0
  %286 = vmatmul.mubr.bf16.gmra.mxu0 %v142
  %v287 = vpop.f32.mrf.mxu0
  %v288 = vadd.f32 0.0, %v287
  %v289 = vpop.f32.mrf.mxu0
  %v290 = vadd.f32 0.0, %v289
  %v291 = vpop.f32.mrf.mxu0
  %v292 = vadd.f32 0.0, %v291
  %v293 = vpop.f32.mrf.mxu0
  %v294 = vadd.f32 0.0, %v293
  %295 = vmatprep.mubr.bf16.mxu0 0
  %296 = vmatmul.mubr.bf16.gmra.mxu0 %v145
  %v297 = vpop.f32.mrf.mxu0
  %v298 = vadd.f32 0.0, %v297
  %v299 = vpop.f32.mrf.mxu0
  %v300 = vadd.f32 0.0, %v299
  %v301 = vpop.f32.mrf.mxu0
  %v302 = vadd.f32 0.0, %v301
  %v303 = vpop.f32.mrf.mxu0
  %v304 = vadd.f32 0.0, %v303
  %305 = vdwg.mxu0
  %306 = vmatprep.subr.bf16.mxu0 0
  %307 = vmatpush1.bf16.msra.mxu0 0
  %308 = vmatprep.subr.bf16.mxu0 0
  %309 = vmatpush1.bf16.msra.mxu0 0
  %310 = vmatprep.subr.bf16.mxu0 0
  %311 = vmatpush1.bf16.msra.mxu0 0
  %312 = vmatprep.subr.bf16.mxu0 0
  %313 = vmatpush1.bf16.msra.mxu0 0
  %314 = vmatprep.subr.bf16.mxu0 0
  %315 = vmatpush1.bf16.msra.mxu0 0
  %316 = vmatprep.subr.bf16.mxu0 0
  %317 = vmatpush1.bf16.msra.mxu0 0
  %318 = vmatprep.subr.bf16.mxu0 0
  %319 = vmatpush1.bf16.msra.mxu0 0
  %320 = vmatprep.subr.bf16.mxu0 %v115
  %321 = vmatpush1.bf16.msra.mxu0 %v114
  %322 = vmatprep.subr.bf16.mxu0 0
  %323 = vmatpush2.bf16.msra.mxu0 0
  %324 = vmatprep.subr.bf16.mxu0 0
  %325 = vmatpush2.bf16.msra.mxu0 0
  %326 = vmatprep.subr.bf16.mxu0 0
  %327 = vmatpush2.bf16.msra.mxu0 0
  %328 = vmatprep.subr.bf16.mxu0 0
  %329 = vmatpush2.bf16.msra.mxu0 0
  %330 = vmatprep.subr.bf16.mxu0 0
  %331 = vmatpush2.bf16.msra.mxu0 0
  %332 = vmatprep.subr.bf16.mxu0 0
  %333 = vmatpush2.bf16.msra.mxu0 0
  %334 = vmatprep.subr.bf16.mxu0 0
  %335 = vmatpush2.bf16.msra.mxu0 0
  %336 = vmatprep.subr.bf16.mxu0 0
  %337 = vmatpush2.bf16.msra.mxu0 0
  %338 = vmatprep.mubr.bf16.mxu0 0
  %339 = vmatmul.mubr.bf16.gmra.mxu0 %v142
  %v340 = vpop.f32.mrf.mxu0
  %v341 = vadd.f32 0.0, %v340
  %v342 = vpop.f32.mrf.mxu0
  %v343 = vadd.f32 0.0, %v342
  %v344 = vpop.f32.mrf.mxu0
  %v345 = vadd.f32 0.0, %v344
  %v346 = vpop.f32.mrf.mxu0
  %v347 = vadd.f32 0.0, %v346
  %348 = vmatprep.mubr.bf16.mxu0 0
  %349 = vmatmul.mubr.bf16.gmra.mxu0 %v145
  %v350 = vpop.f32.mrf.mxu0
  %v351 = vadd.f32 0.0, %v350
  %v352 = vpop.f32.mrf.mxu0
  %v353 = vadd.f32 0.0, %v352
  %v354 = vpop.f32.mrf.mxu0
  %v355 = vadd.f32 0.0, %v354
  %v356 = vpop.f32.mrf.mxu0
  %v357 = vadd.f32 0.0, %v356
  %358 = vdwg.mxu0
  %359 = vmatprep.subr.bf16.mxu0 0
  %360 = vmatpush1.bf16.msra.mxu0 0
  %361 = vmatprep.subr.bf16.mxu0 0
  %362 = vmatpush1.bf16.msra.mxu0 0
  %363 = vmatprep.subr.bf16.mxu0 0
  %364 = vmatpush1.bf16.msra.mxu0 0
  %365 = vmatprep.subr.bf16.mxu0 0
  %366 = vmatpush1.bf16.msra.mxu0 0
  %367 = vmatprep.subr.bf16.mxu0 0
  %368 = vmatpush1.bf16.msra.mxu0 0
  %369 = vmatprep.subr.bf16.mxu0 0
  %370 = vmatpush1.bf16.msra.mxu0 0
  %371 = vmatprep.subr.bf16.mxu0 0
  %372 = vmatpush1.bf16.msra.mxu0 0
  %373 = vmatprep.subr.bf16.mxu0 %v117
  %374 = vmatpush1.bf16.msra.mxu0 %v116
  %375 = vmatprep.subr.bf16.mxu0 0
  %376 = vmatpush2.bf16.msra.mxu0 0
  %377 = vmatprep.subr.bf16.mxu0 0
  %378 = vmatpush2.bf16.msra.mxu0 0
  %379 = vmatprep.subr.bf16.mxu0 0
  %380 = vmatpush2.bf16.msra.mxu0 0
  %381 = vmatprep.subr.bf16.mxu0 0
  %382 = vmatpush2.bf16.msra.mxu0 0
  %383 = vmatprep.subr.bf16.mxu0 0
  %384 = vmatpush2.bf16.msra.mxu0 0
  %385 = vmatprep.subr.bf16.mxu0 0
  %386 = vmatpush2.bf16.msra.mxu0 0
  %387 = vmatprep.subr.bf16.mxu0 0
  %388 = vmatpush2.bf16.msra.mxu0 0
  %389 = vmatprep.subr.bf16.mxu0 0
  %390 = vmatpush2.bf16.msra.mxu0 0
  %391 = vmatprep.mubr.bf16.mxu0 0
  %392 = vmatmul.mubr.bf16.gmra.mxu0 %v142
  %v393 = vpop.f32.mrf.mxu0
  %v394 = vadd.f32 0.0, %v393
  %v395 = vpop.f32.mrf.mxu0
  %v396 = vadd.f32 0.0, %v395
  %v397 = vpop.f32.mrf.mxu0
  %v398 = vadd.f32 0.0, %v397
  %v399 = vpop.f32.mrf.mxu0
  %v400 = vadd.f32 0.0, %v399
  %401 = vmatprep.mubr.bf16.mxu0 0
  %402 = vmatmul.mubr.bf16.gmra.mxu0 %v145
  %v403 = vpop.f32.mrf.mxu0
  %v404 = vadd.f32 0.0, %v403
  %v405 = vpop.f32.mrf.mxu0
  %v406 = vadd.f32 0.0, %v405
  %v407 = vpop.f32.mrf.mxu0
  %v408 = vadd.f32 0.0, %v407
  %v409 = vpop.f32.mrf.mxu0
  %v410 = vadd.f32 0.0, %v409
  %411 = vdwg.mxu0
  %412 = vmatprep.subr.bf16.mxu0 0
  %413 = vmatpush1.bf16.msra.mxu0 0
  %414 = vmatprep.subr.bf16.mxu0 0
  %415 = vmatpush1.bf16.msra.mxu0 0
  %416 = vmatprep.subr.bf16.mxu0 0
  %417 = vmatpush1.bf16.msra.mxu0 0
  %418 = vmatprep.subr.bf16.mxu0 0
  %419 = vmatpush1.bf16.msra.mxu0 0
  %420 = vmatprep.subr.bf16.mxu0 0
  %421 = vmatpush1.bf16.msra.mxu0 0
  %422 = vmatprep.subr.bf16.mxu0 0
  %423 = vmatpush1.bf16.msra.mxu0 0
  %424 = vmatprep.subr.bf16.mxu0 0
  %425 = vmatpush1.bf16.msra.mxu0 0
  %426 = vmatprep.subr.bf16.mxu0 %v119
  %427 = vmatpush1.bf16.msra.mxu0 %v118
  %428 = vmatprep.subr.bf16.mxu0 0
  %429 = vmatpush2.bf16.msra.mxu0 0
  %430 = vmatprep.subr.bf16.mxu0 0
  %431 = vmatpush2.bf16.msra.mxu0 0
  %432 = vmatprep.subr.bf16.mxu0 0
  %433 = vmatpush2.bf16.msra.mxu0 0
  %434 = vmatprep.subr.bf16.mxu0 0
  %435 = vmatpush2.bf16.msra.mxu0 0
  %436 = vmatprep.subr.bf16.mxu0 0
  %437 = vmatpush2.bf16.msra.mxu0 0
  %438 = vmatprep.subr.bf16.mxu0 0
  %439 = vmatpush2.bf16.msra.mxu0 0
  %440 = vmatprep.subr.bf16.mxu0 0
  %441 = vmatpush2.bf16.msra.mxu0 0
  %442 = vmatprep.subr.bf16.mxu0 0
  %443 = vmatpush2.bf16.msra.mxu0 0
  %444 = vmatprep.mubr.bf16.mxu0 0
  %445 = vmatmul.mubr.bf16.gmra.mxu0 %v142
  %v446 = vpop.f32.mrf.mxu0
  %v447 = vadd.f32 0.0, %v446
  %v448 = vpop.f32.mrf.mxu0
  %v449 = vadd.f32 0.0, %v448
  %v450 = vpop.f32.mrf.mxu0
  %v451 = vadd.f32 0.0, %v450
  %v452 = vpop.f32.mrf.mxu0
  %v453 = vadd.f32 0.0, %v452
  %454 = vmatprep.mubr.bf16.mxu0 0
  %455 = vmatmul.mubr.bf16.gmra.mxu0 %v145
  %v456 = vpop.f32.mrf.mxu0
  %v457 = vadd.f32 0.0, %v456
  %v458 = vpop.f32.mrf.mxu0
  %v459 = vadd.f32 0.0, %v458
  %v460 = vpop.f32.mrf.mxu0
  %v461 = vadd.f32 0.0, %v460
  %v462 = vpop.f32.mrf.mxu0
  %v463 = vadd.f32 0.0, %v462
  %464 = vdwg.mxu0
  %465 = vmatprep.subr.bf16.mxu0 0
  %466 = vmatpush1.bf16.msra.mxu0 0
  %467 = vmatprep.subr.bf16.mxu0 0
  %468 = vmatpush1.bf16.msra.mxu0 0
  %469 = vmatprep.subr.bf16.mxu0 0
  %470 = vmatpush1.bf16.msra.mxu0 0
  %471 = vmatprep.subr.bf16.mxu0 0
  %472 = vmatpush1.bf16.msra.mxu0 0
  %473 = vmatprep.subr.bf16.mxu0 0
  %474 = vmatpush1.bf16.msra.mxu0 0
  %475 = vmatprep.subr.bf16.mxu0 0
  %476 = vmatpush1.bf16.msra.mxu0 0
  %477 = vmatprep.subr.bf16.mxu0 0
  %478 = vmatpush1.bf16.msra.mxu0 0
  %479 = vmatprep.subr.bf16.mxu0 %v121
  %480 = vmatpush1.bf16.msra.mxu0 %v120
  %481 = vmatprep.subr.bf16.mxu0 0
  %482 = vmatpush2.bf16.msra.mxu0 0
  %483 = vmatprep.subr.bf16.mxu0 0
  %484 = vmatpush2.bf16.msra.mxu0 0
  %485 = vmatprep.subr.bf16.mxu0 0
  %486 = vmatpush2.bf16.msra.mxu0 0
  %487 = vmatprep.subr.bf16.mxu0 0
  %488 = vmatpush2.bf16.msra.mxu0 0
  %489 = vmatprep.subr.bf16.mxu0 0
  %490 = vmatpush2.bf16.msra.mxu0 0
  %491 = vmatprep.subr.bf16.mxu0 0
  %492 = vmatpush2.bf16.msra.mxu0 0
  %493 = vmatprep.subr.bf16.mxu0 0
  %494 = vmatpush2.bf16.msra.mxu0 0
  %495 = vmatprep.subr.bf16.mxu0 0
  %496 = vmatpush2.bf16.msra.mxu0 0
  %497 = vmatprep.mubr.bf16.mxu0 0
  %498 = vmatmul.mubr.bf16.gmra.mxu0 %v142
  %v499 = vpop.f32.mrf.mxu0
  %v500 = vadd.f32 0.0, %v499
  %v501 = vpop.f32.mrf.mxu0
  %v502 = vadd.f32 0.0, %v501
  %v503 = vpop.f32.mrf.mxu0
  %v504 = vadd.f32 0.0, %v503
  %v505 = vpop.f32.mrf.mxu0
  %v506 = vadd.f32 0.0, %v505
  %507 = vmatprep.mubr.bf16.mxu0 0
  %508 = vmatmul.mubr.bf16.gmra.mxu0 %v145
  %v509 = vpop.f32.mrf.mxu0
  %v510 = vadd.f32 0.0, %v509
  %v511 = vpop.f32.mrf.mxu0
  %v512 = vadd.f32 0.0, %v511
  %v513 = vpop.f32.mrf.mxu0
  %v514 = vadd.f32 0.0, %v513
  %v515 = vpop.f32.mrf.mxu0
  %v516 = vadd.f32 0.0, %v515
  %517 = vdwg.mxu0
  %518 = vmatprep.subr.bf16.mxu0 0
  %519 = vmatpush1.bf16.msra.mxu0 0
  %520 = vmatprep.subr.bf16.mxu0 0
  %521 = vmatpush1.bf16.msra.mxu0 0
  %522 = vmatprep.subr.bf16.mxu0 0
  %523 = vmatpush1.bf16.msra.mxu0 0
  %524 = vmatprep.subr.bf16.mxu0 0
  %525 = vmatpush1.bf16.msra.mxu0 0
  %526 = vmatprep.subr.bf16.mxu0 0
  %527 = vmatpush1.bf16.msra.mxu0 0
  %528 = vmatprep.subr.bf16.mxu0 0
  %529 = vmatpush1.bf16.msra.mxu0 0
  %530 = vmatprep.subr.bf16.mxu0 0
  %531 = vmatpush1.bf16.msra.mxu0 0
  %532 = vmatprep.subr.bf16.mxu0 %v123
  %533 = vmatpush1.bf16.msra.mxu0 %v122
  %534 = vmatprep.subr.bf16.mxu0 0
  %535 = vmatpush2.bf16.msra.mxu0 0
  %536 = vmatprep.subr.bf16.mxu0 0
  %537 = vmatpush2.bf16.msra.mxu0 0
  %538 = vmatprep.subr.bf16.mxu0 0
  %539 = vmatpush2.bf16.msra.mxu0 0
  %540 = vmatprep.subr.bf16.mxu0 0
  %541 = vmatpush2.bf16.msra.mxu0 0
  %542 = vmatprep.subr.bf16.mxu0 0
  %543 = vmatpush2.bf16.msra.mxu0 0
  %544 = vmatprep.subr.bf16.mxu0 0
  %545 = vmatpush2.bf16.msra.mxu0 0
  %546 = vmatprep.subr.bf16.mxu0 0
  %547 = vmatpush2.bf16.msra.mxu0 0
  %548 = vmatprep.subr.bf16.mxu0 0
  %549 = vmatpush2.bf16.msra.mxu0 0
  %550 = vmatprep.mubr.bf16.mxu0 0
  %551 = vmatmul.mubr.bf16.gmra.mxu0 %v142
  %v552 = vpop.f32.mrf.mxu0
  %v553 = vadd.f32 0.0, %v552
  %v554 = vpop.f32.mrf.mxu0
  %v555 = vadd.f32 0.0, %v554
  %v556 = vpop.f32.mrf.mxu0
  %v557 = vadd.f32 0.0, %v556
  %v558 = vpop.f32.mrf.mxu0
  %v559 = vadd.f32 0.0, %v558
  %560 = vmatprep.mubr.bf16.mxu0 0
  %561 = vmatmul.mubr.bf16.gmra.mxu0 %v145
  %v562 = vpop.f32.mrf.mxu0
  %v563 = vadd.f32 0.0, %v562
  %v564 = vpop.f32.mrf.mxu0
  %v565 = vadd.f32 0.0, %v564
  %v566 = vpop.f32.mrf.mxu0
  %v567 = vadd.f32 0.0, %v566
  %v568 = vpop.f32.mrf.mxu0
  %v569 = vadd.f32 0.0, %v568
  %570 = vdwg.mxu0
  %v571 = vmul.f32 %v182, %v182
  %v572 = vmul.f32 %v184, %v184
  %v573 = vmul.f32 %v235, %v235
  %v574 = vmul.f32 %v237, %v237
  %v575 = vmul.f32 %v288, %v288
  %v576 = vmul.f32 %v290, %v290
  %v577 = vmul.f32 %v341, %v341
  %v578 = vmul.f32 %v343, %v343
  %v579 = vmul.f32 %v394, %v394
  %v580 = vmul.f32 %v396, %v396
  %v581 = vmul.f32 %v447, %v447
  %v582 = vmul.f32 %v449, %v449
  %v583 = vmul.f32 %v500, %v500
  %v584 = vmul.f32 %v502, %v502
  %v585 = vmul.f32 %v553, %v553
  %v586 = vmul.f32 %v555, %v555
  %v587 = vmul.f32 %v186, %v186
  %v588 = vmul.f32 %v188, %v188
  %v589 = vmul.f32 %v239, %v239
  %v590 = vmul.f32 %v241, %v241
  %v591 = vmul.f32 %v292, %v292
  %v592 = vmul.f32 %v294, %v294
  %v593 = vmul.f32 %v345, %v345
  %v594 = vmul.f32 %v347, %v347
  %v595 = vmul.f32 %v398, %v398
  %v596 = vmul.f32 %v400, %v400
  %v597 = vmul.f32 %v451, %v451
  %v598 = vmul.f32 %v453, %v453
  %v599 = vmul.f32 %v504, %v504
  %v600 = vmul.f32 %v506, %v506
  %v601 = vmul.f32 %v557, %v557
  %v602 = vmul.f32 %v559, %v559
  %v603 = vmul.f32 %v192, %v192
  %v604 = vmul.f32 %v194, %v194
  %v605 = vmul.f32 %v245, %v245
  %v606 = vmul.f32 %v247, %v247
  %v607 = vmul.f32 %v298, %v298
  %v608 = vmul.f32 %v300, %v300
  %v609 = vmul.f32 %v351, %v351
  %v610 = vmul.f32 %v353, %v353
  %v611 = vmul.f32 %v404, %v404
  %v612 = vmul.f32 %v406, %v406
  %v613 = vmul.f32 %v457, %v457
  %v614 = vmul.f32 %v459, %v459
  %v615 = vmul.f32 %v510, %v510
  %v616 = vmul.f32 %v512, %v512
  %v617 = vmul.f32 %v563, %v563
  %v618 = vmul.f32 %v565, %v565
  %v619 = vmul.f32 %v196, %v196
  %v620 = vmul.f32 %v198, %v198
  %v621 = vmul.f32 %v249, %v249
  %v622 = vmul.f32 %v251, %v251
  %v623 = vmul.f32 %v302, %v302
  %v624 = vmul.f32 %v304, %v304
  %v625 = vmul.f32 %v355, %v355
  %v626 = vmul.f32 %v357, %v357
  %v627 = vmul.f32 %v408, %v408
  %v628 = vmul.f32 %v410, %v410
  %v629 = vmul.f32 %v461, %v461
  %v630 = vmul.f32 %v463, %v463
  %v631 = vmul.f32 %v514, %v514
  %v632 = vmul.f32 %v516, %v516
  %v633 = vmul.f32 %v567, %v567
  %v634 = vmul.f32 %v569, %v569
  %v635 = vadd.f32 %v182, %v184
  %v636 = vadd.f32 %v635, %v235
  %v637 = vadd.f32 %v636, %v237
  %v638 = vadd.f32 %v637, %v288
  %v639 = vadd.f32 %v638, %v290
  %v640 = vadd.f32 %v639, %v341
  %v641 = vadd.f32 %v640, %v343
  %v642 = vadd.f32 %v641, %v394
  %v643 = vadd.f32 %v642, %v396
  %v644 = vadd.f32 %v643, %v447
  %v645 = vadd.f32 %v644, %v449
  %v646 = vadd.f32 %v645, %v500
  %v647 = vadd.f32 %v646, %v502
  %v648 = vadd.f32 %v647, %v553
  %v649 = vadd.f32 %v648, %v555
  %650 = vadd.xlane.f32.xlu0 %v649
  %v651 = vpop.xlane.xlu0 %650
  %v652 = vadd.f32 %v186, %v188
  %v653 = vadd.f32 %v652, %v239
  %v654 = vadd.f32 %v653, %v241
  %v655 = vadd.f32 %v654, %v292
  %v656 = vadd.f32 %v655, %v294
  %v657 = vadd.f32 %v656, %v345
  %v658 = vadd.f32 %v657, %v347
  %v659 = vadd.f32 %v658, %v398
  %v660 = vadd.f32 %v659, %v400
  %v661 = vadd.f32 %v660, %v451
  %v662 = vadd.f32 %v661, %v453
  %v663 = vadd.f32 %v662, %v504
  %v664 = vadd.f32 %v663, %v506
  %v665 = vadd.f32 %v664, %v557
  %v666 = vadd.f32 %v665, %v559
  %667 = vadd.xlane.f32.xlu0 %v666
  %v668 = vpop.xlane.xlu0 %667
  %v669 = vadd.f32 %v192, %v194
  %v670 = vadd.f32 %v669, %v245
  %v671 = vadd.f32 %v670, %v247
  %v672 = vadd.f32 %v671, %v298
  %v673 = vadd.f32 %v672, %v300
  %v674 = vadd.f32 %v673, %v351
  %v675 = vadd.f32 %v674, %v353
  %v676 = vadd.f32 %v675, %v404
  %v677 = vadd.f32 %v676, %v406
  %v678 = vadd.f32 %v677, %v457
  %v679 = vadd.f32 %v678, %v459
  %v680 = vadd.f32 %v679, %v510
  %v681 = vadd.f32 %v680, %v512
  %v682 = vadd.f32 %v681, %v563
  %v683 = vadd.f32 %v682, %v565
  %684 = vadd.xlane.f32.xlu0 %v683
  %v685 = vpop.xlane.xlu0 %684
  %v686 = vadd.f32 %v196, %v198
  %v687 = vadd.f32 %v686, %v249
  %v688 = vadd.f32 %v687, %v251
  %v689 = vadd.f32 %v688, %v302
  %v690 = vadd.f32 %v689, %v304
  %v691 = vadd.f32 %v690, %v355
  %v692 = vadd.f32 %v691, %v357
  %v693 = vadd.f32 %v692, %v408
  %v694 = vadd.f32 %v693, %v410
  %v695 = vadd.f32 %v694, %v461
  %v696 = vadd.f32 %v695, %v463
  %v697 = vadd.f32 %v696, %v514
  %v698 = vadd.f32 %v697, %v516
  %v699 = vadd.f32 %v698, %v567
  %v700 = vadd.f32 %v699, %v569
  %701 = vadd.xlane.f32.xlu0 %v700
  %v702 = vpop.xlane.xlu0 %701
  %v703 = vadd.f32 %v571, %v572
  %v704 = vadd.f32 %v703, %v573
  %v705 = vadd.f32 %v704, %v574
  %v706 = vadd.f32 %v705, %v575
  %v707 = vadd.f32 %v706, %v576
  %v708 = vadd.f32 %v707, %v577
  %v709 = vadd.f32 %v708, %v578
  %v710 = vadd.f32 %v709, %v579
  %v711 = vadd.f32 %v710, %v580
  %v712 = vadd.f32 %v711, %v581
  %v713 = vadd.f32 %v712, %v582
  %v714 = vadd.f32 %v713, %v583
  %v715 = vadd.f32 %v714, %v584
  %v716 = vadd.f32 %v715, %v585
  %v717 = vadd.f32 %v716, %v586
  %718 = vadd.xlane.f32.xlu0 %v717
  %v719 = vpop.xlane.xlu0 %718
  %v720 = vadd.f32 %v587, %v588
  %v721 = vadd.f32 %v720, %v589
  %v722 = vadd.f32 %v721, %v590
  %v723 = vadd.f32 %v722, %v591
  %v724 = vadd.f32 %v723, %v592
  %v725 = vadd.f32 %v724, %v593
  %v726 = vadd.f32 %v725, %v594
  %v727 = vadd.f32 %v726, %v595
  %v728 = vadd.f32 %v727, %v596
  %v729 = vadd.f32 %v728, %v597
  %v730 = vadd.f32 %v729, %v598
  %v731 = vadd.f32 %v730, %v599
  %v732 = vadd.f32 %v731, %v600
  %v733 = vadd.f32 %v732, %v601
  %v734 = vadd.f32 %v733, %v602
  %735 = vadd.xlane.f32.xlu0 %v734
  %v736 = vpop.xlane.xlu0 %735
  %v737 = vadd.f32 %v603, %v604
  %v738 = vadd.f32 %v737, %v605
  %v739 = vadd.f32 %v738, %v606
  %v740 = vadd.f32 %v739, %v607
  %v741 = vadd.f32 %v740, %v608
  %v742 = vadd.f32 %v741, %v609
  %v743 = vadd.f32 %v742, %v610
  %v744 = vadd.f32 %v743, %v611
  %v745 = vadd.f32 %v744, %v612
  %v746 = vadd.f32 %v745, %v613
  %v747 = vadd.f32 %v746, %v614
  %v748 = vadd.f32 %v747, %v615
  %v749 = vadd.f32 %v748, %v616
  %v750 = vadd.f32 %v749, %v617
  %v751 = vadd.f32 %v750, %v618
  %752 = vadd.xlane.f32.xlu0 %v751
  %v753 = vpop.xlane.xlu0 %752
  %v754 = vadd.f32 %v619, %v620
  %v755 = vadd.f32 %v754, %v621
  %v756 = vadd.f32 %v755, %v622
  %v757 = vadd.f32 %v756, %v623
  %v758 = vadd.f32 %v757, %v624
  %v759 = vadd.f32 %v758, %v625
  %v760 = vadd.f32 %v759, %v626
  %v761 = vadd.f32 %v760, %v627
  %v762 = vadd.f32 %v761, %v628
  %v763 = vadd.f32 %v762, %v629
  %v764 = vadd.f32 %v763, %v630
  %v765 = vadd.f32 %v764, %v631
  %v766 = vadd.f32 %v765, %v632
  %v767 = vadd.f32 %v766, %v633
  %v768 = vadd.f32 %v767, %v634
  %769 = vadd.xlane.f32.xlu0 %v768
  %v770 = vpop.xlane.xlu0 %769
  %v771 = vmul.f32 %v651, 0.001953125
  %v772 = vmul.f32 %v668, 0.001953125
  %v773 = vmul.f32 %v685, 0.001953125
  %v774 = vmul.f32 %v702, 0.001953125
  %v775 = vmul.f32 %v719, 0.001953125
  %v776 = vmul.f32 %v736, 0.001953125
  %v777 = vmul.f32 %v753, 0.001953125
  %v778 = vmul.f32 %v770, 0.001953125
  %v779 = vmul.f32 %v771, %v771
  %v780 = vmul.f32 %v772, %v772
  %v781 = vmul.f32 %v773, %v773
  %v782 = vmul.f32 %v774, %v774
  %v783 = vsub.f32 %v775, %v779
  %v784 = vsub.f32 %v776, %v780
  %v785 = vsub.f32 %v777, %v781
  %v786 = vsub.f32 %v778, %v782
  %v787 = vmax.f32 %v783, 0.0
  %v788 = vmax.f32 %v784, 0.0
  %v789 = vmax.f32 %v785, 0.0
  %v790 = vmax.f32 %v786, 0.0
  %v791 = vld [vmem:[%s4] sm:$0xff]
  %v792 = vld [vmem:[%s4 + $0x8] sm:$0xff]
  %v793 = vld [vmem:[%s4 + $0x10] sm:$0xff]
  %v794 = vld [vmem:[%s4 + $0x18] sm:$0xff]
  %v795 = vadd.f32 %v787, 1e-05
  %v796 = vadd.f32 %v788, 1e-05
  %v797 = vadd.f32 %v789, 1e-05
  %v798 = vadd.f32 %v790, 1e-05
  %v799 = vrsqrt.pop %v795
  %v800 = vrsqrt.pop %v796
  %v801 = vrsqrt.pop %v797
  %v802 = vrsqrt.pop %v798
  %v803 = vmul.f32 %v791, %v799
  %v804 = vmul.f32 %v792, %v800
  %v805 = vmul.f32 %v793, %v801
  %v806 = vmul.f32 %v794, %v802
  %v807 = vmul.f32 %v771, %v803
  %v808 = vmul.f32 %v772, %v804
  %v809 = vmul.f32 %v773, %v805
  %v810 = vmul.f32 %v774, %v806
  %815 = vrot.lane.b32.xlu0 %v807, 1
  %v816 = vpop.permute.xlu0 %815
  %817 = vrot.lane.b32.xlu0 %v808, 1
  %v818 = vpop.permute.xlu0 %817
  %819 = vrot.lane.b32.xlu0 %v809, 1
  %v820 = vpop.permute.xlu0 %819
  %821 = vrot.lane.b32.xlu0 %v810, 1
  %v822 = vpop.permute.xlu0 %821
  %v827 = vsub.f32 %v791, %v816
  %v828 = vsub.f32 %v792, %v818
  %v829 = vsub.f32 %v793, %v820
  %v830 = vsub.f32 %v794, %v822
  %v831 = vpack.c.bf16 %v186, %v182
  %v832 = vpack.c.bf16 %v188, %v184
  %v833 = vpack.c.bf16 %v239, %v235
  %v834 = vpack.c.bf16 %v241, %v237
  %v835 = vpack.c.bf16 %v292, %v288
  %v836 = vpack.c.bf16 %v294, %v290
  %v837 = vpack.c.bf16 %v345, %v341
  %v838 = vpack.c.bf16 %v347, %v343
  %v839 = vpack.c.bf16 %v398, %v394
  %v840 = vpack.c.bf16 %v400, %v396
  %v841 = vpack.c.bf16 %v451, %v447
  %v842 = vpack.c.bf16 %v453, %v449
  %v843 = vpack.c.bf16 %v504, %v500
  %v844 = vpack.c.bf16 %v506, %v502
  %v845 = vpack.c.bf16 %v557, %v553
  %v846 = vpack.c.bf16 %v559, %v555
  %v847 = vpack.c.bf16 %v196, %v192
  %v848 = vpack.c.bf16 %v198, %v194
  %v849 = vpack.c.bf16 %v249, %v245
  %v850 = vpack.c.bf16 %v251, %v247
  %v851 = vpack.c.bf16 %v302, %v298
  %v852 = vpack.c.bf16 %v304, %v300
  %v853 = vpack.c.bf16 %v355, %v351
  %v854 = vpack.c.bf16 %v357, %v353
  %v855 = vpack.c.bf16 %v408, %v404
  %v856 = vpack.c.bf16 %v410, %v406
  %v857 = vpack.c.bf16 %v461, %v457
  %v858 = vpack.c.bf16 %v463, %v459
  %v859 = vpack.c.bf16 %v514, %v510
  %v860 = vpack.c.bf16 %v516, %v512
  %v861 = vpack.c.bf16 %v567, %v563
  %v862 = vpack.c.bf16 %v569, %v565
  %v863 = vpack.c.bf16 %v804, %v803
  %v864 = vpack.c.bf16 %v806, %v805
  %866 = vset.pattern.permute.xlu0 0
  %867 = vperm.xlu0 %866, %v863
  %v868 = vpop.permute.xlu0 %867
  %871 = vset.pattern.permute.xlu0 0
  %872 = vperm.xlu0 %871, %v864
  %v873 = vpop.permute.xlu0 %872
  %v875 = vmul.bf16 %v831, %v868
  %v876 = vmul.bf16 %v832, %v868
  %v877 = vmul.bf16 %v833, %v868
  %v878 = vmul.bf16 %v834, %v868
  %v879 = vmul.bf16 %v835, %v868
  %v880 = vmul.bf16 %v836, %v868
  %v881 = vmul.bf16 %v837, %v868
  %v882 = vmul.bf16 %v838, %v868
  %v883 = vmul.bf16 %v839, %v868
  %v884 = vmul.bf16 %v840, %v868
  %v885 = vmul.bf16 %v841, %v868
  %v886 = vmul.bf16 %v842, %v868
  %v887 = vmul.bf16 %v843, %v868
  %v888 = vmul.bf16 %v844, %v868
  %v889 = vmul.bf16 %v845, %v868
  %v890 = vmul.bf16 %v846, %v868
  %v891 = vmul.bf16 %v847, %v873
  %v892 = vmul.bf16 %v848, %v873
  %v893 = vmul.bf16 %v849, %v873
  %v894 = vmul.bf16 %v850, %v873
  %v895 = vmul.bf16 %v851, %v873
  %v896 = vmul.bf16 %v852, %v873
  %v897 = vmul.bf16 %v853, %v873
  %v898 = vmul.bf16 %v854, %v873
  %v899 = vmul.bf16 %v855, %v873
  %v900 = vmul.bf16 %v856, %v873
  %v901 = vmul.bf16 %v857, %v873
  %v902 = vmul.bf16 %v858, %v873
  %v903 = vmul.bf16 %v859, %v873
  %v904 = vmul.bf16 %v860, %v873
  %v905 = vmul.bf16 %v861, %v873
  %v906 = vmul.bf16 %v862, %v873
  %v907 = vpack.c.bf16 %v828, %v827
  %v908 = vpack.c.bf16 %v830, %v829
  %910 = vset.pattern.permute.xlu0 1
  %911 = vperm.xlu0 %910, %v907
  %v912 = vpop.permute.xlu0 %911
  %915 = vset.pattern.permute.xlu0 1
  %916 = vperm.xlu0 %915, %v908
  %v917 = vpop.permute.xlu0 %916
  %v919 = vadd.bf16 %v875, %v912
  %v920 = vadd.bf16 %v876, %v912
  %v921 = vadd.bf16 %v877, %v912
  %v922 = vadd.bf16 %v878, %v912
  %v923 = vadd.bf16 %v879, %v912
  %v924 = vadd.bf16 %v880, %v912
  %v925 = vadd.bf16 %v881, %v912
  %v926 = vadd.bf16 %v882, %v912
  %v927 = vadd.bf16 %v883, %v912
  %v928 = vadd.bf16 %v884, %v912
  %v929 = vadd.bf16 %v885, %v912
  %v930 = vadd.bf16 %v886, %v912
  %v931 = vadd.bf16 %v887, %v912
  %v932 = vadd.bf16 %v888, %v912
  %v933 = vadd.bf16 %v889, %v912
  %v934 = vadd.bf16 %v890, %v912
  %v935 = vadd.bf16 %v891, %v917
  %v936 = vadd.bf16 %v892, %v917
  %v937 = vadd.bf16 %v893, %v917
  %v938 = vadd.bf16 %v894, %v917
  %v939 = vadd.bf16 %v895, %v917
  %v940 = vadd.bf16 %v896, %v917
  %v941 = vadd.bf16 %v897, %v917
  %v942 = vadd.bf16 %v898, %v917
  %v943 = vadd.bf16 %v899, %v917
  %v944 = vadd.bf16 %v900, %v917
  %v945 = vadd.bf16 %v901, %v917
  %v946 = vadd.bf16 %v902, %v917
  %v947 = vadd.bf16 %v903, %v917
  %v948 = vadd.bf16 %v904, %v917
  %v949 = vadd.bf16 %v905, %v917
  %v950 = vadd.bf16 %v906, %v917
  %v951 = vmul.bf16 %v919, 1056980736
  %v952 = vmul.bf16 %v920, 1056980736
  %v953 = vmul.bf16 %v921, 1056980736
  %v954 = vmul.bf16 %v922, 1056980736
  %v955 = vmul.bf16 %v923, 1056980736
  %v956 = vmul.bf16 %v924, 1056980736
  %v957 = vmul.bf16 %v925, 1056980736
  %v958 = vmul.bf16 %v926, 1056980736
  %v959 = vmul.bf16 %v927, 1056980736
  %v960 = vmul.bf16 %v928, 1056980736
  %v961 = vmul.bf16 %v929, 1056980736
  %v962 = vmul.bf16 %v930, 1056980736
  %v963 = vmul.bf16 %v931, 1056980736
  %v964 = vmul.bf16 %v932, 1056980736
  %v965 = vmul.bf16 %v933, 1056980736
  %v966 = vmul.bf16 %v934, 1056980736
  %v967 = vmul.bf16 %v935, 1056980736
  %v968 = vmul.bf16 %v936, 1056980736
  %v969 = vmul.bf16 %v937, 1056980736
  %v970 = vmul.bf16 %v938, 1056980736
  %v971 = vmul.bf16 %v939, 1056980736
  %v972 = vmul.bf16 %v940, 1056980736
  %v973 = vmul.bf16 %v941, 1056980736
  %v974 = vmul.bf16 %v942, 1056980736
  %v975 = vmul.bf16 %v943, 1056980736
  %v976 = vmul.bf16 %v944, 1056980736
  %v977 = vmul.bf16 %v945, 1056980736
  %v978 = vmul.bf16 %v946, 1056980736
  %v979 = vmul.bf16 %v947, 1056980736
  %v980 = vmul.bf16 %v948, 1056980736
  %v981 = vmul.bf16 %v949, 1056980736
  %v982 = vmul.bf16 %v950, 1056980736
  %v983 = vmul.bf16 %v919, %v919
  %v984 = vmul.bf16 %v920, %v920
  %v985 = vmul.bf16 %v921, %v921
  %v986 = vmul.bf16 %v922, %v922
  %v987 = vmul.bf16 %v923, %v923
  %v988 = vmul.bf16 %v924, %v924
  %v989 = vmul.bf16 %v925, %v925
  %v990 = vmul.bf16 %v926, %v926
  %v991 = vmul.bf16 %v927, %v927
  %v992 = vmul.bf16 %v928, %v928
  %v993 = vmul.bf16 %v929, %v929
  %v994 = vmul.bf16 %v930, %v930
  %v995 = vmul.bf16 %v931, %v931
  %v996 = vmul.bf16 %v932, %v932
  %v997 = vmul.bf16 %v933, %v933
  %v998 = vmul.bf16 %v934, %v934
  %v999 = vmul.bf16 %v935, %v935
  %v1000 = vmul.bf16 %v936, %v936
  %v1001 = vmul.bf16 %v937, %v937
  %v1002 = vmul.bf16 %v938, %v938
  %v1003 = vmul.bf16 %v939, %v939
  %v1004 = vmul.bf16 %v940, %v940
  %v1005 = vmul.bf16 %v941, %v941
  %v1006 = vmul.bf16 %v942, %v942
  %v1007 = vmul.bf16 %v943, %v943
  %v1008 = vmul.bf16 %v944, %v944
  %v1009 = vmul.bf16 %v945, %v945
  %v1010 = vmul.bf16 %v946, %v946
  %v1011 = vmul.bf16 %v947, %v947
  %v1012 = vmul.bf16 %v948, %v948
  %v1013 = vmul.bf16 %v949, %v949
  %v1014 = vmul.bf16 %v950, %v950
  %v1015 = vmul.bf16 %v983, 1027030327
  %v1016 = vmul.bf16 %v984, 1027030327
  %v1017 = vmul.bf16 %v985, 1027030327
  %v1018 = vmul.bf16 %v986, 1027030327
  %v1019 = vmul.bf16 %v987, 1027030327
  %v1020 = vmul.bf16 %v988, 1027030327
  %v1021 = vmul.bf16 %v989, 1027030327
  %v1022 = vmul.bf16 %v990, 1027030327
  %v1023 = vmul.bf16 %v991, 1027030327
  %v1024 = vmul.bf16 %v992, 1027030327
  %v1025 = vmul.bf16 %v993, 1027030327
  %v1026 = vmul.bf16 %v994, 1027030327
  %v1027 = vmul.bf16 %v995, 1027030327
  %v1028 = vmul.bf16 %v996, 1027030327
  %v1029 = vmul.bf16 %v997, 1027030327
  %v1030 = vmul.bf16 %v998, 1027030327
  %v1031 = vmul.bf16 %v999, 1027030327
  %v1032 = vmul.bf16 %v1000, 1027030327
  %v1033 = vmul.bf16 %v1001, 1027030327
  %v1034 = vmul.bf16 %v1002, 1027030327
  %v1035 = vmul.bf16 %v1003, 1027030327
  %v1036 = vmul.bf16 %v1004, 1027030327
  %v1037 = vmul.bf16 %v1005, 1027030327
  %v1038 = vmul.bf16 %v1006, 1027030327
  %v1039 = vmul.bf16 %v1007, 1027030327
  %v1040 = vmul.bf16 %v1008, 1027030327
  %v1041 = vmul.bf16 %v1009, 1027030327
  %v1042 = vmul.bf16 %v1010, 1027030327
  %v1043 = vmul.bf16 %v1011, 1027030327
  %v1044 = vmul.bf16 %v1012, 1027030327
  %v1045 = vmul.bf16 %v1013, 1027030327
  %v1046 = vmul.bf16 %v1014, 1027030327
  %v1047 = vmul.bf16 %v1015, %v919
  %v1048 = vmul.bf16 %v1016, %v920
  %v1049 = vmul.bf16 %v1017, %v921
  %v1050 = vmul.bf16 %v1018, %v922
  %v1051 = vmul.bf16 %v1019, %v923
  %v1052 = vmul.bf16 %v1020, %v924
  %v1053 = vmul.bf16 %v1021, %v925
  %v1054 = vmul.bf16 %v1022, %v926
  %v1055 = vmul.bf16 %v1023, %v927
  %v1056 = vmul.bf16 %v1024, %v928
  %v1057 = vmul.bf16 %v1025, %v929
  %v1058 = vmul.bf16 %v1026, %v930
  %v1059 = vmul.bf16 %v1027, %v931
  %v1060 = vmul.bf16 %v1028, %v932
  %v1061 = vmul.bf16 %v1029, %v933
  %v1062 = vmul.bf16 %v1030, %v934
  %v1063 = vmul.bf16 %v1031, %v935
  %v1064 = vmul.bf16 %v1032, %v936
  %v1065 = vmul.bf16 %v1033, %v937
  %v1066 = vmul.bf16 %v1034, %v938
  %v1067 = vmul.bf16 %v1035, %v939
  %v1068 = vmul.bf16 %v1036, %v940
  %v1069 = vmul.bf16 %v1037, %v941
  %v1070 = vmul.bf16 %v1038, %v942
  %v1071 = vmul.bf16 %v1039, %v943
  %v1072 = vmul.bf16 %v1040, %v944
  %v1073 = vmul.bf16 %v1041, %v945
  %v1074 = vmul.bf16 %v1042, %v946
  %v1075 = vmul.bf16 %v1043, %v947
  %v1076 = vmul.bf16 %v1044, %v948
  %v1077 = vmul.bf16 %v1045, %v949
  %v1078 = vmul.bf16 %v1046, %v950
  %v1079 = vadd.bf16 %v919, %v1047
  %v1080 = vadd.bf16 %v920, %v1048
  %v1081 = vadd.bf16 %v921, %v1049
  %v1082 = vadd.bf16 %v922, %v1050
  %v1083 = vadd.bf16 %v923, %v1051
  %v1084 = vadd.bf16 %v924, %v1052
  %v1085 = vadd.bf16 %v925, %v1053
  %v1086 = vadd.bf16 %v926, %v1054
  %v1087 = vadd.bf16 %v927, %v1055
  %v1088 = vadd.bf16 %v928, %v1056
  %v1089 = vadd.bf16 %v929, %v1057
  %v1090 = vadd.bf16 %v930, %v1058
  %v1091 = vadd.bf16 %v931, %v1059
  %v1092 = vadd.bf16 %v932, %v1060
  %v1093 = vadd.bf16 %v933, %v1061
  %v1094 = vadd.bf16 %v934, %v1062
  %v1095 = vadd.bf16 %v935, %v1063
  %v1096 = vadd.bf16 %v936, %v1064
  %v1097 = vadd.bf16 %v937, %v1065
  %v1098 = vadd.bf16 %v938, %v1066
  %v1099 = vadd.bf16 %v939, %v1067
  %v1100 = vadd.bf16 %v940, %v1068
  %v1101 = vadd.bf16 %v941, %v1069
  %v1102 = vadd.bf16 %v942, %v1070
  %v1103 = vadd.bf16 %v943, %v1071
  %v1104 = vadd.bf16 %v944, %v1072
  %v1105 = vadd.bf16 %v945, %v1073
  %v1106 = vadd.bf16 %v946, %v1074
  %v1107 = vadd.bf16 %v947, %v1075
  %v1108 = vadd.bf16 %v948, %v1076
  %v1109 = vadd.bf16 %v949, %v1077
  %v1110 = vadd.bf16 %v950, %v1078
  %v1111 = vmul.bf16 %v1079, 1061961548
  %v1112 = vmul.bf16 %v1080, 1061961548
  %v1113 = vmul.bf16 %v1081, 1061961548
  %v1114 = vmul.bf16 %v1082, 1061961548
  %v1115 = vmul.bf16 %v1083, 1061961548
  %v1116 = vmul.bf16 %v1084, 1061961548
  %v1117 = vmul.bf16 %v1085, 1061961548
  %v1118 = vmul.bf16 %v1086, 1061961548
  %v1119 = vmul.bf16 %v1087, 1061961548
  %v1120 = vmul.bf16 %v1088, 1061961548
  %v1121 = vmul.bf16 %v1089, 1061961548
  %v1122 = vmul.bf16 %v1090, 1061961548
  %v1123 = vmul.bf16 %v1091, 1061961548
  %v1124 = vmul.bf16 %v1092, 1061961548
  %v1125 = vmul.bf16 %v1093, 1061961548
  %v1126 = vmul.bf16 %v1094, 1061961548
  %v1127 = vmul.bf16 %v1095, 1061961548
  %v1128 = vmul.bf16 %v1096, 1061961548
  %v1129 = vmul.bf16 %v1097, 1061961548
  %v1130 = vmul.bf16 %v1098, 1061961548
  %v1131 = vmul.bf16 %v1099, 1061961548
  %v1132 = vmul.bf16 %v1100, 1061961548
  %v1133 = vmul.bf16 %v1101, 1061961548
  %v1134 = vmul.bf16 %v1102, 1061961548
  %v1135 = vmul.bf16 %v1103, 1061961548
  %v1136 = vmul.bf16 %v1104, 1061961548
  %v1137 = vmul.bf16 %v1105, 1061961548
  %v1138 = vmul.bf16 %v1106, 1061961548
  %v1139 = vmul.bf16 %v1107, 1061961548
  %v1140 = vmul.bf16 %v1108, 1061961548
  %v1141 = vmul.bf16 %v1109, 1061961548
  %v1142 = vmul.bf16 %v1110, 1061961548
  %v1143 = vtanh.bf16.pop %v1111
  %v1144 = vtanh.bf16.pop %v1112
  %v1145 = vtanh.bf16.pop %v1113
  %v1146 = vtanh.bf16.pop %v1114
  %v1147 = vtanh.bf16.pop %v1115
  %v1148 = vtanh.bf16.pop %v1116
  %v1149 = vtanh.bf16.pop %v1117
  %v1150 = vtanh.bf16.pop %v1118
  %v1151 = vtanh.bf16.pop %v1119
  %v1152 = vtanh.bf16.pop %v1120
  %v1153 = vtanh.bf16.pop %v1121
  %v1154 = vtanh.bf16.pop %v1122
  %v1155 = vtanh.bf16.pop %v1123
  %v1156 = vtanh.bf16.pop %v1124
  %v1157 = vtanh.bf16.pop %v1125
  %v1158 = vtanh.bf16.pop %v1126
  %v1159 = vtanh.bf16.pop %v1127
  %v1160 = vtanh.bf16.pop %v1128
  %v1161 = vtanh.bf16.pop %v1129
  %v1162 = vtanh.bf16.pop %v1130
  %v1163 = vtanh.bf16.pop %v1131
  %v1164 = vtanh.bf16.pop %v1132
  %v1165 = vtanh.bf16.pop %v1133
  %v1166 = vtanh.bf16.pop %v1134
  %v1167 = vtanh.bf16.pop %v1135
  %v1168 = vtanh.bf16.pop %v1136
  %v1169 = vtanh.bf16.pop %v1137
  %v1170 = vtanh.bf16.pop %v1138
  %v1171 = vtanh.bf16.pop %v1139
  %v1172 = vtanh.bf16.pop %v1140
  %v1173 = vtanh.bf16.pop %v1141
  %v1174 = vtanh.bf16.pop %v1142
  %v1175 = vadd.bf16 %v1143, 1065369472
  %v1176 = vadd.bf16 %v1144, 1065369472
  %v1177 = vadd.bf16 %v1145, 1065369472
  %v1178 = vadd.bf16 %v1146, 1065369472
  %v1179 = vadd.bf16 %v1147, 1065369472
  %v1180 = vadd.bf16 %v1148, 1065369472
  %v1181 = vadd.bf16 %v1149, 1065369472
  %v1182 = vadd.bf16 %v1150, 1065369472
  %v1183 = vadd.bf16 %v1151, 1065369472
  %v1184 = vadd.bf16 %v1152, 1065369472
  %v1185 = vadd.bf16 %v1153, 1065369472
  %v1186 = vadd.bf16 %v1154, 1065369472
  %v1187 = vadd.bf16 %v1155, 1065369472
  %v1188 = vadd.bf16 %v1156, 1065369472
  %v1189 = vadd.bf16 %v1157, 1065369472
  %v1190 = vadd.bf16 %v1158, 1065369472
  %v1191 = vadd.bf16 %v1159, 1065369472
  %v1192 = vadd.bf16 %v1160, 1065369472
  %v1193 = vadd.bf16 %v1161, 1065369472
  %v1194 = vadd.bf16 %v1162, 1065369472
  %v1195 = vadd.bf16 %v1163, 1065369472
  %v1196 = vadd.bf16 %v1164, 1065369472
  %v1197 = vadd.bf16 %v1165, 1065369472
  %v1198 = vadd.bf16 %v1166, 1065369472
  %v1199 = vadd.bf16 %v1167, 1065369472
  %v1200 = vadd.bf16 %v1168, 1065369472
  %v1201 = vadd.bf16 %v1169, 1065369472
  %v1202 = vadd.bf16 %v1170, 1065369472
  %v1203 = vadd.bf16 %v1171, 1065369472
  %v1204 = vadd.bf16 %v1172, 1065369472
  %v1205 = vadd.bf16 %v1173, 1065369472
  %v1206 = vadd.bf16 %v1174, 1065369472
  %v1207 = vmul.bf16 %v951, %v1175
  %v1208 = vmul.bf16 %v952, %v1176
  %v1209 = vmul.bf16 %v953, %v1177
  %v1210 = vmul.bf16 %v954, %v1178
  %v1211 = vmul.bf16 %v955, %v1179
  %v1212 = vmul.bf16 %v956, %v1180
  %v1213 = vmul.bf16 %v957, %v1181
  %v1214 = vmul.bf16 %v958, %v1182
  %v1215 = vmul.bf16 %v959, %v1183
  %v1216 = vmul.bf16 %v960, %v1184
  %v1217 = vmul.bf16 %v961, %v1185
  %v1218 = vmul.bf16 %v962, %v1186
  %v1219 = vmul.bf16 %v963, %v1187
  %v1220 = vmul.bf16 %v964, %v1188
  %v1221 = vmul.bf16 %v965, %v1189
  %v1222 = vmul.bf16 %v966, %v1190
  %v1223 = vmul.bf16 %v967, %v1191
  %v1224 = vmul.bf16 %v968, %v1192
  %v1225 = vmul.bf16 %v969, %v1193
  %v1226 = vmul.bf16 %v970, %v1194
  %v1227 = vmul.bf16 %v971, %v1195
  %v1228 = vmul.bf16 %v972, %v1196
  %v1229 = vmul.bf16 %v973, %v1197
  %v1230 = vmul.bf16 %v974, %v1198
  %v1231 = vmul.bf16 %v975, %v1199
  %v1232 = vmul.bf16 %v976, %v1200
  %v1233 = vmul.bf16 %v977, %v1201
  %v1234 = vmul.bf16 %v978, %v1202
  %v1235 = vmul.bf16 %v979, %v1203
  %v1236 = vmul.bf16 %v980, %v1204
  %v1237 = vmul.bf16 %v981, %v1205
  %v1238 = vmul.bf16 %v982, %v1206
  %v1241 = vcombine.high %v28, %v28
  %v1243 = vunpack.c.l.s4 1966171168
  %v1244 = vunpack.c.0.s8 %v1243
  %v1245 = vlaneseq
  %v1246 = vshrl.u32 %v1245, 7
  %v1247 = vsub.s32 %v1244, %v1246
  %v1248 = vrot.slane %v28, %v1247
  %v1250 = vunpack.c.l.s4 1966171168
  %v1251 = vunpack.c.0.s8 %v1250
  %v1252 = vlaneseq
  %v1253 = vshrl.u32 %v1252, 7
  %v1254 = vsub.s32 %v1251, %v1253
  %v1255 = vrot.slane %v1241, %v1254
  %v1256 = vcombine.high %v1248, %v1248
  %v1257 = vcombine.high %v1255, %v1255
  %v1259 = vunpack.c.l.s4 1966171168
  %v1260 = vunpack.c.0.s8 %v1259
  %v1261 = vlaneseq
  %v1262 = vshrl.u32 %v1261, 7
  %v1263 = vsub.s32 %v1260, %v1262
  %v1264 = vrot.slane %v1248, %v1263
  %v1266 = vunpack.c.l.s4 1966171168
  %v1267 = vunpack.c.0.s8 %v1266
  %v1268 = vlaneseq
  %v1269 = vshrl.u32 %v1268, 7
  %v1270 = vsub.s32 %v1267, %v1269
  %v1271 = vrot.slane %v1255, %v1270
  %v1273 = vunpack.c.l.s4 1966171168
  %v1274 = vunpack.c.0.s8 %v1273
  %v1275 = vlaneseq
  %v1276 = vshrl.u32 %v1275, 7
  %v1277 = vsub.s32 %v1274, %v1276
  %v1278 = vrot.slane %v1256, %v1277
  %v1280 = vunpack.c.l.s4 1966171168
  %v1281 = vunpack.c.0.s8 %v1280
  %v1282 = vlaneseq
  %v1283 = vshrl.u32 %v1282, 7
  %v1284 = vsub.s32 %v1281, %v1283
  %v1285 = vrot.slane %v1257, %v1284
  %v1286 = vcombine.high %v1264, %v1264
  %v1287 = vcombine.high %v1271, %v1271
  %v1288 = vcombine.high %v1278, %v1278
  %v1289 = vcombine.high %v1285, %v1285
  %v1290 = vcombine.high %v29, %v29
  %v1292 = vunpack.c.l.s4 1966171168
  %v1293 = vunpack.c.0.s8 %v1292
  %v1294 = vlaneseq
  %v1295 = vshrl.u32 %v1294, 7
  %v1296 = vsub.s32 %v1293, %v1295
  %v1297 = vrot.slane %v29, %v1296
  %v1299 = vunpack.c.l.s4 1966171168
  %v1300 = vunpack.c.0.s8 %v1299
  %v1301 = vlaneseq
  %v1302 = vshrl.u32 %v1301, 7
  %v1303 = vsub.s32 %v1300, %v1302
  %v1304 = vrot.slane %v1290, %v1303
  %v1305 = vcombine.high %v1297, %v1297
  %v1306 = vcombine.high %v1304, %v1304
  %v1308 = vunpack.c.l.s4 1966171168
  %v1309 = vunpack.c.0.s8 %v1308
  %v1310 = vlaneseq
  %v1311 = vshrl.u32 %v1310, 7
  %v1312 = vsub.s32 %v1309, %v1311
  %v1313 = vrot.slane %v1297, %v1312
  %v1315 = vunpack.c.l.s4 1966171168
  %v1316 = vunpack.c.0.s8 %v1315
  %v1317 = vlaneseq
  %v1318 = vshrl.u32 %v1317, 7
  %v1319 = vsub.s32 %v1316, %v1318
  %v1320 = vrot.slane %v1304, %v1319
  %v1322 = vunpack.c.l.s4 1966171168
  %v1323 = vunpack.c.0.s8 %v1322
  %v1324 = vlaneseq
  %v1325 = vshrl.u32 %v1324, 7
  %v1326 = vsub.s32 %v1323, %v1325
  %v1327 = vrot.slane %v1305, %v1326
  %v1329 = vunpack.c.l.s4 1966171168
  %v1330 = vunpack.c.0.s8 %v1329
  %v1331 = vlaneseq
  %v1332 = vshrl.u32 %v1331, 7
  %v1333 = vsub.s32 %v1330, %v1332
  %v1334 = vrot.slane %v1306, %v1333
  %v1335 = vcombine.high %v1313, %v1313
  %v1336 = vcombine.high %v1320, %v1320
  %v1337 = vcombine.high %v1327, %v1327
  %v1338 = vcombine.high %v1334, %v1334
  %v1340 = vpack.i.b16 %v1264, %v1264
  %v1342 = vlaneseq
  %v1343 = vshrl.u32 %v1342, 7
  %v1344 = vsub.s32 0, %v1343
  %v1345 = vrot.slane %v1340, %v1344
  %v1347 = vpack.i.b16 %v1278, %v1278
  %v1349 = vlaneseq
  %v1350 = vshrl.u32 %v1349, 7
  %v1351 = vsub.s32 0, %v1350
  %v1352 = vrot.slane %v1347, %v1351
  %v1354 = vpack.i.b16 %v1286, %v1286
  %v1356 = vlaneseq
  %v1357 = vshrl.u32 %v1356, 7
  %v1358 = vsub.s32 0, %v1357
  %v1359 = vrot.slane %v1354, %v1358
  %v1361 = vpack.i.b16 %v1288, %v1288
  %v1363 = vlaneseq
  %v1364 = vshrl.u32 %v1363, 7
  %v1365 = vsub.s32 0, %v1364
  %v1366 = vrot.slane %v1361, %v1365
  %v1368 = vpack.i.b16 %v1271, %v1271
  %v1370 = vlaneseq
  %v1371 = vshrl.u32 %v1370, 7
  %v1372 = vsub.s32 0, %v1371
  %v1373 = vrot.slane %v1368, %v1372
  %v1375 = vpack.i.b16 %v1285, %v1285
  %v1377 = vlaneseq
  %v1378 = vshrl.u32 %v1377, 7
  %v1379 = vsub.s32 0, %v1378
  %v1380 = vrot.slane %v1375, %v1379
  %v1382 = vpack.i.b16 %v1287, %v1287
  %v1384 = vlaneseq
  %v1385 = vshrl.u32 %v1384, 7
  %v1386 = vsub.s32 0, %v1385
  %v1387 = vrot.slane %v1382, %v1386
  %v1389 = vpack.i.b16 %v1289, %v1289
  %v1391 = vlaneseq
  %v1392 = vshrl.u32 %v1391, 7
  %v1393 = vsub.s32 0, %v1392
  %v1394 = vrot.slane %v1389, %v1393
  %v1396 = vpack.i.b16 %v1313, %v1313
  %v1398 = vlaneseq
  %v1399 = vshrl.u32 %v1398, 7
  %v1400 = vsub.s32 0, %v1399
  %v1401 = vrot.slane %v1396, %v1400
  %v1403 = vpack.i.b16 %v1327, %v1327
  %v1405 = vlaneseq
  %v1406 = vshrl.u32 %v1405, 7
  %v1407 = vsub.s32 0, %v1406
  %v1408 = vrot.slane %v1403, %v1407
  %v1410 = vpack.i.b16 %v1335, %v1335
  %v1412 = vlaneseq
  %v1413 = vshrl.u32 %v1412, 7
  %v1414 = vsub.s32 0, %v1413
  %v1415 = vrot.slane %v1410, %v1414
  %v1417 = vpack.i.b16 %v1337, %v1337
  %v1419 = vlaneseq
  %v1420 = vshrl.u32 %v1419, 7
  %v1421 = vsub.s32 0, %v1420
  %v1422 = vrot.slane %v1417, %v1421
  %v1424 = vpack.i.b16 %v1320, %v1320
  %v1426 = vlaneseq
  %v1427 = vshrl.u32 %v1426, 7
  %v1428 = vsub.s32 0, %v1427
  %v1429 = vrot.slane %v1424, %v1428
  %v1431 = vpack.i.b16 %v1334, %v1334
  %v1433 = vlaneseq
  %v1434 = vshrl.u32 %v1433, 7
  %v1435 = vsub.s32 0, %v1434
  %v1436 = vrot.slane %v1431, %v1435
  %v1438 = vpack.i.b16 %v1336, %v1336
  %v1440 = vlaneseq
  %v1441 = vshrl.u32 %v1440, 7
  %v1442 = vsub.s32 0, %v1441
  %v1443 = vrot.slane %v1438, %v1442
  %v1445 = vpack.i.b16 %v1338, %v1338
  %v1447 = vlaneseq
  %v1448 = vshrl.u32 %v1447, 7
  %v1449 = vsub.s32 0, %v1448
  %v1450 = vrot.slane %v1445, %v1449
  %v1451 = vmul.bf16 %v1207, %v1345
  %v1452 = vmul.bf16 %v1208, %v1352
  %v1453 = vmul.bf16 %v1209, %v1359
  %v1454 = vmul.bf16 %v1210, %v1366
  %v1455 = vmul.bf16 %v1211, %v1373
  %v1456 = vmul.bf16 %v1212, %v1380
  %v1457 = vmul.bf16 %v1213, %v1387
  %v1458 = vmul.bf16 %v1214, %v1394
  %v1459 = vmul.bf16 %v1215, %v1401
  %v1460 = vmul.bf16 %v1216, %v1408
  %v1461 = vmul.bf16 %v1217, %v1415
  %v1462 = vmul.bf16 %v1218, %v1422
  %v1463 = vmul.bf16 %v1219, %v1429
  %v1464 = vmul.bf16 %v1220, %v1436
  %v1465 = vmul.bf16 %v1221, %v1443
  %v1466 = vmul.bf16 %v1222, %v1450
  %v1467 = vmul.bf16 %v1223, %v1345
  %v1468 = vmul.bf16 %v1224, %v1352
  %v1469 = vmul.bf16 %v1225, %v1359
  %v1470 = vmul.bf16 %v1226, %v1366
  %v1471 = vmul.bf16 %v1227, %v1373
  %v1472 = vmul.bf16 %v1228, %v1380
  %v1473 = vmul.bf16 %v1229, %v1387
  %v1474 = vmul.bf16 %v1230, %v1394
  %v1475 = vmul.bf16 %v1231, %v1401
  %v1476 = vmul.bf16 %v1232, %v1408
  %v1477 = vmul.bf16 %v1233, %v1415
  %v1478 = vmul.bf16 %v1234, %v1422
  %v1479 = vmul.bf16 %v1235, %v1429
  %v1480 = vmul.bf16 %v1236, %v1436
  %v1481 = vmul.bf16 %v1237, %v1443
  %v1482 = vmul.bf16 %v1238, %v1450
  %v1483 = vld [vmem:[%s2] sm:$0xf]
  %v1484 = vld [vmem:[%s2 + $0x4] sm:$0xf]
  %v1485 = vld [vmem:[%s2 + $0x8] sm:$0xf]
  %v1486 = vld [vmem:[%s2 + $0xc] sm:$0xf]
  %v1491 = vunpack.c.l.b16 %v1483
  %v1492 = vunpack.c.l.b16 %v1484
  %v1493 = vunpack.c.l.b16 %v1485
  %v1494 = vunpack.c.l.b16 %v1486
  %v1495 = vpack.c.b16 %v1492, %v1491
  %v1496 = vpack.c.b16 %v1494, %v1493
  %vm1497 = vcmask 261120
  %v1499 = vsel %vm1497, %v1495, 0
  %v1502 = vsel %vm1497, %v1496, 0
  %1504 = vmatprep.subr.bf16.mxu0 0
  %1505 = vmatpush1.bf16.msra.mxu0 0
  %1506 = vmatprep.subr.bf16.mxu0 0
  %1507 = vmatpush1.bf16.msra.mxu0 0
  %1508 = vmatprep.subr.bf16.mxu0 0
  %1509 = vmatpush1.bf16.msra.mxu0 0
  %1510 = vmatprep.subr.bf16.mxu0 0
  %1511 = vmatpush1.bf16.msra.mxu0 0
  %1512 = vmatprep.subr.bf16.mxu0 0
  %1513 = vmatpush1.bf16.msra.mxu0 0
  %1514 = vmatprep.subr.bf16.mxu0 0
  %1515 = vmatpush1.bf16.msra.mxu0 0
  %1516 = vmatprep.subr.bf16.mxu0 %v1468
  %1517 = vmatpush1.bf16.msra.mxu0 %v1467
  %1518 = vmatprep.subr.bf16.mxu0 %v1452
  %1519 = vmatpush1.bf16.msra.mxu0 %v1451
  %1520 = vmatprep.subr.bf16.mxu0 0
  %1521 = vmatpush2.bf16.msra.mxu0 0
  %1522 = vmatprep.subr.bf16.mxu0 0
  %1523 = vmatpush2.bf16.msra.mxu0 0
  %1524 = vmatprep.subr.bf16.mxu0 0
  %1525 = vmatpush2.bf16.msra.mxu0 0
  %1526 = vmatprep.subr.bf16.mxu0 0
  %1527 = vmatpush2.bf16.msra.mxu0 0
  %1528 = vmatprep.subr.bf16.mxu0 0
  %1529 = vmatpush2.bf16.msra.mxu0 0
  %1530 = vmatprep.subr.bf16.mxu0 0
  %1531 = vmatpush2.bf16.msra.mxu0 0
  %1532 = vmatprep.subr.bf16.mxu0 0
  %1533 = vmatpush2.bf16.msra.mxu0 0
  %1534 = vmatprep.subr.bf16.mxu0 0
  %1535 = vmatpush2.bf16.msra.mxu0 0
  %1536 = vmatprep.mubr.bf16.mxu0 0
  %1537 = vmatmul.mubr.bf16.gmra.mxu0 %v1499
  %v1538 = vpop.f32.mrf.mxu0
  %v1539 = vadd.f32 0.0, %v1538
  %v1540 = vpop.f32.mrf.mxu0
  %v1541 = vadd.f32 0.0, %v1540
  %v1542 = vpop.f32.mrf.mxu0
  %v1543 = vadd.f32 0.0, %v1542
  %v1544 = vpop.f32.mrf.mxu0
  %v1545 = vadd.f32 0.0, %v1544
  %1546 = vmatprep.mubr.bf16.mxu0 0
  %1547 = vmatmul.mubr.bf16.gmra.mxu0 %v1502
  %v1548 = vpop.f32.mrf.mxu0
  %v1549 = vadd.f32 0.0, %v1548
  %v1550 = vpop.f32.mrf.mxu0
  %v1551 = vadd.f32 0.0, %v1550
  %v1552 = vpop.f32.mrf.mxu0
  %v1553 = vadd.f32 0.0, %v1552
  %v1554 = vpop.f32.mrf.mxu0
  %v1555 = vadd.f32 0.0, %v1554
  %1556 = vdwg.mxu0
  %1557 = vmatprep.subr.bf16.mxu0 0
  %1558 = vmatpush1.bf16.msra.mxu0 0
  %1559 = vmatprep.subr.bf16.mxu0 0
  %1560 = vmatpush1.bf16.msra.mxu0 0
  %1561 = vmatprep.subr.bf16.mxu0 0
  %1562 = vmatpush1.bf16.msra.mxu0 0
  %1563 = vmatprep.subr.bf16.mxu0 0
  %1564 = vmatpush1.bf16.msra.mxu0 0
  %1565 = vmatprep.subr.bf16.mxu0 0
  %1566 = vmatpush1.bf16.msra.mxu0 0
  %1567 = vmatprep.subr.bf16.mxu0 0
  %1568 = vmatpush1.bf16.msra.mxu0 0
  %1569 = vmatprep.subr.bf16.mxu0 %v1470
  %1570 = vmatpush1.bf16.msra.mxu0 %v1469
  %1571 = vmatprep.subr.bf16.mxu0 %v1454
  %1572 = vmatpush1.bf16.msra.mxu0 %v1453
  %1573 = vmatprep.subr.bf16.mxu0 0
  %1574 = vmatpush2.bf16.msra.mxu0 0
  %1575 = vmatprep.subr.bf16.mxu0 0
  %1576 = vmatpush2.bf16.msra.mxu0 0
  %1577 = vmatprep.subr.bf16.mxu0 0
  %1578 = vmatpush2.bf16.msra.mxu0 0
  %1579 = vmatprep.subr.bf16.mxu0 0
  %1580 = vmatpush2.bf16.msra.mxu0 0
  %1581 = vmatprep.subr.bf16.mxu0 0
  %1582 = vmatpush2.bf16.msra.mxu0 0
  %1583 = vmatprep.subr.bf16.mxu0 0
  %1584 = vmatpush2.bf16.msra.mxu0 0
  %1585 = vmatprep.subr.bf16.mxu0 0
  %1586 = vmatpush2.bf16.msra.mxu0 0
  %1587 = vmatprep.subr.bf16.mxu0 0
  %1588 = vmatpush2.bf16.msra.mxu0 0
  %1589 = vmatprep.mubr.bf16.mxu0 0
  %1590 = vmatmul.mubr.bf16.gmra.mxu0 %v1499
  %v1591 = vpop.f32.mrf.mxu0
  %v1592 = vadd.f32 0.0, %v1591
  %v1593 = vpop.f32.mrf.mxu0
  %v1594 = vadd.f32 0.0, %v1593
  %v1595 = vpop.f32.mrf.mxu0
  %v1596 = vadd.f32 0.0, %v1595
  %v1597 = vpop.f32.mrf.mxu0
  %v1598 = vadd.f32 0.0, %v1597
  %1599 = vmatprep.mubr.bf16.mxu0 0
  %1600 = vmatmul.mubr.bf16.gmra.mxu0 %v1502
  %v1601 = vpop.f32.mrf.mxu0
  %v1602 = vadd.f32 0.0, %v1601
  %v1603 = vpop.f32.mrf.mxu0
  %v1604 = vadd.f32 0.0, %v1603
  %v1605 = vpop.f32.mrf.mxu0
  %v1606 = vadd.f32 0.0, %v1605
  %v1607 = vpop.f32.mrf.mxu0
  %v1608 = vadd.f32 0.0, %v1607
  %1609 = vdwg.mxu0
  %1610 = vmatprep.subr.bf16.mxu0 0
  %1611 = vmatpush1.bf16.msra.mxu0 0
  %1612 = vmatprep.subr.bf16.mxu0 0
  %1613 = vmatpush1.bf16.msra.mxu0 0
  %1614 = vmatprep.subr.bf16.mxu0 0
  %1615 = vmatpush1.bf16.msra.mxu0 0
  %1616 = vmatprep.subr.bf16.mxu0 0
  %1617 = vmatpush1.bf16.msra.mxu0 0
  %1618 = vmatprep.subr.bf16.mxu0 0
  %1619 = vmatpush1.bf16.msra.mxu0 0
  %1620 = vmatprep.subr.bf16.mxu0 0
  %1621 = vmatpush1.bf16.msra.mxu0 0
  %1622 = vmatprep.subr.bf16.mxu0 %v1472
  %1623 = vmatpush1.bf16.msra.mxu0 %v1471
  %1624 = vmatprep.subr.bf16.mxu0 %v1456
  %1625 = vmatpush1.bf16.msra.mxu0 %v1455
  %1626 = vmatprep.subr.bf16.mxu0 0
  %1627 = vmatpush2.bf16.msra.mxu0 0
  %1628 = vmatprep.subr.bf16.mxu0 0
  %1629 = vmatpush2.bf16.msra.mxu0 0
  %1630 = vmatprep.subr.bf16.mxu0 0
  %1631 = vmatpush2.bf16.msra.mxu0 0
  %1632 = vmatprep.subr.bf16.mxu0 0
  %1633 = vmatpush2.bf16.msra.mxu0 0
  %1634 = vmatprep.subr.bf16.mxu0 0
  %1635 = vmatpush2.bf16.msra.mxu0 0
  %1636 = vmatprep.subr.bf16.mxu0 0
  %1637 = vmatpush2.bf16.msra.mxu0 0
  %1638 = vmatprep.subr.bf16.mxu0 0
  %1639 = vmatpush2.bf16.msra.mxu0 0
  %1640 = vmatprep.subr.bf16.mxu0 0
  %1641 = vmatpush2.bf16.msra.mxu0 0
  %1642 = vmatprep.mubr.bf16.mxu0 0
  %1643 = vmatmul.mubr.bf16.gmra.mxu0 %v1499
  %v1644 = vpop.f32.mrf.mxu0
  %v1645 = vadd.f32 0.0, %v1644
  %v1646 = vpop.f32.mrf.mxu0
  %v1647 = vadd.f32 0.0, %v1646
  %v1648 = vpop.f32.mrf.mxu0
  %v1649 = vadd.f32 0.0, %v1648
  %v1650 = vpop.f32.mrf.mxu0
  %v1651 = vadd.f32 0.0, %v1650
  %1652 = vmatprep.mubr.bf16.mxu0 0
  %1653 = vmatmul.mubr.bf16.gmra.mxu0 %v1502
  %v1654 = vpop.f32.mrf.mxu0
  %v1655 = vadd.f32 0.0, %v1654
  %v1656 = vpop.f32.mrf.mxu0
  %v1657 = vadd.f32 0.0, %v1656
  %v1658 = vpop.f32.mrf.mxu0
  %v1659 = vadd.f32 0.0, %v1658
  %v1660 = vpop.f32.mrf.mxu0
  %v1661 = vadd.f32 0.0, %v1660
  %1662 = vdwg.mxu0
  %1663 = vmatprep.subr.bf16.mxu0 0
  %1664 = vmatpush1.bf16.msra.mxu0 0
  %1665 = vmatprep.subr.bf16.mxu0 0
  %1666 = vmatpush1.bf16.msra.mxu0 0
  %1667 = vmatprep.subr.bf16.mxu0 0
  %1668 = vmatpush1.bf16.msra.mxu0 0
  %1669 = vmatprep.subr.bf16.mxu0 0
  %1670 = vmatpush1.bf16.msra.mxu0 0
  %1671 = vmatprep.subr.bf16.mxu0 0
  %1672 = vmatpush1.bf16.msra.mxu0 0
  %1673 = vmatprep.subr.bf16.mxu0 0
  %1674 = vmatpush1.bf16.msra.mxu0 0
  %1675 = vmatprep.subr.bf16.mxu0 %v1474
  %1676 = vmatpush1.bf16.msra.mxu0 %v1473
  %1677 = vmatprep.subr.bf16.mxu0 %v1458
  %1678 = vmatpush1.bf16.msra.mxu0 %v1457
  %1679 = vmatprep.subr.bf16.mxu0 0
  %1680 = vmatpush2.bf16.msra.mxu0 0
  %1681 = vmatprep.subr.bf16.mxu0 0
  %1682 = vmatpush2.bf16.msra.mxu0 0
  %1683 = vmatprep.subr.bf16.mxu0 0
  %1684 = vmatpush2.bf16.msra.mxu0 0
  %1685 = vmatprep.subr.bf16.mxu0 0
  %1686 = vmatpush2.bf16.msra.mxu0 0
  %1687 = vmatprep.subr.bf16.mxu0 0
  %1688 = vmatpush2.bf16.msra.mxu0 0
  %1689 = vmatprep.subr.bf16.mxu0 0
  %1690 = vmatpush2.bf16.msra.mxu0 0
  %1691 = vmatprep.subr.bf16.mxu0 0
  %1692 = vmatpush2.bf16.msra.mxu0 0
  %1693 = vmatprep.subr.bf16.mxu0 0
  %1694 = vmatpush2.bf16.msra.mxu0 0
  %1695 = vmatprep.mubr.bf16.mxu0 0
  %1696 = vmatmul.mubr.bf16.gmra.mxu0 %v1499
  %v1697 = vpop.f32.mrf.mxu0
  %v1698 = vadd.f32 0.0, %v1697
  %v1699 = vpop.f32.mrf.mxu0
  %v1700 = vadd.f32 0.0, %v1699
  %v1701 = vpop.f32.mrf.mxu0
  %v1702 = vadd.f32 0.0, %v1701
  %v1703 = vpop.f32.mrf.mxu0
  %v1704 = vadd.f32 0.0, %v1703
  %1705 = vmatprep.mubr.bf16.mxu0 0
  %1706 = vmatmul.mubr.bf16.gmra.mxu0 %v1502
  %v1707 = vpop.f32.mrf.mxu0
  %v1708 = vadd.f32 0.0, %v1707
  %v1709 = vpop.f32.mrf.mxu0
  %v1710 = vadd.f32 0.0, %v1709
  %v1711 = vpop.f32.mrf.mxu0
  %v1712 = vadd.f32 0.0, %v1711
  %v1713 = vpop.f32.mrf.mxu0
  %v1714 = vadd.f32 0.0, %v1713
  %1715 = vdwg.mxu0
  %1716 = vmatprep.subr.bf16.mxu0 0
  %1717 = vmatpush1.bf16.msra.mxu0 0
  %1718 = vmatprep.subr.bf16.mxu0 0
  %1719 = vmatpush1.bf16.msra.mxu0 0
  %1720 = vmatprep.subr.bf16.mxu0 0
  %1721 = vmatpush1.bf16.msra.mxu0 0
  %1722 = vmatprep.subr.bf16.mxu0 0
  %1723 = vmatpush1.bf16.msra.mxu0 0
  %1724 = vmatprep.subr.bf16.mxu0 0
  %1725 = vmatpush1.bf16.msra.mxu0 0
  %1726 = vmatprep.subr.bf16.mxu0 0
  %1727 = vmatpush1.bf16.msra.mxu0 0
  %1728 = vmatprep.subr.bf16.mxu0 %v1476
  %1729 = vmatpush1.bf16.msra.mxu0 %v1475
  %1730 = vmatprep.subr.bf16.mxu0 %v1460
  %1731 = vmatpush1.bf16.msra.mxu0 %v1459
  %1732 = vmatprep.subr.bf16.mxu0 0
  %1733 = vmatpush2.bf16.msra.mxu0 0
  %1734 = vmatprep.subr.bf16.mxu0 0
  %1735 = vmatpush2.bf16.msra.mxu0 0
  %1736 = vmatprep.subr.bf16.mxu0 0
  %1737 = vmatpush2.bf16.msra.mxu0 0
  %1738 = vmatprep.subr.bf16.mxu0 0
  %1739 = vmatpush2.bf16.msra.mxu0 0
  %1740 = vmatprep.subr.bf16.mxu0 0
  %1741 = vmatpush2.bf16.msra.mxu0 0
  %1742 = vmatprep.subr.bf16.mxu0 0
  %1743 = vmatpush2.bf16.msra.mxu0 0
  %1744 = vmatprep.subr.bf16.mxu0 0
  %1745 = vmatpush2.bf16.msra.mxu0 0
  %1746 = vmatprep.subr.bf16.mxu0 0
  %1747 = vmatpush2.bf16.msra.mxu0 0
  %1748 = vmatprep.mubr.bf16.mxu0 0
  %1749 = vmatmul.mubr.bf16.gmra.mxu0 %v1499
  %v1750 = vpop.f32.mrf.mxu0
  %v1751 = vadd.f32 0.0, %v1750
  %v1752 = vpop.f32.mrf.mxu0
  %v1753 = vadd.f32 0.0, %v1752
  %v1754 = vpop.f32.mrf.mxu0
  %v1755 = vadd.f32 0.0, %v1754
  %v1756 = vpop.f32.mrf.mxu0
  %v1757 = vadd.f32 0.0, %v1756
  %1758 = vmatprep.mubr.bf16.mxu0 0
  %1759 = vmatmul.mubr.bf16.gmra.mxu0 %v1502
  %v1760 = vpop.f32.mrf.mxu0
  %v1761 = vadd.f32 0.0, %v1760
  %v1762 = vpop.f32.mrf.mxu0
  %v1763 = vadd.f32 0.0, %v1762
  %v1764 = vpop.f32.mrf.mxu0
  %v1765 = vadd.f32 0.0, %v1764
  %v1766 = vpop.f32.mrf.mxu0
  %v1767 = vadd.f32 0.0, %v1766
  %1768 = vdwg.mxu0
  %1769 = vmatprep.subr.bf16.mxu0 0
  %1770 = vmatpush1.bf16.msra.mxu0 0
  %1771 = vmatprep.subr.bf16.mxu0 0
  %1772 = vmatpush1.bf16.msra.mxu0 0
  %1773 = vmatprep.subr.bf16.mxu0 0
  %1774 = vmatpush1.bf16.msra.mxu0 0
  %1775 = vmatprep.subr.bf16.mxu0 0
  %1776 = vmatpush1.bf16.msra.mxu0 0
  %1777 = vmatprep.subr.bf16.mxu0 0
  %1778 = vmatpush1.bf16.msra.mxu0 0
  %1779 = vmatprep.subr.bf16.mxu0 0
  %1780 = vmatpush1.bf16.msra.mxu0 0
  %1781 = vmatprep.subr.bf16.mxu0 %v1478
  %1782 = vmatpush1.bf16.msra.mxu0 %v1477
  %1783 = vmatprep.subr.bf16.mxu0 %v1462
  %1784 = vmatpush1.bf16.msra.mxu0 %v1461
  %1785 = vmatprep.subr.bf16.mxu0 0
  %1786 = vmatpush2.bf16.msra.mxu0 0
  %1787 = vmatprep.subr.bf16.mxu0 0
  %1788 = vmatpush2.bf16.msra.mxu0 0
  %1789 = vmatprep.subr.bf16.mxu0 0
  %1790 = vmatpush2.bf16.msra.mxu0 0
  %1791 = vmatprep.subr.bf16.mxu0 0
  %1792 = vmatpush2.bf16.msra.mxu0 0
  %1793 = vmatprep.subr.bf16.mxu0 0
  %1794 = vmatpush2.bf16.msra.mxu0 0
  %1795 = vmatprep.subr.bf16.mxu0 0
  %1796 = vmatpush2.bf16.msra.mxu0 0
  %1797 = vmatprep.subr.bf16.mxu0 0
  %1798 = vmatpush2.bf16.msra.mxu0 0
  %1799 = vmatprep.subr.bf16.mxu0 0
  %1800 = vmatpush2.bf16.msra.mxu0 0
  %1801 = vmatprep.mubr.bf16.mxu0 0
  %1802 = vmatmul.mubr.bf16.gmra.mxu0 %v1499
  %v1803 = vpop.f32.mrf.mxu0
  %v1804 = vadd.f32 0.0, %v1803
  %v1805 = vpop.f32.mrf.mxu0
  %v1806 = vadd.f32 0.0, %v1805
  %v1807 = vpop.f32.mrf.mxu0
  %v1808 = vadd.f32 0.0, %v1807
  %v1809 = vpop.f32.mrf.mxu0
  %v1810 = vadd.f32 0.0, %v1809
  %1811 = vmatprep.mubr.bf16.mxu0 0
  %1812 = vmatmul.mubr.bf16.gmra.mxu0 %v1502
  %v1813 = vpop.f32.mrf.mxu0
  %v1814 = vadd.f32 0.0, %v1813
  %v1815 = vpop.f32.mrf.mxu0
  %v1816 = vadd.f32 0.0, %v1815
  %v1817 = vpop.f32.mrf.mxu0
  %v1818 = vadd.f32 0.0, %v1817
  %v1819 = vpop.f32.mrf.mxu0
  %v1820 = vadd.f32 0.0, %v1819
  %1821 = vdwg.mxu0
  %1822 = vmatprep.subr.bf16.mxu0 0
  %1823 = vmatpush1.bf16.msra.mxu0 0
  %1824 = vmatprep.subr.bf16.mxu0 0
  %1825 = vmatpush1.bf16.msra.mxu0 0
  %1826 = vmatprep.subr.bf16.mxu0 0
  %1827 = vmatpush1.bf16.msra.mxu0 0
  %1828 = vmatprep.subr.bf16.mxu0 0
  %1829 = vmatpush1.bf16.msra.mxu0 0
  %1830 = vmatprep.subr.bf16.mxu0 0
  %1831 = vmatpush1.bf16.msra.mxu0 0
  %1832 = vmatprep.subr.bf16.mxu0 0
  %1833 = vmatpush1.bf16.msra.mxu0 0
  %1834 = vmatprep.subr.bf16.mxu0 %v1480
  %1835 = vmatpush1.bf16.msra.mxu0 %v1479
  %1836 = vmatprep.subr.bf16.mxu0 %v1464
  %1837 = vmatpush1.bf16.msra.mxu0 %v1463
  %1838 = vmatprep.subr.bf16.mxu0 0
  %1839 = vmatpush2.bf16.msra.mxu0 0
  %1840 = vmatprep.subr.bf16.mxu0 0
  %1841 = vmatpush2.bf16.msra.mxu0 0
  %1842 = vmatprep.subr.bf16.mxu0 0
  %1843 = vmatpush2.bf16.msra.mxu0 0
  %1844 = vmatprep.subr.bf16.mxu0 0
  %1845 = vmatpush2.bf16.msra.mxu0 0
  %1846 = vmatprep.subr.bf16.mxu0 0
  %1847 = vmatpush2.bf16.msra.mxu0 0
  %1848 = vmatprep.subr.bf16.mxu0 0
  %1849 = vmatpush2.bf16.msra.mxu0 0
  %1850 = vmatprep.subr.bf16.mxu0 0
  %1851 = vmatpush2.bf16.msra.mxu0 0
  %1852 = vmatprep.subr.bf16.mxu0 0
  %1853 = vmatpush2.bf16.msra.mxu0 0
  %1854 = vmatprep.mubr.bf16.mxu0 0
  %1855 = vmatmul.mubr.bf16.gmra.mxu0 %v1499
  %v1856 = vpop.f32.mrf.mxu0
  %v1857 = vadd.f32 0.0, %v1856
  %v1858 = vpop.f32.mrf.mxu0
  %v1859 = vadd.f32 0.0, %v1858
  %v1860 = vpop.f32.mrf.mxu0
  %v1861 = vadd.f32 0.0, %v1860
  %v1862 = vpop.f32.mrf.mxu0
  %v1863 = vadd.f32 0.0, %v1862
  %1864 = vmatprep.mubr.bf16.mxu0 0
  %1865 = vmatmul.mubr.bf16.gmra.mxu0 %v1502
  %v1866 = vpop.f32.mrf.mxu0
  %v1867 = vadd.f32 0.0, %v1866
  %v1868 = vpop.f32.mrf.mxu0
  %v1869 = vadd.f32 0.0, %v1868
  %v1870 = vpop.f32.mrf.mxu0
  %v1871 = vadd.f32 0.0, %v1870
  %v1872 = vpop.f32.mrf.mxu0
  %v1873 = vadd.f32 0.0, %v1872
  %1874 = vdwg.mxu0
  %1875 = vmatprep.subr.bf16.mxu0 0
  %1876 = vmatpush1.bf16.msra.mxu0 0
  %1877 = vmatprep.subr.bf16.mxu0 0
  %1878 = vmatpush1.bf16.msra.mxu0 0
  %1879 = vmatprep.subr.bf16.mxu0 0
  %1880 = vmatpush1.bf16.msra.mxu0 0
  %1881 = vmatprep.subr.bf16.mxu0 0
  %1882 = vmatpush1.bf16.msra.mxu0 0
  %1883 = vmatprep.subr.bf16.mxu0 0
  %1884 = vmatpush1.bf16.msra.mxu0 0
  %1885 = vmatprep.subr.bf16.mxu0 0
  %1886 = vmatpush1.bf16.msra.mxu0 0
  %1887 = vmatprep.subr.bf16.mxu0 %v1482
  %1888 = vmatpush1.bf16.msra.mxu0 %v1481
  %1889 = vmatprep.subr.bf16.mxu0 %v1466
  %1890 = vmatpush1.bf16.msra.mxu0 %v1465
  %1891 = vmatprep.subr.bf16.mxu0 0
  %1892 = vmatpush2.bf16.msra.mxu0 0
  %1893 = vmatprep.subr.bf16.mxu0 0
  %1894 = vmatpush2.bf16.msra.mxu0 0
  %1895 = vmatprep.subr.bf16.mxu0 0
  %1896 = vmatpush2.bf16.msra.mxu0 0
  %1897 = vmatprep.subr.bf16.mxu0 0
  %1898 = vmatpush2.bf16.msra.mxu0 0
  %1899 = vmatprep.subr.bf16.mxu0 0
  %1900 = vmatpush2.bf16.msra.mxu0 0
  %1901 = vmatprep.subr.bf16.mxu0 0
  %1902 = vmatpush2.bf16.msra.mxu0 0
  %1903 = vmatprep.subr.bf16.mxu0 0
  %1904 = vmatpush2.bf16.msra.mxu0 0
  %1905 = vmatprep.subr.bf16.mxu0 0
  %1906 = vmatpush2.bf16.msra.mxu0 0
  %1907 = vmatprep.mubr.bf16.mxu0 0
  %1908 = vmatmul.mubr.bf16.gmra.mxu0 %v1499
  %v1909 = vpop.f32.mrf.mxu0
  %v1910 = vadd.f32 0.0, %v1909
  %v1911 = vpop.f32.mrf.mxu0
  %v1912 = vadd.f32 0.0, %v1911
  %v1913 = vpop.f32.mrf.mxu0
  %v1914 = vadd.f32 0.0, %v1913
  %v1915 = vpop.f32.mrf.mxu0
  %v1916 = vadd.f32 0.0, %v1915
  %1917 = vmatprep.mubr.bf16.mxu0 0
  %1918 = vmatmul.mubr.bf16.gmra.mxu0 %v1502
  %v1919 = vpop.f32.mrf.mxu0
  %v1920 = vadd.f32 0.0, %v1919
  %v1921 = vpop.f32.mrf.mxu0
  %v1922 = vadd.f32 0.0, %v1921
  %v1923 = vpop.f32.mrf.mxu0
  %v1924 = vadd.f32 0.0, %v1923
  %v1925 = vpop.f32.mrf.mxu0
  %v1926 = vadd.f32 0.0, %v1925
  %1927 = vdwg.mxu0
  %v1928 = vmul.f32 %v1539, %v1539
  %v1929 = vmul.f32 %v1541, %v1541
  %v1930 = vmul.f32 %v1592, %v1592
  %v1931 = vmul.f32 %v1594, %v1594
  %v1932 = vmul.f32 %v1645, %v1645
  %v1933 = vmul.f32 %v1647, %v1647
  %v1934 = vmul.f32 %v1698, %v1698
  %v1935 = vmul.f32 %v1700, %v1700
  %v1936 = vmul.f32 %v1751, %v1751
  %v1937 = vmul.f32 %v1753, %v1753
  %v1938 = vmul.f32 %v1804, %v1804
  %v1939 = vmul.f32 %v1806, %v1806
  %v1940 = vmul.f32 %v1857, %v1857
  %v1941 = vmul.f32 %v1859, %v1859
  %v1942 = vmul.f32 %v1910, %v1910
  %v1943 = vmul.f32 %v1912, %v1912
  %v1944 = vmul.f32 %v1543, %v1543
  %v1945 = vmul.f32 %v1545, %v1545
  %v1946 = vmul.f32 %v1596, %v1596
  %v1947 = vmul.f32 %v1598, %v1598
  %v1948 = vmul.f32 %v1649, %v1649
  %v1949 = vmul.f32 %v1651, %v1651
  %v1950 = vmul.f32 %v1702, %v1702
  %v1951 = vmul.f32 %v1704, %v1704
  %v1952 = vmul.f32 %v1755, %v1755
  %v1953 = vmul.f32 %v1757, %v1757
  %v1954 = vmul.f32 %v1808, %v1808
  %v1955 = vmul.f32 %v1810, %v1810
  %v1956 = vmul.f32 %v1861, %v1861
  %v1957 = vmul.f32 %v1863, %v1863
  %v1958 = vmul.f32 %v1914, %v1914
  %v1959 = vmul.f32 %v1916, %v1916
  %v1960 = vmul.f32 %v1549, %v1549
  %v1961 = vmul.f32 %v1551, %v1551
  %v1962 = vmul.f32 %v1602, %v1602
  %v1963 = vmul.f32 %v1604, %v1604
  %v1964 = vmul.f32 %v1655, %v1655
  %v1965 = vmul.f32 %v1657, %v1657
  %v1966 = vmul.f32 %v1708, %v1708
  %v1967 = vmul.f32 %v1710, %v1710
  %v1968 = vmul.f32 %v1761, %v1761
  %v1969 = vmul.f32 %v1763, %v1763
  %v1970 = vmul.f32 %v1814, %v1814
  %v1971 = vmul.f32 %v1816, %v1816
  %v1972 = vmul.f32 %v1867, %v1867
  %v1973 = vmul.f32 %v1869, %v1869
  %v1974 = vmul.f32 %v1920, %v1920
  %v1975 = vmul.f32 %v1922, %v1922
  %v1976 = vmul.f32 %v1553, %v1553
  %v1977 = vmul.f32 %v1555, %v1555
  %v1978 = vmul.f32 %v1606, %v1606
  %v1979 = vmul.f32 %v1608, %v1608
  %v1980 = vmul.f32 %v1659, %v1659
  %v1981 = vmul.f32 %v1661, %v1661
  %v1982 = vmul.f32 %v1712, %v1712
  %v1983 = vmul.f32 %v1714, %v1714
  %v1984 = vmul.f32 %v1765, %v1765
  %v1985 = vmul.f32 %v1767, %v1767
  %v1986 = vmul.f32 %v1818, %v1818
  %v1987 = vmul.f32 %v1820, %v1820
  %v1988 = vmul.f32 %v1871, %v1871
  %v1989 = vmul.f32 %v1873, %v1873
  %v1990 = vmul.f32 %v1924, %v1924
  %v1991 = vmul.f32 %v1926, %v1926
  %v1992 = vadd.f32 %v1539, %v1541
  %v1993 = vadd.f32 %v1992, %v1592
  %v1994 = vadd.f32 %v1993, %v1594
  %v1995 = vadd.f32 %v1994, %v1645
  %v1996 = vadd.f32 %v1995, %v1647
  %v1997 = vadd.f32 %v1996, %v1698
  %v1998 = vadd.f32 %v1997, %v1700
  %v1999 = vadd.f32 %v1998, %v1751
  %v2000 = vadd.f32 %v1999, %v1753
  %v2001 = vadd.f32 %v2000, %v1804
  %v2002 = vadd.f32 %v2001, %v1806
  %v2003 = vadd.f32 %v2002, %v1857
  %v2004 = vadd.f32 %v2003, %v1859
  %v2005 = vadd.f32 %v2004, %v1910
  %v2006 = vadd.f32 %v2005, %v1912
  %2007 = vadd.xlane.f32.xlu0 %v2006
  %v2008 = vpop.xlane.xlu0 %2007
  %v2009 = vadd.f32 %v1543, %v1545
  %v2010 = vadd.f32 %v2009, %v1596
  %v2011 = vadd.f32 %v2010, %v1598
  %v2012 = vadd.f32 %v2011, %v1649
  %v2013 = vadd.f32 %v2012, %v1651
  %v2014 = vadd.f32 %v2013, %v1702
  %v2015 = vadd.f32 %v2014, %v1704
  %v2016 = vadd.f32 %v2015, %v1755
  %v2017 = vadd.f32 %v2016, %v1757
  %v2018 = vadd.f32 %v2017, %v1808
  %v2019 = vadd.f32 %v2018, %v1810
  %v2020 = vadd.f32 %v2019, %v1861
  %v2021 = vadd.f32 %v2020, %v1863
  %v2022 = vadd.f32 %v2021, %v1914
  %v2023 = vadd.f32 %v2022, %v1916
  %2024 = vadd.xlane.f32.xlu0 %v2023
  %v2025 = vpop.xlane.xlu0 %2024
  %v2026 = vadd.f32 %v1549, %v1551
  %v2027 = vadd.f32 %v2026, %v1602
  %v2028 = vadd.f32 %v2027, %v1604
  %v2029 = vadd.f32 %v2028, %v1655
  %v2030 = vadd.f32 %v2029, %v1657
  %v2031 = vadd.f32 %v2030, %v1708
  %v2032 = vadd.f32 %v2031, %v1710
  %v2033 = vadd.f32 %v2032, %v1761
  %v2034 = vadd.f32 %v2033, %v1763
  %v2035 = vadd.f32 %v2034, %v1814
  %v2036 = vadd.f32 %v2035, %v1816
  %v2037 = vadd.f32 %v2036, %v1867
  %v2038 = vadd.f32 %v2037, %v1869
  %v2039 = vadd.f32 %v2038, %v1920
  %v2040 = vadd.f32 %v2039, %v1922
  %2041 = vadd.xlane.f32.xlu0 %v2040
  %v2042 = vpop.xlane.xlu0 %2041
  %v2043 = vadd.f32 %v1553, %v1555
  %v2044 = vadd.f32 %v2043, %v1606
  %v2045 = vadd.f32 %v2044, %v1608
  %v2046 = vadd.f32 %v2045, %v1659
  %v2047 = vadd.f32 %v2046, %v1661
  %v2048 = vadd.f32 %v2047, %v1712
  %v2049 = vadd.f32 %v2048, %v1714
  %v2050 = vadd.f32 %v2049, %v1765
  %v2051 = vadd.f32 %v2050, %v1767
  %v2052 = vadd.f32 %v2051, %v1818
  %v2053 = vadd.f32 %v2052, %v1820
  %v2054 = vadd.f32 %v2053, %v1871
  %v2055 = vadd.f32 %v2054, %v1873
  %v2056 = vadd.f32 %v2055, %v1924
  %v2057 = vadd.f32 %v2056, %v1926
  %2058 = vadd.xlane.f32.xlu0 %v2057
  %v2059 = vpop.xlane.xlu0 %2058
  %v2060 = vadd.f32 %v1928, %v1929
  %v2061 = vadd.f32 %v2060, %v1930
  %v2062 = vadd.f32 %v2061, %v1931
  %v2063 = vadd.f32 %v2062, %v1932
  %v2064 = vadd.f32 %v2063, %v1933
  %v2065 = vadd.f32 %v2064, %v1934
  %v2066 = vadd.f32 %v2065, %v1935
  %v2067 = vadd.f32 %v2066, %v1936
  %v2068 = vadd.f32 %v2067, %v1937
  %v2069 = vadd.f32 %v2068, %v1938
  %v2070 = vadd.f32 %v2069, %v1939
  %v2071 = vadd.f32 %v2070, %v1940
  %v2072 = vadd.f32 %v2071, %v1941
  %v2073 = vadd.f32 %v2072, %v1942
  %v2074 = vadd.f32 %v2073, %v1943
  %2075 = vadd.xlane.f32.xlu0 %v2074
  %v2076 = vpop.xlane.xlu0 %2075
  %v2077 = vadd.f32 %v1944, %v1945
  %v2078 = vadd.f32 %v2077, %v1946
  %v2079 = vadd.f32 %v2078, %v1947
  %v2080 = vadd.f32 %v2079, %v1948
  %v2081 = vadd.f32 %v2080, %v1949
  %v2082 = vadd.f32 %v2081, %v1950
  %v2083 = vadd.f32 %v2082, %v1951
  %v2084 = vadd.f32 %v2083, %v1952
  %v2085 = vadd.f32 %v2084, %v1953
  %v2086 = vadd.f32 %v2085, %v1954
  %v2087 = vadd.f32 %v2086, %v1955
  %v2088 = vadd.f32 %v2087, %v1956
  %v2089 = vadd.f32 %v2088, %v1957
  %v2090 = vadd.f32 %v2089, %v1958
  %v2091 = vadd.f32 %v2090, %v1959
  %2092 = vadd.xlane.f32.xlu0 %v2091
  %v2093 = vpop.xlane.xlu0 %2092
  %v2094 = vadd.f32 %v1960, %v1961
  %v2095 = vadd.f32 %v2094, %v1962
  %v2096 = vadd.f32 %v2095, %v1963
  %v2097 = vadd.f32 %v2096, %v1964
  %v2098 = vadd.f32 %v2097, %v1965
  %v2099 = vadd.f32 %v2098, %v1966
  %v2100 = vadd.f32 %v2099, %v1967
  %v2101 = vadd.f32 %v2100, %v1968
  %v2102 = vadd.f32 %v2101, %v1969
  %v2103 = vadd.f32 %v2102, %v1970
  %v2104 = vadd.f32 %v2103, %v1971
  %v2105 = vadd.f32 %v2104, %v1972
  %v2106 = vadd.f32 %v2105, %v1973
  %v2107 = vadd.f32 %v2106, %v1974
  %v2108 = vadd.f32 %v2107, %v1975
  %2109 = vadd.xlane.f32.xlu0 %v2108
  %v2110 = vpop.xlane.xlu0 %2109
  %v2111 = vadd.f32 %v1976, %v1977
  %v2112 = vadd.f32 %v2111, %v1978
  %v2113 = vadd.f32 %v2112, %v1979
  %v2114 = vadd.f32 %v2113, %v1980
  %v2115 = vadd.f32 %v2114, %v1981
  %v2116 = vadd.f32 %v2115, %v1982
  %v2117 = vadd.f32 %v2116, %v1983
  %v2118 = vadd.f32 %v2117, %v1984
  %v2119 = vadd.f32 %v2118, %v1985
  %v2120 = vadd.f32 %v2119, %v1986
  %v2121 = vadd.f32 %v2120, %v1987
  %v2122 = vadd.f32 %v2121, %v1988
  %v2123 = vadd.f32 %v2122, %v1989
  %v2124 = vadd.f32 %v2123, %v1990
  %v2125 = vadd.f32 %v2124, %v1991
  %2126 = vadd.xlane.f32.xlu0 %v2125
  %v2127 = vpop.xlane.xlu0 %2126
  %v2128 = vmul.f32 %v2008, 0.001953125
  %v2129 = vmul.f32 %v2025, 0.001953125
  %v2130 = vmul.f32 %v2042, 0.001953125
  %v2131 = vmul.f32 %v2059, 0.001953125
  %v2132 = vmul.f32 %v2076, 0.001953125
  %v2133 = vmul.f32 %v2093, 0.001953125
  %v2134 = vmul.f32 %v2110, 0.001953125
  %v2135 = vmul.f32 %v2127, 0.001953125
  %v2136 = vmul.f32 %v2128, %v2128
  %v2137 = vmul.f32 %v2129, %v2129
  %v2138 = vmul.f32 %v2130, %v2130
  %v2139 = vmul.f32 %v2131, %v2131
  %v2140 = vsub.f32 %v2132, %v2136
  %v2141 = vsub.f32 %v2133, %v2137
  %v2142 = vsub.f32 %v2134, %v2138
  %v2143 = vsub.f32 %v2135, %v2139
  %v2144 = vmax.f32 %v2140, 0.0
  %v2145 = vmax.f32 %v2141, 0.0
  %v2146 = vmax.f32 %v2142, 0.0
  %v2147 = vmax.f32 %v2143, 0.0
  %v2148 = vld [vmem:[%s4] sm:$0xff]
  %v2149 = vld [vmem:[%s4 + $0x8] sm:$0xff]
  %v2150 = vld [vmem:[%s4 + $0x10] sm:$0xff]
  %v2151 = vld [vmem:[%s4 + $0x18] sm:$0xff]
  %v2152 = vadd.f32 %v2144, 1e-05
  %v2153 = vadd.f32 %v2145, 1e-05
  %v2154 = vadd.f32 %v2146, 1e-05
  %v2155 = vadd.f32 %v2147, 1e-05
  %v2156 = vrsqrt.pop %v2152
  %v2157 = vrsqrt.pop %v2153
  %v2158 = vrsqrt.pop %v2154
  %v2159 = vrsqrt.pop %v2155
  %v2160 = vmul.f32 %v2148, %v2156
  %v2161 = vmul.f32 %v2149, %v2157
  %v2162 = vmul.f32 %v2150, %v2158
  %v2163 = vmul.f32 %v2151, %v2159
  %v2164 = vmul.f32 %v2128, %v2160
  %v2165 = vmul.f32 %v2129, %v2161
  %v2166 = vmul.f32 %v2130, %v2162
  %v2167 = vmul.f32 %v2131, %v2163
  %2172 = vrot.lane.b32.xlu0 %v2164, 1
  %v2173 = vpop.permute.xlu0 %2172
  %2174 = vrot.lane.b32.xlu0 %v2165, 1
  %v2175 = vpop.permute.xlu0 %2174
  %2176 = vrot.lane.b32.xlu0 %v2166, 1
  %v2177 = vpop.permute.xlu0 %2176
  %2178 = vrot.lane.b32.xlu0 %v2167, 1
  %v2179 = vpop.permute.xlu0 %2178
  %v2184 = vsub.f32 %v2148, %v2173
  %v2185 = vsub.f32 %v2149, %v2175
  %v2186 = vsub.f32 %v2150, %v2177
  %v2187 = vsub.f32 %v2151, %v2179
  %v2188 = vpack.c.bf16 %v1543, %v1539
  %v2189 = vpack.c.bf16 %v1545, %v1541
  %v2190 = vpack.c.bf16 %v1596, %v1592
  %v2191 = vpack.c.bf16 %v1598, %v1594
  %v2192 = vpack.c.bf16 %v1649, %v1645
  %v2193 = vpack.c.bf16 %v1651, %v1647
  %v2194 = vpack.c.bf16 %v1702, %v1698
  %v2195 = vpack.c.bf16 %v1704, %v1700
  %v2196 = vpack.c.bf16 %v1755, %v1751
  %v2197 = vpack.c.bf16 %v1757, %v1753
  %v2198 = vpack.c.bf16 %v1808, %v1804
  %v2199 = vpack.c.bf16 %v1810, %v1806
  %v2200 = vpack.c.bf16 %v1861, %v1857
  %v2201 = vpack.c.bf16 %v1863, %v1859
  %v2202 = vpack.c.bf16 %v1914, %v1910
  %v2203 = vpack.c.bf16 %v1916, %v1912
  %v2204 = vpack.c.bf16 %v1553, %v1549
  %v2205 = vpack.c.bf16 %v1555, %v1551
  %v2206 = vpack.c.bf16 %v1606, %v1602
  %v2207 = vpack.c.bf16 %v1608, %v1604
  %v2208 = vpack.c.bf16 %v1659, %v1655
  %v2209 = vpack.c.bf16 %v1661, %v1657
  %v2210 = vpack.c.bf16 %v1712, %v1708
  %v2211 = vpack.c.bf16 %v1714, %v1710
  %v2212 = vpack.c.bf16 %v1765, %v1761
  %v2213 = vpack.c.bf16 %v1767, %v1763
  %v2214 = vpack.c.bf16 %v1818, %v1814
  %v2215 = vpack.c.bf16 %v1820, %v1816
  %v2216 = vpack.c.bf16 %v1871, %v1867
  %v2217 = vpack.c.bf16 %v1873, %v1869
  %v2218 = vpack.c.bf16 %v1924, %v1920
  %v2219 = vpack.c.bf16 %v1926, %v1922
  %v2220 = vpack.c.bf16 %v2161, %v2160
  %v2221 = vpack.c.bf16 %v2163, %v2162
  %2223 = vset.pattern.permute.xlu0 2
  %2224 = vperm.xlu0 %2223, %v2220
  %v2225 = vpop.permute.xlu0 %2224
  %2228 = vset.pattern.permute.xlu0 2
  %2229 = vperm.xlu0 %2228, %v2221
  %v2230 = vpop.permute.xlu0 %2229
  %v2232 = vmul.bf16 %v2188, %v2225
  %v2233 = vmul.bf16 %v2189, %v2225
  %v2234 = vmul.bf16 %v2190, %v2225
  %v2235 = vmul.bf16 %v2191, %v2225
  %v2236 = vmul.bf16 %v2192, %v2225
  %v2237 = vmul.bf16 %v2193, %v2225
  %v2238 = vmul.bf16 %v2194, %v2225
  %v2239 = vmul.bf16 %v2195, %v2225
  %v2240 = vmul.bf16 %v2196, %v2225
  %v2241 = vmul.bf16 %v2197, %v2225
  %v2242 = vmul.bf16 %v2198, %v2225
  %v2243 = vmul.bf16 %v2199, %v2225
  %v2244 = vmul.bf16 %v2200, %v2225
  %v2245 = vmul.bf16 %v2201, %v2225
  %v2246 = vmul.bf16 %v2202, %v2225
  %v2247 = vmul.bf16 %v2203, %v2225
  %v2248 = vmul.bf16 %v2204, %v2230
  %v2249 = vmul.bf16 %v2205, %v2230
  %v2250 = vmul.bf16 %v2206, %v2230
  %v2251 = vmul.bf16 %v2207, %v2230
  %v2252 = vmul.bf16 %v2208, %v2230
  %v2253 = vmul.bf16 %v2209, %v2230
  %v2254 = vmul.bf16 %v2210, %v2230
  %v2255 = vmul.bf16 %v2211, %v2230
  %v2256 = vmul.bf16 %v2212, %v2230
  %v2257 = vmul.bf16 %v2213, %v2230
  %v2258 = vmul.bf16 %v2214, %v2230
  %v2259 = vmul.bf16 %v2215, %v2230
  %v2260 = vmul.bf16 %v2216, %v2230
  %v2261 = vmul.bf16 %v2217, %v2230
  %v2262 = vmul.bf16 %v2218, %v2230
  %v2263 = vmul.bf16 %v2219, %v2230
  %v2264 = vpack.c.bf16 %v2185, %v2184
  %v2265 = vpack.c.bf16 %v2187, %v2186
  %2267 = vset.pattern.permute.xlu0 3
  %2268 = vperm.xlu0 %2267, %v2264
  %v2269 = vpop.permute.xlu0 %2268
  %2272 = vset.pattern.permute.xlu0 3
  %2273 = vperm.xlu0 %2272, %v2265
  %v2274 = vpop.permute.xlu0 %2273
  %v2276 = vadd.bf16 %v2232, %v2269
  %v2277 = vadd.bf16 %v2233, %v2269
  %v2278 = vadd.bf16 %v2234, %v2269
  %v2279 = vadd.bf16 %v2235, %v2269
  %v2280 = vadd.bf16 %v2236, %v2269
  %v2281 = vadd.bf16 %v2237, %v2269
  %v2282 = vadd.bf16 %v2238, %v2269
  %v2283 = vadd.bf16 %v2239, %v2269
  %v2284 = vadd.bf16 %v2240, %v2269
  %v2285 = vadd.bf16 %v2241, %v2269
  %v2286 = vadd.bf16 %v2242, %v2269
  %v2287 = vadd.bf16 %v2243, %v2269
  %v2288 = vadd.bf16 %v2244, %v2269
  %v2289 = vadd.bf16 %v2245, %v2269
  %v2290 = vadd.bf16 %v2246, %v2269
  %v2291 = vadd.bf16 %v2247, %v2269
  %v2292 = vadd.bf16 %v2248, %v2274
  %v2293 = vadd.bf16 %v2249, %v2274
  %v2294 = vadd.bf16 %v2250, %v2274
  %v2295 = vadd.bf16 %v2251, %v2274
  %v2296 = vadd.bf16 %v2252, %v2274
  %v2297 = vadd.bf16 %v2253, %v2274
  %v2298 = vadd.bf16 %v2254, %v2274
  %v2299 = vadd.bf16 %v2255, %v2274
  %v2300 = vadd.bf16 %v2256, %v2274
  %v2301 = vadd.bf16 %v2257, %v2274
  %v2302 = vadd.bf16 %v2258, %v2274
  %v2303 = vadd.bf16 %v2259, %v2274
  %v2304 = vadd.bf16 %v2260, %v2274
  %v2305 = vadd.bf16 %v2261, %v2274
  %v2306 = vadd.bf16 %v2262, %v2274
  %v2307 = vadd.bf16 %v2263, %v2274
  %v2308 = vmul.bf16 %v2276, 1056980736
  %v2309 = vmul.bf16 %v2277, 1056980736
  %v2310 = vmul.bf16 %v2278, 1056980736
  %v2311 = vmul.bf16 %v2279, 1056980736
  %v2312 = vmul.bf16 %v2280, 1056980736
  %v2313 = vmul.bf16 %v2281, 1056980736
  %v2314 = vmul.bf16 %v2282, 1056980736
  %v2315 = vmul.bf16 %v2283, 1056980736
  %v2316 = vmul.bf16 %v2284, 1056980736
  %v2317 = vmul.bf16 %v2285, 1056980736
  %v2318 = vmul.bf16 %v2286, 1056980736
  %v2319 = vmul.bf16 %v2287, 1056980736
  %v2320 = vmul.bf16 %v2288, 1056980736
  %v2321 = vmul.bf16 %v2289, 1056980736
  %v2322 = vmul.bf16 %v2290, 1056980736
  %v2323 = vmul.bf16 %v2291, 1056980736
  %v2324 = vmul.bf16 %v2292, 1056980736
  %v2325 = vmul.bf16 %v2293, 1056980736
  %v2326 = vmul.bf16 %v2294, 1056980736
  %v2327 = vmul.bf16 %v2295, 1056980736
  %v2328 = vmul.bf16 %v2296, 1056980736
  %v2329 = vmul.bf16 %v2297, 1056980736
  %v2330 = vmul.bf16 %v2298, 1056980736
  %v2331 = vmul.bf16 %v2299, 1056980736
  %v2332 = vmul.bf16 %v2300, 1056980736
  %v2333 = vmul.bf16 %v2301, 1056980736
  %v2334 = vmul.bf16 %v2302, 1056980736
  %v2335 = vmul.bf16 %v2303, 1056980736
  %v2336 = vmul.bf16 %v2304, 1056980736
  %v2337 = vmul.bf16 %v2305, 1056980736
  %v2338 = vmul.bf16 %v2306, 1056980736
  %v2339 = vmul.bf16 %v2307, 1056980736
  %v2340 = vmul.bf16 %v2276, %v2276
  %v2341 = vmul.bf16 %v2277, %v2277
  %v2342 = vmul.bf16 %v2278, %v2278
  %v2343 = vmul.bf16 %v2279, %v2279
  %v2344 = vmul.bf16 %v2280, %v2280
  %v2345 = vmul.bf16 %v2281, %v2281
  %v2346 = vmul.bf16 %v2282, %v2282
  %v2347 = vmul.bf16 %v2283, %v2283
  %v2348 = vmul.bf16 %v2284, %v2284
  %v2349 = vmul.bf16 %v2285, %v2285
  %v2350 = vmul.bf16 %v2286, %v2286
  %v2351 = vmul.bf16 %v2287, %v2287
  %v2352 = vmul.bf16 %v2288, %v2288
  %v2353 = vmul.bf16 %v2289, %v2289
  %v2354 = vmul.bf16 %v2290, %v2290
  %v2355 = vmul.bf16 %v2291, %v2291
  %v2356 = vmul.bf16 %v2292, %v2292
  %v2357 = vmul.bf16 %v2293, %v2293
  %v2358 = vmul.bf16 %v2294, %v2294
  %v2359 = vmul.bf16 %v2295, %v2295
  %v2360 = vmul.bf16 %v2296, %v2296
  %v2361 = vmul.bf16 %v2297, %v2297
  %v2362 = vmul.bf16 %v2298, %v2298
  %v2363 = vmul.bf16 %v2299, %v2299
  %v2364 = vmul.bf16 %v2300, %v2300
  %v2365 = vmul.bf16 %v2301, %v2301
  %v2366 = vmul.bf16 %v2302, %v2302
  %v2367 = vmul.bf16 %v2303, %v2303
  %v2368 = vmul.bf16 %v2304, %v2304
  %v2369 = vmul.bf16 %v2305, %v2305
  %v2370 = vmul.bf16 %v2306, %v2306
  %v2371 = vmul.bf16 %v2307, %v2307
  %v2372 = vmul.bf16 %v2340, 1027030327
  %v2373 = vmul.bf16 %v2341, 1027030327
  %v2374 = vmul.bf16 %v2342, 1027030327
  %v2375 = vmul.bf16 %v2343, 1027030327
  %v2376 = vmul.bf16 %v2344, 1027030327
  %v2377 = vmul.bf16 %v2345, 1027030327
  %v2378 = vmul.bf16 %v2346, 1027030327
  %v2379 = vmul.bf16 %v2347, 1027030327
  %v2380 = vmul.bf16 %v2348, 1027030327
  %v2381 = vmul.bf16 %v2349, 1027030327
  %v2382 = vmul.bf16 %v2350, 1027030327
  %v2383 = vmul.bf16 %v2351, 1027030327
  %v2384 = vmul.bf16 %v2352, 1027030327
  %v2385 = vmul.bf16 %v2353, 1027030327
  %v2386 = vmul.bf16 %v2354, 1027030327
  %v2387 = vmul.bf16 %v2355, 1027030327
  %v2388 = vmul.bf16 %v2356, 1027030327
  %v2389 = vmul.bf16 %v2357, 1027030327
  %v2390 = vmul.bf16 %v2358, 1027030327
  %v2391 = vmul.bf16 %v2359, 1027030327
  %v2392 = vmul.bf16 %v2360, 1027030327
  %v2393 = vmul.bf16 %v2361, 1027030327
  %v2394 = vmul.bf16 %v2362, 1027030327
  %v2395 = vmul.bf16 %v2363, 1027030327
  %v2396 = vmul.bf16 %v2364, 1027030327
  %v2397 = vmul.bf16 %v2365, 1027030327
  %v2398 = vmul.bf16 %v2366, 1027030327
  %v2399 = vmul.bf16 %v2367, 1027030327
  %v2400 = vmul.bf16 %v2368, 1027030327
  %v2401 = vmul.bf16 %v2369, 1027030327
  %v2402 = vmul.bf16 %v2370, 1027030327
  %v2403 = vmul.bf16 %v2371, 1027030327
  %v2404 = vmul.bf16 %v2372, %v2276
  %v2405 = vmul.bf16 %v2373, %v2277
  %v2406 = vmul.bf16 %v2374, %v2278
  %v2407 = vmul.bf16 %v2375, %v2279
  %v2408 = vmul.bf16 %v2376, %v2280
  %v2409 = vmul.bf16 %v2377, %v2281
  %v2410 = vmul.bf16 %v2378, %v2282
  %v2411 = vmul.bf16 %v2379, %v2283
  %v2412 = vmul.bf16 %v2380, %v2284
  %v2413 = vmul.bf16 %v2381, %v2285
  %v2414 = vmul.bf16 %v2382, %v2286
  %v2415 = vmul.bf16 %v2383, %v2287
  %v2416 = vmul.bf16 %v2384, %v2288
  %v2417 = vmul.bf16 %v2385, %v2289
  %v2418 = vmul.bf16 %v2386, %v2290
  %v2419 = vmul.bf16 %v2387, %v2291
  %v2420 = vmul.bf16 %v2388, %v2292
  %v2421 = vmul.bf16 %v2389, %v2293
  %v2422 = vmul.bf16 %v2390, %v2294
  %v2423 = vmul.bf16 %v2391, %v2295
  %v2424 = vmul.bf16 %v2392, %v2296
  %v2425 = vmul.bf16 %v2393, %v2297
  %v2426 = vmul.bf16 %v2394, %v2298
  %v2427 = vmul.bf16 %v2395, %v2299
  %v2428 = vmul.bf16 %v2396, %v2300
  %v2429 = vmul.bf16 %v2397, %v2301
  %v2430 = vmul.bf16 %v2398, %v2302
  %v2431 = vmul.bf16 %v2399, %v2303
  %v2432 = vmul.bf16 %v2400, %v2304
  %v2433 = vmul.bf16 %v2401, %v2305
  %v2434 = vmul.bf16 %v2402, %v2306
  %v2435 = vmul.bf16 %v2403, %v2307
  %v2436 = vadd.bf16 %v2276, %v2404
  %v2437 = vadd.bf16 %v2277, %v2405
  %v2438 = vadd.bf16 %v2278, %v2406
  %v2439 = vadd.bf16 %v2279, %v2407
  %v2440 = vadd.bf16 %v2280, %v2408
  %v2441 = vadd.bf16 %v2281, %v2409
  %v2442 = vadd.bf16 %v2282, %v2410
  %v2443 = vadd.bf16 %v2283, %v2411
  %v2444 = vadd.bf16 %v2284, %v2412
  %v2445 = vadd.bf16 %v2285, %v2413
  %v2446 = vadd.bf16 %v2286, %v2414
  %v2447 = vadd.bf16 %v2287, %v2415
  %v2448 = vadd.bf16 %v2288, %v2416
  %v2449 = vadd.bf16 %v2289, %v2417
  %v2450 = vadd.bf16 %v2290, %v2418
  %v2451 = vadd.bf16 %v2291, %v2419
  %v2452 = vadd.bf16 %v2292, %v2420
  %v2453 = vadd.bf16 %v2293, %v2421
  %v2454 = vadd.bf16 %v2294, %v2422
  %v2455 = vadd.bf16 %v2295, %v2423
  %v2456 = vadd.bf16 %v2296, %v2424
  %v2457 = vadd.bf16 %v2297, %v2425
  %v2458 = vadd.bf16 %v2298, %v2426
  %v2459 = vadd.bf16 %v2299, %v2427
  %v2460 = vadd.bf16 %v2300, %v2428
  %v2461 = vadd.bf16 %v2301, %v2429
  %v2462 = vadd.bf16 %v2302, %v2430
  %v2463 = vadd.bf16 %v2303, %v2431
  %v2464 = vadd.bf16 %v2304, %v2432
  %v2465 = vadd.bf16 %v2305, %v2433
  %v2466 = vadd.bf16 %v2306, %v2434
  %v2467 = vadd.bf16 %v2307, %v2435
  %v2468 = vmul.bf16 %v2436, 1061961548
  %v2469 = vmul.bf16 %v2437, 1061961548
  %v2470 = vmul.bf16 %v2438, 1061961548
  %v2471 = vmul.bf16 %v2439, 1061961548
  %v2472 = vmul.bf16 %v2440, 1061961548
  %v2473 = vmul.bf16 %v2441, 1061961548
  %v2474 = vmul.bf16 %v2442, 1061961548
  %v2475 = vmul.bf16 %v2443, 1061961548
  %v2476 = vmul.bf16 %v2444, 1061961548
  %v2477 = vmul.bf16 %v2445, 1061961548
  %v2478 = vmul.bf16 %v2446, 1061961548
  %v2479 = vmul.bf16 %v2447, 1061961548
  %v2480 = vmul.bf16 %v2448, 1061961548
  %v2481 = vmul.bf16 %v2449, 1061961548
  %v2482 = vmul.bf16 %v2450, 1061961548
  %v2483 = vmul.bf16 %v2451, 1061961548
  %v2484 = vmul.bf16 %v2452, 1061961548
  %v2485 = vmul.bf16 %v2453, 1061961548
  %v2486 = vmul.bf16 %v2454, 1061961548
  %v2487 = vmul.bf16 %v2455, 1061961548
  %v2488 = vmul.bf16 %v2456, 1061961548
  %v2489 = vmul.bf16 %v2457, 1061961548
  %v2490 = vmul.bf16 %v2458, 1061961548
  %v2491 = vmul.bf16 %v2459, 1061961548
  %v2492 = vmul.bf16 %v2460, 1061961548
  %v2493 = vmul.bf16 %v2461, 1061961548
  %v2494 = vmul.bf16 %v2462, 1061961548
  %v2495 = vmul.bf16 %v2463, 1061961548
  %v2496 = vmul.bf16 %v2464, 1061961548
  %v2497 = vmul.bf16 %v2465, 1061961548
  %v2498 = vmul.bf16 %v2466, 1061961548
  %v2499 = vmul.bf16 %v2467, 1061961548
  %v2500 = vtanh.bf16.pop %v2468
  %v2501 = vtanh.bf16.pop %v2469
  %v2502 = vtanh.bf16.pop %v2470
  %v2503 = vtanh.bf16.pop %v2471
  %v2504 = vtanh.bf16.pop %v2472
  %v2505 = vtanh.bf16.pop %v2473
  %v2506 = vtanh.bf16.pop %v2474
  %v2507 = vtanh.bf16.pop %v2475
  %v2508 = vtanh.bf16.pop %v2476
  %v2509 = vtanh.bf16.pop %v2477
  %v2510 = vtanh.bf16.pop %v2478
  %v2511 = vtanh.bf16.pop %v2479
  %v2512 = vtanh.bf16.pop %v2480
  %v2513 = vtanh.bf16.pop %v2481
  %v2514 = vtanh.bf16.pop %v2482
  %v2515 = vtanh.bf16.pop %v2483
  %v2516 = vtanh.bf16.pop %v2484
  %v2517 = vtanh.bf16.pop %v2485
  %v2518 = vtanh.bf16.pop %v2486
  %v2519 = vtanh.bf16.pop %v2487
  %v2520 = vtanh.bf16.pop %v2488
  %v2521 = vtanh.bf16.pop %v2489
  %v2522 = vtanh.bf16.pop %v2490
  %v2523 = vtanh.bf16.pop %v2491
  %v2524 = vtanh.bf16.pop %v2492
  %v2525 = vtanh.bf16.pop %v2493
  %v2526 = vtanh.bf16.pop %v2494
  %v2527 = vtanh.bf16.pop %v2495
  %v2528 = vtanh.bf16.pop %v2496
  %v2529 = vtanh.bf16.pop %v2497
  %v2530 = vtanh.bf16.pop %v2498
  %v2531 = vtanh.bf16.pop %v2499
  %v2532 = vadd.bf16 %v2500, 1065369472
  %v2533 = vadd.bf16 %v2501, 1065369472
  %v2534 = vadd.bf16 %v2502, 1065369472
  %v2535 = vadd.bf16 %v2503, 1065369472
  %v2536 = vadd.bf16 %v2504, 1065369472
  %v2537 = vadd.bf16 %v2505, 1065369472
  %v2538 = vadd.bf16 %v2506, 1065369472
  %v2539 = vadd.bf16 %v2507, 1065369472
  %v2540 = vadd.bf16 %v2508, 1065369472
  %v2541 = vadd.bf16 %v2509, 1065369472
  %v2542 = vadd.bf16 %v2510, 1065369472
  %v2543 = vadd.bf16 %v2511, 1065369472
  %v2544 = vadd.bf16 %v2512, 1065369472
  %v2545 = vadd.bf16 %v2513, 1065369472
  %v2546 = vadd.bf16 %v2514, 1065369472
  %v2547 = vadd.bf16 %v2515, 1065369472
  %v2548 = vadd.bf16 %v2516, 1065369472
  %v2549 = vadd.bf16 %v2517, 1065369472
  %v2550 = vadd.bf16 %v2518, 1065369472
  %v2551 = vadd.bf16 %v2519, 1065369472
  %v2552 = vadd.bf16 %v2520, 1065369472
  %v2553 = vadd.bf16 %v2521, 1065369472
  %v2554 = vadd.bf16 %v2522, 1065369472
  %v2555 = vadd.bf16 %v2523, 1065369472
  %v2556 = vadd.bf16 %v2524, 1065369472
  %v2557 = vadd.bf16 %v2525, 1065369472
  %v2558 = vadd.bf16 %v2526, 1065369472
  %v2559 = vadd.bf16 %v2527, 1065369472
  %v2560 = vadd.bf16 %v2528, 1065369472
  %v2561 = vadd.bf16 %v2529, 1065369472
  %v2562 = vadd.bf16 %v2530, 1065369472
  %v2563 = vadd.bf16 %v2531, 1065369472
  %v2564 = vmul.bf16 %v2308, %v2532
  %v2565 = vmul.bf16 %v2309, %v2533
  %v2566 = vmul.bf16 %v2310, %v2534
  %v2567 = vmul.bf16 %v2311, %v2535
  %v2568 = vmul.bf16 %v2312, %v2536
  %v2569 = vmul.bf16 %v2313, %v2537
  %v2570 = vmul.bf16 %v2314, %v2538
  %v2571 = vmul.bf16 %v2315, %v2539
  %v2572 = vmul.bf16 %v2316, %v2540
  %v2573 = vmul.bf16 %v2317, %v2541
  %v2574 = vmul.bf16 %v2318, %v2542
  %v2575 = vmul.bf16 %v2319, %v2543
  %v2576 = vmul.bf16 %v2320, %v2544
  %v2577 = vmul.bf16 %v2321, %v2545
  %v2578 = vmul.bf16 %v2322, %v2546
  %v2579 = vmul.bf16 %v2323, %v2547
  %v2580 = vmul.bf16 %v2324, %v2548
  %v2581 = vmul.bf16 %v2325, %v2549
  %v2582 = vmul.bf16 %v2326, %v2550
  %v2583 = vmul.bf16 %v2327, %v2551
  %v2584 = vmul.bf16 %v2328, %v2552
  %v2585 = vmul.bf16 %v2329, %v2553
  %v2586 = vmul.bf16 %v2330, %v2554
  %v2587 = vmul.bf16 %v2331, %v2555
  %v2588 = vmul.bf16 %v2332, %v2556
  %v2589 = vmul.bf16 %v2333, %v2557
  %v2590 = vmul.bf16 %v2334, %v2558
  %v2591 = vmul.bf16 %v2335, %v2559
  %v2592 = vmul.bf16 %v2336, %v2560
  %v2593 = vmul.bf16 %v2337, %v2561
  %v2594 = vmul.bf16 %v2338, %v2562
  %v2595 = vmul.bf16 %v2339, %v2563
  %v2596 = vmul.bf16 %v2564, %v1345
  %v2597 = vmul.bf16 %v2565, %v1352
  %v2598 = vmul.bf16 %v2566, %v1359
  %v2599 = vmul.bf16 %v2567, %v1366
  %v2600 = vmul.bf16 %v2568, %v1373
  %v2601 = vmul.bf16 %v2569, %v1380
  %v2602 = vmul.bf16 %v2570, %v1387
  %v2603 = vmul.bf16 %v2571, %v1394
  %v2604 = vmul.bf16 %v2572, %v1401
  %v2605 = vmul.bf16 %v2573, %v1408
  %v2606 = vmul.bf16 %v2574, %v1415
  %v2607 = vmul.bf16 %v2575, %v1422
  %v2608 = vmul.bf16 %v2576, %v1429
  %v2609 = vmul.bf16 %v2577, %v1436
  %v2610 = vmul.bf16 %v2578, %v1443
  %v2611 = vmul.bf16 %v2579, %v1450
  %v2612 = vmul.bf16 %v2580, %v1345
  %v2613 = vmul.bf16 %v2581, %v1352
  %v2614 = vmul.bf16 %v2582, %v1359
  %v2615 = vmul.bf16 %v2583, %v1366
  %v2616 = vmul.bf16 %v2584, %v1373
  %v2617 = vmul.bf16 %v2585, %v1380
  %v2618 = vmul.bf16 %v2586, %v1387
  %v2619 = vmul.bf16 %v2587, %v1394
  %v2620 = vmul.bf16 %v2588, %v1401
  %v2621 = vmul.bf16 %v2589, %v1408
  %v2622 = vmul.bf16 %v2590, %v1415
  %v2623 = vmul.bf16 %v2591, %v1422
  %v2624 = vmul.bf16 %v2592, %v1429
  %v2625 = vmul.bf16 %v2593, %v1436
  %v2626 = vmul.bf16 %v2594, %v1443
  %v2627 = vmul.bf16 %v2595, %v1450
  %v2628 = vld [vmem:[%s3] sm:$0xf]
  %v2629 = vld [vmem:[%s3 + $0x4] sm:$0xf]
  %v2630 = vld [vmem:[%s3 + $0x8] sm:$0xf]
  %v2631 = vld [vmem:[%s3 + $0xc] sm:$0xf]
  %v2636 = vunpack.c.l.b16 %v2628
  %v2637 = vunpack.c.l.b16 %v2629
  %v2638 = vunpack.c.l.b16 %v2630
  %v2639 = vunpack.c.l.b16 %v2631
  %v2640 = vpack.c.b16 %v2637, %v2636
  %v2641 = vpack.c.b16 %v2639, %v2638
  %v2643 = vsel %vm1497, %v2640, 0
  %v2646 = vsel %vm1497, %v2641, 0
  %2648 = vmatprep.subr.bf16.mxu0 0
  %2649 = vmatpush1.bf16.msra.mxu0 0
  %2650 = vmatprep.subr.bf16.mxu0 0
  %2651 = vmatpush1.bf16.msra.mxu0 0
  %2652 = vmatprep.subr.bf16.mxu0 0
  %2653 = vmatpush1.bf16.msra.mxu0 0
  %2654 = vmatprep.subr.bf16.mxu0 0
  %2655 = vmatpush1.bf16.msra.mxu0 0
  %2656 = vmatprep.subr.bf16.mxu0 0
  %2657 = vmatpush1.bf16.msra.mxu0 0
  %2658 = vmatprep.subr.bf16.mxu0 0
  %2659 = vmatpush1.bf16.msra.mxu0 0
  %2660 = vmatprep.subr.bf16.mxu0 %v2613
  %2661 = vmatpush1.bf16.msra.mxu0 %v2612
  %2662 = vmatprep.subr.bf16.mxu0 %v2597
  %2663 = vmatpush1.bf16.msra.mxu0 %v2596
  %2664 = vmatprep.subr.bf16.mxu0 0
  %2665 = vmatpush2.bf16.msra.mxu0 0
  %2666 = vmatprep.subr.bf16.mxu0 0
  %2667 = vmatpush2.bf16.msra.mxu0 0
  %2668 = vmatprep.subr.bf16.mxu0 0
  %2669 = vmatpush2.bf16.msra.mxu0 0
  %2670 = vmatprep.subr.bf16.mxu0 0
  %2671 = vmatpush2.bf16.msra.mxu0 0
  %2672 = vmatprep.subr.bf16.mxu0 0
  %2673 = vmatpush2.bf16.msra.mxu0 0
  %2674 = vmatprep.subr.bf16.mxu0 0
  %2675 = vmatpush2.bf16.msra.mxu0 0
  %2676 = vmatprep.subr.bf16.mxu0 0
  %2677 = vmatpush2.bf16.msra.mxu0 0
  %2678 = vmatprep.subr.bf16.mxu0 0
  %2679 = vmatpush2.bf16.msra.mxu0 0
  %2680 = vmatprep.mubr.bf16.mxu0 0
  %2681 = vmatmul.mubr.bf16.gmra.mxu0 %v2643
  %v2682 = vpop.f32.mrf.mxu0
  %v2683 = vadd.f32 0.0, %v2682
  %v2684 = vpop.f32.mrf.mxu0
  %v2685 = vadd.f32 0.0, %v2684
  %v2686 = vpop.f32.mrf.mxu0
  %v2687 = vadd.f32 0.0, %v2686
  %v2688 = vpop.f32.mrf.mxu0
  %v2689 = vadd.f32 0.0, %v2688
  %2690 = vmatprep.mubr.bf16.mxu0 0
  %2691 = vmatmul.mubr.bf16.gmra.mxu0 %v2646
  %v2692 = vpop.f32.mrf.mxu0
  %v2693 = vadd.f32 0.0, %v2692
  %v2694 = vpop.f32.mrf.mxu0
  %v2695 = vadd.f32 0.0, %v2694
  %v2696 = vpop.f32.mrf.mxu0
  %v2697 = vadd.f32 0.0, %v2696
  %v2698 = vpop.f32.mrf.mxu0
  %v2699 = vadd.f32 0.0, %v2698
  %2700 = vdwg.mxu0
  %2701 = vmatprep.subr.bf16.mxu0 0
  %2702 = vmatpush1.bf16.msra.mxu0 0
  %2703 = vmatprep.subr.bf16.mxu0 0
  %2704 = vmatpush1.bf16.msra.mxu0 0
  %2705 = vmatprep.subr.bf16.mxu0 0
  %2706 = vmatpush1.bf16.msra.mxu0 0
  %2707 = vmatprep.subr.bf16.mxu0 0
  %2708 = vmatpush1.bf16.msra.mxu0 0
  %2709 = vmatprep.subr.bf16.mxu0 0
  %2710 = vmatpush1.bf16.msra.mxu0 0
  %2711 = vmatprep.subr.bf16.mxu0 0
  %2712 = vmatpush1.bf16.msra.mxu0 0
  %2713 = vmatprep.subr.bf16.mxu0 %v2615
  %2714 = vmatpush1.bf16.msra.mxu0 %v2614
  %2715 = vmatprep.subr.bf16.mxu0 %v2599
  %2716 = vmatpush1.bf16.msra.mxu0 %v2598
  %2717 = vmatprep.subr.bf16.mxu0 0
  %2718 = vmatpush2.bf16.msra.mxu0 0
  %2719 = vmatprep.subr.bf16.mxu0 0
  %2720 = vmatpush2.bf16.msra.mxu0 0
  %2721 = vmatprep.subr.bf16.mxu0 0
  %2722 = vmatpush2.bf16.msra.mxu0 0
  %2723 = vmatprep.subr.bf16.mxu0 0
  %2724 = vmatpush2.bf16.msra.mxu0 0
  %2725 = vmatprep.subr.bf16.mxu0 0
  %2726 = vmatpush2.bf16.msra.mxu0 0
  %2727 = vmatprep.subr.bf16.mxu0 0
  %2728 = vmatpush2.bf16.msra.mxu0 0
  %2729 = vmatprep.subr.bf16.mxu0 0
  %2730 = vmatpush2.bf16.msra.mxu0 0
  %2731 = vmatprep.subr.bf16.mxu0 0
  %2732 = vmatpush2.bf16.msra.mxu0 0
  %2733 = vmatprep.mubr.bf16.mxu0 0
  %2734 = vmatmul.mubr.bf16.gmra.mxu0 %v2643
  %v2735 = vpop.f32.mrf.mxu0
  %v2736 = vadd.f32 0.0, %v2735
  %v2737 = vpop.f32.mrf.mxu0
  %v2738 = vadd.f32 0.0, %v2737
  %v2739 = vpop.f32.mrf.mxu0
  %v2740 = vadd.f32 0.0, %v2739
  %v2741 = vpop.f32.mrf.mxu0
  %v2742 = vadd.f32 0.0, %v2741
  %2743 = vmatprep.mubr.bf16.mxu0 0
  %2744 = vmatmul.mubr.bf16.gmra.mxu0 %v2646
  %v2745 = vpop.f32.mrf.mxu0
  %v2746 = vadd.f32 0.0, %v2745
  %v2747 = vpop.f32.mrf.mxu0
  %v2748 = vadd.f32 0.0, %v2747
  %v2749 = vpop.f32.mrf.mxu0
  %v2750 = vadd.f32 0.0, %v2749
  %v2751 = vpop.f32.mrf.mxu0
  %v2752 = vadd.f32 0.0, %v2751
  %2753 = vdwg.mxu0
  %2754 = vmatprep.subr.bf16.mxu0 0
  %2755 = vmatpush1.bf16.msra.mxu0 0
  %2756 = vmatprep.subr.bf16.mxu0 0
  %2757 = vmatpush1.bf16.msra.mxu0 0
  %2758 = vmatprep.subr.bf16.mxu0 0
  %2759 = vmatpush1.bf16.msra.mxu0 0
  %2760 = vmatprep.subr.bf16.mxu0 0
  %2761 = vmatpush1.bf16.msra.mxu0 0
  %2762 = vmatprep.subr.bf16.mxu0 0
  %2763 = vmatpush1.bf16.msra.mxu0 0
  %2764 = vmatprep.subr.bf16.mxu0 0
  %2765 = vmatpush1.bf16.msra.mxu0 0
  %2766 = vmatprep.subr.bf16.mxu0 %v2617
  %2767 = vmatpush1.bf16.msra.mxu0 %v2616
  %2768 = vmatprep.subr.bf16.mxu0 %v2601
  %2769 = vmatpush1.bf16.msra.mxu0 %v2600
  %2770 = vmatprep.subr.bf16.mxu0 0
  %2771 = vmatpush2.bf16.msra.mxu0 0
  %2772 = vmatprep.subr.bf16.mxu0 0
  %2773 = vmatpush2.bf16.msra.mxu0 0
  %2774 = vmatprep.subr.bf16.mxu0 0
  %2775 = vmatpush2.bf16.msra.mxu0 0
  %2776 = vmatprep.subr.bf16.mxu0 0
  %2777 = vmatpush2.bf16.msra.mxu0 0
  %2778 = vmatprep.subr.bf16.mxu0 0
  %2779 = vmatpush2.bf16.msra.mxu0 0
  %2780 = vmatprep.subr.bf16.mxu0 0
  %2781 = vmatpush2.bf16.msra.mxu0 0
  %2782 = vmatprep.subr.bf16.mxu0 0
  %2783 = vmatpush2.bf16.msra.mxu0 0
  %2784 = vmatprep.subr.bf16.mxu0 0
  %2785 = vmatpush2.bf16.msra.mxu0 0
  %2786 = vmatprep.mubr.bf16.mxu0 0
  %2787 = vmatmul.mubr.bf16.gmra.mxu0 %v2643
  %v2788 = vpop.f32.mrf.mxu0
  %v2789 = vadd.f32 0.0, %v2788
  %v2790 = vpop.f32.mrf.mxu0
  %v2791 = vadd.f32 0.0, %v2790
  %v2792 = vpop.f32.mrf.mxu0
  %v2793 = vadd.f32 0.0, %v2792
  %v2794 = vpop.f32.mrf.mxu0
  %v2795 = vadd.f32 0.0, %v2794
  %2796 = vmatprep.mubr.bf16.mxu0 0
  %2797 = vmatmul.mubr.bf16.gmra.mxu0 %v2646
  %v2798 = vpop.f32.mrf.mxu0
  %v2799 = vadd.f32 0.0, %v2798
  %v2800 = vpop.f32.mrf.mxu0
  %v2801 = vadd.f32 0.0, %v2800
  %v2802 = vpop.f32.mrf.mxu0
  %v2803 = vadd.f32 0.0, %v2802
  %v2804 = vpop.f32.mrf.mxu0
  %v2805 = vadd.f32 0.0, %v2804
  %2806 = vdwg.mxu0
  %2807 = vmatprep.subr.bf16.mxu0 0
  %2808 = vmatpush1.bf16.msra.mxu0 0
  %2809 = vmatprep.subr.bf16.mxu0 0
  %2810 = vmatpush1.bf16.msra.mxu0 0
  %2811 = vmatprep.subr.bf16.mxu0 0
  %2812 = vmatpush1.bf16.msra.mxu0 0
  %2813 = vmatprep.subr.bf16.mxu0 0
  %2814 = vmatpush1.bf16.msra.mxu0 0
  %2815 = vmatprep.subr.bf16.mxu0 0
  %2816 = vmatpush1.bf16.msra.mxu0 0
  %2817 = vmatprep.subr.bf16.mxu0 0
  %2818 = vmatpush1.bf16.msra.mxu0 0
  %2819 = vmatprep.subr.bf16.mxu0 %v2619
  %2820 = vmatpush1.bf16.msra.mxu0 %v2618
  %2821 = vmatprep.subr.bf16.mxu0 %v2603
  %2822 = vmatpush1.bf16.msra.mxu0 %v2602
  %2823 = vmatprep.subr.bf16.mxu0 0
  %2824 = vmatpush2.bf16.msra.mxu0 0
  %2825 = vmatprep.subr.bf16.mxu0 0
  %2826 = vmatpush2.bf16.msra.mxu0 0
  %2827 = vmatprep.subr.bf16.mxu0 0
  %2828 = vmatpush2.bf16.msra.mxu0 0
  %2829 = vmatprep.subr.bf16.mxu0 0
  %2830 = vmatpush2.bf16.msra.mxu0 0
  %2831 = vmatprep.subr.bf16.mxu0 0
  %2832 = vmatpush2.bf16.msra.mxu0 0
  %2833 = vmatprep.subr.bf16.mxu0 0
  %2834 = vmatpush2.bf16.msra.mxu0 0
  %2835 = vmatprep.subr.bf16.mxu0 0
  %2836 = vmatpush2.bf16.msra.mxu0 0
  %2837 = vmatprep.subr.bf16.mxu0 0
  %2838 = vmatpush2.bf16.msra.mxu0 0
  %2839 = vmatprep.mubr.bf16.mxu0 0
  %2840 = vmatmul.mubr.bf16.gmra.mxu0 %v2643
  %v2841 = vpop.f32.mrf.mxu0
  %v2842 = vadd.f32 0.0, %v2841
  %v2843 = vpop.f32.mrf.mxu0
  %v2844 = vadd.f32 0.0, %v2843
  %v2845 = vpop.f32.mrf.mxu0
  %v2846 = vadd.f32 0.0, %v2845
  %v2847 = vpop.f32.mrf.mxu0
  %v2848 = vadd.f32 0.0, %v2847
  %2849 = vmatprep.mubr.bf16.mxu0 0
  %2850 = vmatmul.mubr.bf16.gmra.mxu0 %v2646
  %v2851 = vpop.f32.mrf.mxu0
  %v2852 = vadd.f32 0.0, %v2851
  %v2853 = vpop.f32.mrf.mxu0
  %v2854 = vadd.f32 0.0, %v2853
  %v2855 = vpop.f32.mrf.mxu0
  %v2856 = vadd.f32 0.0, %v2855
  %v2857 = vpop.f32.mrf.mxu0
  %v2858 = vadd.f32 0.0, %v2857
  %2859 = vdwg.mxu0
  %2860 = vmatprep.subr.bf16.mxu0 0
  %2861 = vmatpush1.bf16.msra.mxu0 0
  %2862 = vmatprep.subr.bf16.mxu0 0
  %2863 = vmatpush1.bf16.msra.mxu0 0
  %2864 = vmatprep.subr.bf16.mxu0 0
  %2865 = vmatpush1.bf16.msra.mxu0 0
  %2866 = vmatprep.subr.bf16.mxu0 0
  %2867 = vmatpush1.bf16.msra.mxu0 0
  %2868 = vmatprep.subr.bf16.mxu0 0
  %2869 = vmatpush1.bf16.msra.mxu0 0
  %2870 = vmatprep.subr.bf16.mxu0 0
  %2871 = vmatpush1.bf16.msra.mxu0 0
  %2872 = vmatprep.subr.bf16.mxu0 %v2621
  %2873 = vmatpush1.bf16.msra.mxu0 %v2620
  %2874 = vmatprep.subr.bf16.mxu0 %v2605
  %2875 = vmatpush1.bf16.msra.mxu0 %v2604
  %2876 = vmatprep.subr.bf16.mxu0 0
  %2877 = vmatpush2.bf16.msra.mxu0 0
  %2878 = vmatprep.subr.bf16.mxu0 0
  %2879 = vmatpush2.bf16.msra.mxu0 0
  %2880 = vmatprep.subr.bf16.mxu0 0
  %2881 = vmatpush2.bf16.msra.mxu0 0
  %2882 = vmatprep.subr.bf16.mxu0 0
  %2883 = vmatpush2.bf16.msra.mxu0 0
  %2884 = vmatprep.subr.bf16.mxu0 0
  %2885 = vmatpush2.bf16.msra.mxu0 0
  %2886 = vmatprep.subr.bf16.mxu0 0
  %2887 = vmatpush2.bf16.msra.mxu0 0
  %2888 = vmatprep.subr.bf16.mxu0 0
  %2889 = vmatpush2.bf16.msra.mxu0 0
  %2890 = vmatprep.subr.bf16.mxu0 0
  %2891 = vmatpush2.bf16.msra.mxu0 0
  %2892 = vmatprep.mubr.bf16.mxu0 0
  %2893 = vmatmul.mubr.bf16.gmra.mxu0 %v2643
  %v2894 = vpop.f32.mrf.mxu0
  %v2895 = vadd.f32 0.0, %v2894
  %v2896 = vpop.f32.mrf.mxu0
  %v2897 = vadd.f32 0.0, %v2896
  %v2898 = vpop.f32.mrf.mxu0
  %v2899 = vadd.f32 0.0, %v2898
  %v2900 = vpop.f32.mrf.mxu0
  %v2901 = vadd.f32 0.0, %v2900
  %2902 = vmatprep.mubr.bf16.mxu0 0
  %2903 = vmatmul.mubr.bf16.gmra.mxu0 %v2646
  %v2904 = vpop.f32.mrf.mxu0
  %v2905 = vadd.f32 0.0, %v2904
  %v2906 = vpop.f32.mrf.mxu0
  %v2907 = vadd.f32 0.0, %v2906
  %v2908 = vpop.f32.mrf.mxu0
  %v2909 = vadd.f32 0.0, %v2908
  %v2910 = vpop.f32.mrf.mxu0
  %v2911 = vadd.f32 0.0, %v2910
  %2912 = vdwg.mxu0
  %2913 = vmatprep.subr.bf16.mxu0 0
  %2914 = vmatpush1.bf16.msra.mxu0 0
  %2915 = vmatprep.subr.bf16.mxu0 0
  %2916 = vmatpush1.bf16.msra.mxu0 0
  %2917 = vmatprep.subr.bf16.mxu0 0
  %2918 = vmatpush1.bf16.msra.mxu0 0
  %2919 = vmatprep.subr.bf16.mxu0 0
  %2920 = vmatpush1.bf16.msra.mxu0 0
  %2921 = vmatprep.subr.bf16.mxu0 0
  %2922 = vmatpush1.bf16.msra.mxu0 0
  %2923 = vmatprep.subr.bf16.mxu0 0
  %2924 = vmatpush1.bf16.msra.mxu0 0
  %2925 = vmatprep.subr.bf16.mxu0 %v2623
  %2926 = vmatpush1.bf16.msra.mxu0 %v2622
  %2927 = vmatprep.subr.bf16.mxu0 %v2607
  %2928 = vmatpush1.bf16.msra.mxu0 %v2606
  %2929 = vmatprep.subr.bf16.mxu0 0
  %2930 = vmatpush2.bf16.msra.mxu0 0
  %2931 = vmatprep.subr.bf16.mxu0 0
  %2932 = vmatpush2.bf16.msra.mxu0 0
  %2933 = vmatprep.subr.bf16.mxu0 0
  %2934 = vmatpush2.bf16.msra.mxu0 0
  %2935 = vmatprep.subr.bf16.mxu0 0
  %2936 = vmatpush2.bf16.msra.mxu0 0
  %2937 = vmatprep.subr.bf16.mxu0 0
  %2938 = vmatpush2.bf16.msra.mxu0 0
  %2939 = vmatprep.subr.bf16.mxu0 0
  %2940 = vmatpush2.bf16.msra.mxu0 0
  %2941 = vmatprep.subr.bf16.mxu0 0
  %2942 = vmatpush2.bf16.msra.mxu0 0
  %2943 = vmatprep.subr.bf16.mxu0 0
  %2944 = vmatpush2.bf16.msra.mxu0 0
  %2945 = vmatprep.mubr.bf16.mxu0 0
  %2946 = vmatmul.mubr.bf16.gmra.mxu0 %v2643
  %v2947 = vpop.f32.mrf.mxu0
  %v2948 = vadd.f32 0.0, %v2947
  %v2949 = vpop.f32.mrf.mxu0
  %v2950 = vadd.f32 0.0, %v2949
  %v2951 = vpop.f32.mrf.mxu0
  %v2952 = vadd.f32 0.0, %v2951
  %v2953 = vpop.f32.mrf.mxu0
  %v2954 = vadd.f32 0.0, %v2953
  %2955 = vmatprep.mubr.bf16.mxu0 0
  %2956 = vmatmul.mubr.bf16.gmra.mxu0 %v2646
  %v2957 = vpop.f32.mrf.mxu0
  %v2958 = vadd.f32 0.0, %v2957
  %v2959 = vpop.f32.mrf.mxu0
  %v2960 = vadd.f32 0.0, %v2959
  %v2961 = vpop.f32.mrf.mxu0
  %v2962 = vadd.f32 0.0, %v2961
  %v2963 = vpop.f32.mrf.mxu0
  %v2964 = vadd.f32 0.0, %v2963
  %2965 = vdwg.mxu0
  %2966 = vmatprep.subr.bf16.mxu0 0
  %2967 = vmatpush1.bf16.msra.mxu0 0
  %2968 = vmatprep.subr.bf16.mxu0 0
  %2969 = vmatpush1.bf16.msra.mxu0 0
  %2970 = vmatprep.subr.bf16.mxu0 0
  %2971 = vmatpush1.bf16.msra.mxu0 0
  %2972 = vmatprep.subr.bf16.mxu0 0
  %2973 = vmatpush1.bf16.msra.mxu0 0
  %2974 = vmatprep.subr.bf16.mxu0 0
  %2975 = vmatpush1.bf16.msra.mxu0 0
  %2976 = vmatprep.subr.bf16.mxu0 0
  %2977 = vmatpush1.bf16.msra.mxu0 0
  %2978 = vmatprep.subr.bf16.mxu0 %v2625
  %2979 = vmatpush1.bf16.msra.mxu0 %v2624
  %2980 = vmatprep.subr.bf16.mxu0 %v2609
  %2981 = vmatpush1.bf16.msra.mxu0 %v2608
  %2982 = vmatprep.subr.bf16.mxu0 0
  %2983 = vmatpush2.bf16.msra.mxu0 0
  %2984 = vmatprep.subr.bf16.mxu0 0
  %2985 = vmatpush2.bf16.msra.mxu0 0
  %2986 = vmatprep.subr.bf16.mxu0 0
  %2987 = vmatpush2.bf16.msra.mxu0 0
  %2988 = vmatprep.subr.bf16.mxu0 0
  %2989 = vmatpush2.bf16.msra.mxu0 0
  %2990 = vmatprep.subr.bf16.mxu0 0
  %2991 = vmatpush2.bf16.msra.mxu0 0
  %2992 = vmatprep.subr.bf16.mxu0 0
  %2993 = vmatpush2.bf16.msra.mxu0 0
  %2994 = vmatprep.subr.bf16.mxu0 0
  %2995 = vmatpush2.bf16.msra.mxu0 0
  %2996 = vmatprep.subr.bf16.mxu0 0
  %2997 = vmatpush2.bf16.msra.mxu0 0
  %2998 = vmatprep.mubr.bf16.mxu0 0
  %2999 = vmatmul.mubr.bf16.gmra.mxu0 %v2643
  %v3000 = vpop.f32.mrf.mxu0
  %v3001 = vadd.f32 0.0, %v3000
  %v3002 = vpop.f32.mrf.mxu0
  %v3003 = vadd.f32 0.0, %v3002
  %v3004 = vpop.f32.mrf.mxu0
  %v3005 = vadd.f32 0.0, %v3004
  %v3006 = vpop.f32.mrf.mxu0
  %v3007 = vadd.f32 0.0, %v3006
  %3008 = vmatprep.mubr.bf16.mxu0 0
  %3009 = vmatmul.mubr.bf16.gmra.mxu0 %v2646
  %v3010 = vpop.f32.mrf.mxu0
  %v3011 = vadd.f32 0.0, %v3010
  %v3012 = vpop.f32.mrf.mxu0
  %v3013 = vadd.f32 0.0, %v3012
  %v3014 = vpop.f32.mrf.mxu0
  %v3015 = vadd.f32 0.0, %v3014
  %v3016 = vpop.f32.mrf.mxu0
  %v3017 = vadd.f32 0.0, %v3016
  %3018 = vdwg.mxu0
  %3019 = vmatprep.subr.bf16.mxu0 0
  %3020 = vmatpush1.bf16.msra.mxu0 0
  %3021 = vmatprep.subr.bf16.mxu0 0
  %3022 = vmatpush1.bf16.msra.mxu0 0
  %3023 = vmatprep.subr.bf16.mxu0 0
  %3024 = vmatpush1.bf16.msra.mxu0 0
  %3025 = vmatprep.subr.bf16.mxu0 0
  %3026 = vmatpush1.bf16.msra.mxu0 0
  %3027 = vmatprep.subr.bf16.mxu0 0
  %3028 = vmatpush1.bf16.msra.mxu0 0
  %3029 = vmatprep.subr.bf16.mxu0 0
  %3030 = vmatpush1.bf16.msra.mxu0 0
  %3031 = vmatprep.subr.bf16.mxu0 %v2627
  %3032 = vmatpush1.bf16.msra.mxu0 %v2626
  %3033 = vmatprep.subr.bf16.mxu0 %v2611
  %3034 = vmatpush1.bf16.msra.mxu0 %v2610
  %3035 = vmatprep.subr.bf16.mxu0 0
  %3036 = vmatpush2.bf16.msra.mxu0 0
  %3037 = vmatprep.subr.bf16.mxu0 0
  %3038 = vmatpush2.bf16.msra.mxu0 0
  %3039 = vmatprep.subr.bf16.mxu0 0
  %3040 = vmatpush2.bf16.msra.mxu0 0
  %3041 = vmatprep.subr.bf16.mxu0 0
  %3042 = vmatpush2.bf16.msra.mxu0 0
  %3043 = vmatprep.subr.bf16.mxu0 0
  %3044 = vmatpush2.bf16.msra.mxu0 0
  %3045 = vmatprep.subr.bf16.mxu0 0
  %3046 = vmatpush2.bf16.msra.mxu0 0
  %3047 = vmatprep.subr.bf16.mxu0 0
  %3048 = vmatpush2.bf16.msra.mxu0 0
  %3049 = vmatprep.subr.bf16.mxu0 0
  %3050 = vmatpush2.bf16.msra.mxu0 0
  %3051 = vmatprep.mubr.bf16.mxu0 0
  %3052 = vmatmul.mubr.bf16.gmra.mxu0 %v2643
  %v3053 = vpop.f32.mrf.mxu0
  %v3054 = vadd.f32 0.0, %v3053
  %v3055 = vpop.f32.mrf.mxu0
  %v3056 = vadd.f32 0.0, %v3055
  %v3057 = vpop.f32.mrf.mxu0
  %v3058 = vadd.f32 0.0, %v3057
  %v3059 = vpop.f32.mrf.mxu0
  %v3060 = vadd.f32 0.0, %v3059
  %3061 = vmatprep.mubr.bf16.mxu0 0
  %3062 = vmatmul.mubr.bf16.gmra.mxu0 %v2646
  %v3063 = vpop.f32.mrf.mxu0
  %v3064 = vadd.f32 0.0, %v3063
  %v3065 = vpop.f32.mrf.mxu0
  %v3066 = vadd.f32 0.0, %v3065
  %v3067 = vpop.f32.mrf.mxu0
  %v3068 = vadd.f32 0.0, %v3067
  %v3069 = vpop.f32.mrf.mxu0
  %v3070 = vadd.f32 0.0, %v3069
  %3071 = vdwg.mxu0
  %v3072 = vmul.f32 %v2683, %v2683
  %v3073 = vmul.f32 %v2685, %v2685
  %v3074 = vmul.f32 %v2736, %v2736
  %v3075 = vmul.f32 %v2738, %v2738
  %v3076 = vmul.f32 %v2789, %v2789
  %v3077 = vmul.f32 %v2791, %v2791
  %v3078 = vmul.f32 %v2842, %v2842
  %v3079 = vmul.f32 %v2844, %v2844
  %v3080 = vmul.f32 %v2895, %v2895
  %v3081 = vmul.f32 %v2897, %v2897
  %v3082 = vmul.f32 %v2948, %v2948
  %v3083 = vmul.f32 %v2950, %v2950
  %v3084 = vmul.f32 %v3001, %v3001
  %v3085 = vmul.f32 %v3003, %v3003
  %v3086 = vmul.f32 %v3054, %v3054
  %v3087 = vmul.f32 %v3056, %v3056
  %v3088 = vmul.f32 %v2687, %v2687
  %v3089 = vmul.f32 %v2689, %v2689
  %v3090 = vmul.f32 %v2740, %v2740
  %v3091 = vmul.f32 %v2742, %v2742
  %v3092 = vmul.f32 %v2793, %v2793
  %v3093 = vmul.f32 %v2795, %v2795
  %v3094 = vmul.f32 %v2846, %v2846
  %v3095 = vmul.f32 %v2848, %v2848
  %v3096 = vmul.f32 %v2899, %v2899
  %v3097 = vmul.f32 %v2901, %v2901
  %v3098 = vmul.f32 %v2952, %v2952
  %v3099 = vmul.f32 %v2954, %v2954
  %v3100 = vmul.f32 %v3005, %v3005
  %v3101 = vmul.f32 %v3007, %v3007
  %v3102 = vmul.f32 %v3058, %v3058
  %v3103 = vmul.f32 %v3060, %v3060
  %v3104 = vmul.f32 %v2693, %v2693
  %v3105 = vmul.f32 %v2695, %v2695
  %v3106 = vmul.f32 %v2746, %v2746
  %v3107 = vmul.f32 %v2748, %v2748
  %v3108 = vmul.f32 %v2799, %v2799
  %v3109 = vmul.f32 %v2801, %v2801
  %v3110 = vmul.f32 %v2852, %v2852
  %v3111 = vmul.f32 %v2854, %v2854
  %v3112 = vmul.f32 %v2905, %v2905
  %v3113 = vmul.f32 %v2907, %v2907
  %v3114 = vmul.f32 %v2958, %v2958
  %v3115 = vmul.f32 %v2960, %v2960
  %v3116 = vmul.f32 %v3011, %v3011
  %v3117 = vmul.f32 %v3013, %v3013
  %v3118 = vmul.f32 %v3064, %v3064
  %v3119 = vmul.f32 %v3066, %v3066
  %v3120 = vmul.f32 %v2697, %v2697
  %v3121 = vmul.f32 %v2699, %v2699
  %v3122 = vmul.f32 %v2750, %v2750
  %v3123 = vmul.f32 %v2752, %v2752
  %v3124 = vmul.f32 %v2803, %v2803
  %v3125 = vmul.f32 %v2805, %v2805
  %v3126 = vmul.f32 %v2856, %v2856
  %v3127 = vmul.f32 %v2858, %v2858
  %v3128 = vmul.f32 %v2909, %v2909
  %v3129 = vmul.f32 %v2911, %v2911
  %v3130 = vmul.f32 %v2962, %v2962
  %v3131 = vmul.f32 %v2964, %v2964
  %v3132 = vmul.f32 %v3015, %v3015
  %v3133 = vmul.f32 %v3017, %v3017
  %v3134 = vmul.f32 %v3068, %v3068
  %v3135 = vmul.f32 %v3070, %v3070
  %v3136 = vadd.f32 %v2683, %v2685
  %v3137 = vadd.f32 %v3136, %v2736
  %v3138 = vadd.f32 %v3137, %v2738
  %v3139 = vadd.f32 %v3138, %v2789
  %v3140 = vadd.f32 %v3139, %v2791
  %v3141 = vadd.f32 %v3140, %v2842
  %v3142 = vadd.f32 %v3141, %v2844
  %v3143 = vadd.f32 %v3142, %v2895
  %v3144 = vadd.f32 %v3143, %v2897
  %v3145 = vadd.f32 %v3144, %v2948
  %v3146 = vadd.f32 %v3145, %v2950
  %v3147 = vadd.f32 %v3146, %v3001
  %v3148 = vadd.f32 %v3147, %v3003
  %v3149 = vadd.f32 %v3148, %v3054
  %v3150 = vadd.f32 %v3149, %v3056
  %3151 = vadd.xlane.f32.xlu0 %v3150
  %v3152 = vpop.xlane.xlu0 %3151
  %v3153 = vadd.f32 %v2687, %v2689
  %v3154 = vadd.f32 %v3153, %v2740
  %v3155 = vadd.f32 %v3154, %v2742
  %v3156 = vadd.f32 %v3155, %v2793
  %v3157 = vadd.f32 %v3156, %v2795
  %v3158 = vadd.f32 %v3157, %v2846
  %v3159 = vadd.f32 %v3158, %v2848
  %v3160 = vadd.f32 %v3159, %v2899
  %v3161 = vadd.f32 %v3160, %v2901
  %v3162 = vadd.f32 %v3161, %v2952
  %v3163 = vadd.f32 %v3162, %v2954
  %v3164 = vadd.f32 %v3163, %v3005
  %v3165 = vadd.f32 %v3164, %v3007
  %v3166 = vadd.f32 %v3165, %v3058
  %v3167 = vadd.f32 %v3166, %v3060
  %3168 = vadd.xlane.f32.xlu0 %v3167
  %v3169 = vpop.xlane.xlu0 %3168
  %v3170 = vadd.f32 %v2693, %v2695
  %v3171 = vadd.f32 %v3170, %v2746
  %v3172 = vadd.f32 %v3171, %v2748
  %v3173 = vadd.f32 %v3172, %v2799
  %v3174 = vadd.f32 %v3173, %v2801
  %v3175 = vadd.f32 %v3174, %v2852
  %v3176 = vadd.f32 %v3175, %v2854
  %v3177 = vadd.f32 %v3176, %v2905
  %v3178 = vadd.f32 %v3177, %v2907
  %v3179 = vadd.f32 %v3178, %v2958
  %v3180 = vadd.f32 %v3179, %v2960
  %v3181 = vadd.f32 %v3180, %v3011
  %v3182 = vadd.f32 %v3181, %v3013
  %v3183 = vadd.f32 %v3182, %v3064
  %v3184 = vadd.f32 %v3183, %v3066
  %3185 = vadd.xlane.f32.xlu0 %v3184
  %v3186 = vpop.xlane.xlu0 %3185
  %v3187 = vadd.f32 %v2697, %v2699
  %v3188 = vadd.f32 %v3187, %v2750
  %v3189 = vadd.f32 %v3188, %v2752
  %v3190 = vadd.f32 %v3189, %v2803
  %v3191 = vadd.f32 %v3190, %v2805
  %v3192 = vadd.f32 %v3191, %v2856
  %v3193 = vadd.f32 %v3192, %v2858
  %v3194 = vadd.f32 %v3193, %v2909
  %v3195 = vadd.f32 %v3194, %v2911
  %v3196 = vadd.f32 %v3195, %v2962
  %v3197 = vadd.f32 %v3196, %v2964
  %v3198 = vadd.f32 %v3197, %v3015
  %v3199 = vadd.f32 %v3198, %v3017
  %v3200 = vadd.f32 %v3199, %v3068
  %v3201 = vadd.f32 %v3200, %v3070
  %3202 = vadd.xlane.f32.xlu0 %v3201
  %v3203 = vpop.xlane.xlu0 %3202
  %v3204 = vadd.f32 %v3072, %v3073
  %v3205 = vadd.f32 %v3204, %v3074
  %v3206 = vadd.f32 %v3205, %v3075
  %v3207 = vadd.f32 %v3206, %v3076
  %v3208 = vadd.f32 %v3207, %v3077
  %v3209 = vadd.f32 %v3208, %v3078
  %v3210 = vadd.f32 %v3209, %v3079
  %v3211 = vadd.f32 %v3210, %v3080
  %v3212 = vadd.f32 %v3211, %v3081
  %v3213 = vadd.f32 %v3212, %v3082
  %v3214 = vadd.f32 %v3213, %v3083
  %v3215 = vadd.f32 %v3214, %v3084
  %v3216 = vadd.f32 %v3215, %v3085
  %v3217 = vadd.f32 %v3216, %v3086
  %v3218 = vadd.f32 %v3217, %v3087
  %3219 = vadd.xlane.f32.xlu0 %v3218
  %v3220 = vpop.xlane.xlu0 %3219
  %v3221 = vadd.f32 %v3088, %v3089
  %v3222 = vadd.f32 %v3221, %v3090
  %v3223 = vadd.f32 %v3222, %v3091
  %v3224 = vadd.f32 %v3223, %v3092
  %v3225 = vadd.f32 %v3224, %v3093
  %v3226 = vadd.f32 %v3225, %v3094
  %v3227 = vadd.f32 %v3226, %v3095
  %v3228 = vadd.f32 %v3227, %v3096
  %v3229 = vadd.f32 %v3228, %v3097
  %v3230 = vadd.f32 %v3229, %v3098
  %v3231 = vadd.f32 %v3230, %v3099
  %v3232 = vadd.f32 %v3231, %v3100
  %v3233 = vadd.f32 %v3232, %v3101
  %v3234 = vadd.f32 %v3233, %v3102
  %v3235 = vadd.f32 %v3234, %v3103
  %3236 = vadd.xlane.f32.xlu0 %v3235
  %v3237 = vpop.xlane.xlu0 %3236
  %v3238 = vadd.f32 %v3104, %v3105
  %v3239 = vadd.f32 %v3238, %v3106
  %v3240 = vadd.f32 %v3239, %v3107
  %v3241 = vadd.f32 %v3240, %v3108
  %v3242 = vadd.f32 %v3241, %v3109
  %v3243 = vadd.f32 %v3242, %v3110
  %v3244 = vadd.f32 %v3243, %v3111
  %v3245 = vadd.f32 %v3244, %v3112
  %v3246 = vadd.f32 %v3245, %v3113
  %v3247 = vadd.f32 %v3246, %v3114
  %v3248 = vadd.f32 %v3247, %v3115
  %v3249 = vadd.f32 %v3248, %v3116
  %v3250 = vadd.f32 %v3249, %v3117
  %v3251 = vadd.f32 %v3250, %v3118
  %v3252 = vadd.f32 %v3251, %v3119
  %3253 = vadd.xlane.f32.xlu0 %v3252
  %v3254 = vpop.xlane.xlu0 %3253
  %v3255 = vadd.f32 %v3120, %v3121
  %v3256 = vadd.f32 %v3255, %v3122
  %v3257 = vadd.f32 %v3256, %v3123
  %v3258 = vadd.f32 %v3257, %v3124
  %v3259 = vadd.f32 %v3258, %v3125
  %v3260 = vadd.f32 %v3259, %v3126
  %v3261 = vadd.f32 %v3260, %v3127
  %v3262 = vadd.f32 %v3261, %v3128
  %v3263 = vadd.f32 %v3262, %v3129
  %v3264 = vadd.f32 %v3263, %v3130
  %v3265 = vadd.f32 %v3264, %v3131
  %v3266 = vadd.f32 %v3265, %v3132
  %v3267 = vadd.f32 %v3266, %v3133
  %v3268 = vadd.f32 %v3267, %v3134
  %v3269 = vadd.f32 %v3268, %v3135
  %3270 = vadd.xlane.f32.xlu0 %v3269
  %v3271 = vpop.xlane.xlu0 %3270
  %v3272 = vmul.f32 %v3152, 0.001953125
  %v3273 = vmul.f32 %v3169, 0.001953125
  %v3274 = vmul.f32 %v3186, 0.001953125
  %v3275 = vmul.f32 %v3203, 0.001953125
  %v3276 = vmul.f32 %v3220, 0.001953125
  %v3277 = vmul.f32 %v3237, 0.001953125
  %v3278 = vmul.f32 %v3254, 0.001953125
  %v3279 = vmul.f32 %v3271, 0.001953125
  %v3280 = vmul.f32 %v3272, %v3272
  %v3281 = vmul.f32 %v3273, %v3273
  %v3282 = vmul.f32 %v3274, %v3274
  %v3283 = vmul.f32 %v3275, %v3275
  %v3284 = vsub.f32 %v3276, %v3280
  %v3285 = vsub.f32 %v3277, %v3281
  %v3286 = vsub.f32 %v3278, %v3282
  %v3287 = vsub.f32 %v3279, %v3283
  %v3288 = vmax.f32 %v3284, 0.0
  %v3289 = vmax.f32 %v3285, 0.0
  %v3290 = vmax.f32 %v3286, 0.0
  %v3291 = vmax.f32 %v3287, 0.0
  %v3292 = vadd.f32 %v3288, 1e-05
  %v3293 = vadd.f32 %v3289, 1e-05
  %v3294 = vadd.f32 %v3290, 1e-05
  %v3295 = vadd.f32 %v3291, 1e-05
  %v3296 = vrsqrt.pop %v3292
  %v3297 = vrsqrt.pop %v3293
  %v3298 = vrsqrt.pop %v3294
  %v3299 = vrsqrt.pop %v3295
  %v3300 = vmul.f32 %v2148, %v3296
  %v3301 = vmul.f32 %v2149, %v3297
  %v3302 = vmul.f32 %v2150, %v3298
  %v3303 = vmul.f32 %v2151, %v3299
  %v3304 = vmul.f32 %v3272, %v3300
  %v3305 = vmul.f32 %v3273, %v3301
  %v3306 = vmul.f32 %v3274, %v3302
  %v3307 = vmul.f32 %v3275, %v3303
  %3312 = vrot.lane.b32.xlu0 %v3304, 1
  %v3313 = vpop.permute.xlu0 %3312
  %3314 = vrot.lane.b32.xlu0 %v3305, 1
  %v3315 = vpop.permute.xlu0 %3314
  %3316 = vrot.lane.b32.xlu0 %v3306, 1
  %v3317 = vpop.permute.xlu0 %3316
  %3318 = vrot.lane.b32.xlu0 %v3307, 1
  %v3319 = vpop.permute.xlu0 %3318
  %v3324 = vsub.f32 %v2148, %v3313
  %v3325 = vsub.f32 %v2149, %v3315
  %v3326 = vsub.f32 %v2150, %v3317
  %v3327 = vsub.f32 %v2151, %v3319
  %3329 = vset.pattern.permute.xlu0 4
  %3330 = vperm.xlu0 %3329, %v3300
  %v3331 = vpop.permute.xlu0 %3330
  %3334 = vset.pattern.permute.xlu0 4
  %3335 = vperm.xlu0 %3334, %v3301
  %v3336 = vpop.permute.xlu0 %3335
  %3339 = vset.pattern.permute.xlu0 4
  %3340 = vperm.xlu0 %3339, %v3302
  %v3341 = vpop.permute.xlu0 %3340
  %3344 = vset.pattern.permute.xlu0 4
  %3345 = vperm.xlu0 %3344, %v3303
  %v3346 = vpop.permute.xlu0 %3345
  %v3348 = vmul.f32 %v2683, %v3331
  %v3349 = vmul.f32 %v2685, %v3331
  %v3350 = vmul.f32 %v2736, %v3331
  %v3351 = vmul.f32 %v2738, %v3331
  %v3352 = vmul.f32 %v2789, %v3331
  %v3353 = vmul.f32 %v2791, %v3331
  %v3354 = vmul.f32 %v2842, %v3331
  %v3355 = vmul.f32 %v2844, %v3331
  %v3356 = vmul.f32 %v2895, %v3331
  %v3357 = vmul.f32 %v2897, %v3331
  %v3358 = vmul.f32 %v2948, %v3331
  %v3359 = vmul.f32 %v2950, %v3331
  %v3360 = vmul.f32 %v3001, %v3331
  %v3361 = vmul.f32 %v3003, %v3331
  %v3362 = vmul.f32 %v3054, %v3331
  %v3363 = vmul.f32 %v3056, %v3331
  %v3364 = vmul.f32 %v2687, %v3336
  %v3365 = vmul.f32 %v2689, %v3336
  %v3366 = vmul.f32 %v2740, %v3336
  %v3367 = vmul.f32 %v2742, %v3336
  %v3368 = vmul.f32 %v2793, %v3336
  %v3369 = vmul.f32 %v2795, %v3336
  %v3370 = vmul.f32 %v2846, %v3336
  %v3371 = vmul.f32 %v2848, %v3336
  %v3372 = vmul.f32 %v2899, %v3336
  %v3373 = vmul.f32 %v2901, %v3336
  %v3374 = vmul.f32 %v2952, %v3336
  %v3375 = vmul.f32 %v2954, %v3336
  %v3376 = vmul.f32 %v3005, %v3336
  %v3377 = vmul.f32 %v3007, %v3336
  %v3378 = vmul.f32 %v3058, %v3336
  %v3379 = vmul.f32 %v3060, %v3336
  %v3380 = vmul.f32 %v2693, %v3341
  %v3381 = vmul.f32 %v2695, %v3341
  %v3382 = vmul.f32 %v2746, %v3341
  %v3383 = vmul.f32 %v2748, %v3341
  %v3384 = vmul.f32 %v2799, %v3341
  %v3385 = vmul.f32 %v2801, %v3341
  %v3386 = vmul.f32 %v2852, %v3341
  %v3387 = vmul.f32 %v2854, %v3341
  %v3388 = vmul.f32 %v2905, %v3341
  %v3389 = vmul.f32 %v2907, %v3341
  %v3390 = vmul.f32 %v2958, %v3341
  %v3391 = vmul.f32 %v2960, %v3341
  %v3392 = vmul.f32 %v3011, %v3341
  %v3393 = vmul.f32 %v3013, %v3341
  %v3394 = vmul.f32 %v3064, %v3341
  %v3395 = vmul.f32 %v3066, %v3341
  %v3396 = vmul.f32 %v2697, %v3346
  %v3397 = vmul.f32 %v2699, %v3346
  %v3398 = vmul.f32 %v2750, %v3346
  %v3399 = vmul.f32 %v2752, %v3346
  %v3400 = vmul.f32 %v2803, %v3346
  %v3401 = vmul.f32 %v2805, %v3346
  %v3402 = vmul.f32 %v2856, %v3346
  %v3403 = vmul.f32 %v2858, %v3346
  %v3404 = vmul.f32 %v2909, %v3346
  %v3405 = vmul.f32 %v2911, %v3346
  %v3406 = vmul.f32 %v2962, %v3346
  %v3407 = vmul.f32 %v2964, %v3346
  %v3408 = vmul.f32 %v3015, %v3346
  %v3409 = vmul.f32 %v3017, %v3346
  %v3410 = vmul.f32 %v3068, %v3346
  %v3411 = vmul.f32 %v3070, %v3346
  %3413 = vset.pattern.permute.xlu0 5
  %3414 = vperm.xlu0 %3413, %v3324
  %v3415 = vpop.permute.xlu0 %3414
  %3418 = vset.pattern.permute.xlu0 5
  %3419 = vperm.xlu0 %3418, %v3325
  %v3420 = vpop.permute.xlu0 %3419
  %3423 = vset.pattern.permute.xlu0 5
  %3424 = vperm.xlu0 %3423, %v3326
  %v3425 = vpop.permute.xlu0 %3424
  %3428 = vset.pattern.permute.xlu0 5
  %3429 = vperm.xlu0 %3428, %v3327
  %v3430 = vpop.permute.xlu0 %3429
  %v3432 = vadd.f32 %v3348, %v3415
  %v3433 = vadd.f32 %v3349, %v3415
  %v3434 = vadd.f32 %v3350, %v3415
  %v3435 = vadd.f32 %v3351, %v3415
  %v3436 = vadd.f32 %v3352, %v3415
  %v3437 = vadd.f32 %v3353, %v3415
  %v3438 = vadd.f32 %v3354, %v3415
  %v3439 = vadd.f32 %v3355, %v3415
  %v3440 = vadd.f32 %v3356, %v3415
  %v3441 = vadd.f32 %v3357, %v3415
  %v3442 = vadd.f32 %v3358, %v3415
  %v3443 = vadd.f32 %v3359, %v3415
  %v3444 = vadd.f32 %v3360, %v3415
  %v3445 = vadd.f32 %v3361, %v3415
  %v3446 = vadd.f32 %v3362, %v3415
  %v3447 = vadd.f32 %v3363, %v3415
  %v3448 = vadd.f32 %v3364, %v3420
  %v3449 = vadd.f32 %v3365, %v3420
  %v3450 = vadd.f32 %v3366, %v3420
  %v3451 = vadd.f32 %v3367, %v3420
  %v3452 = vadd.f32 %v3368, %v3420
  %v3453 = vadd.f32 %v3369, %v3420
  %v3454 = vadd.f32 %v3370, %v3420
  %v3455 = vadd.f32 %v3371, %v3420
  %v3456 = vadd.f32 %v3372, %v3420
  %v3457 = vadd.f32 %v3373, %v3420
  %v3458 = vadd.f32 %v3374, %v3420
  %v3459 = vadd.f32 %v3375, %v3420
  %v3460 = vadd.f32 %v3376, %v3420
  %v3461 = vadd.f32 %v3377, %v3420
  %v3462 = vadd.f32 %v3378, %v3420
  %v3463 = vadd.f32 %v3379, %v3420
  %v3464 = vadd.f32 %v3380, %v3425
  %v3465 = vadd.f32 %v3381, %v3425
  %v3466 = vadd.f32 %v3382, %v3425
  %v3467 = vadd.f32 %v3383, %v3425
  %v3468 = vadd.f32 %v3384, %v3425
  %v3469 = vadd.f32 %v3385, %v3425
  %v3470 = vadd.f32 %v3386, %v3425
  %v3471 = vadd.f32 %v3387, %v3425
  %v3472 = vadd.f32 %v3388, %v3425
  %v3473 = vadd.f32 %v3389, %v3425
  %v3474 = vadd.f32 %v3390, %v3425
  %v3475 = vadd.f32 %v3391, %v3425
  %v3476 = vadd.f32 %v3392, %v3425
  %v3477 = vadd.f32 %v3393, %v3425
  %v3478 = vadd.f32 %v3394, %v3425
  %v3479 = vadd.f32 %v3395, %v3425
  %v3480 = vadd.f32 %v3396, %v3430
  %v3481 = vadd.f32 %v3397, %v3430
  %v3482 = vadd.f32 %v3398, %v3430
  %v3483 = vadd.f32 %v3399, %v3430
  %v3484 = vadd.f32 %v3400, %v3430
  %v3485 = vadd.f32 %v3401, %v3430
  %v3486 = vadd.f32 %v3402, %v3430
  %v3487 = vadd.f32 %v3403, %v3430
  %v3488 = vadd.f32 %v3404, %v3430
  %v3489 = vadd.f32 %v3405, %v3430
  %v3490 = vadd.f32 %v3406, %v3430
  %v3491 = vadd.f32 %v3407, %v3430
  %v3492 = vadd.f32 %v3408, %v3430
  %v3493 = vadd.f32 %v3409, %v3430
  %v3494 = vadd.f32 %v3410, %v3430
  %v3495 = vadd.f32 %v3411, %v3430
  %v3496 = vmul.f32 %v3432, 0.5
  %v3497 = vmul.f32 %v3433, 0.5
  %v3498 = vmul.f32 %v3434, 0.5
  %v3499 = vmul.f32 %v3435, 0.5
  %v3500 = vmul.f32 %v3436, 0.5
  %v3501 = vmul.f32 %v3437, 0.5
  %v3502 = vmul.f32 %v3438, 0.5
  %v3503 = vmul.f32 %v3439, 0.5
  %v3504 = vmul.f32 %v3440, 0.5
  %v3505 = vmul.f32 %v3441, 0.5
  %v3506 = vmul.f32 %v3442, 0.5
  %v3507 = vmul.f32 %v3443, 0.5
  %v3508 = vmul.f32 %v3444, 0.5
  %v3509 = vmul.f32 %v3445, 0.5
  %v3510 = vmul.f32 %v3446, 0.5
  %v3511 = vmul.f32 %v3447, 0.5
  %v3512 = vmul.f32 %v3448, 0.5
  %v3513 = vmul.f32 %v3449, 0.5
  %v3514 = vmul.f32 %v3450, 0.5
  %v3515 = vmul.f32 %v3451, 0.5
  %v3516 = vmul.f32 %v3452, 0.5
  %v3517 = vmul.f32 %v3453, 0.5
  %v3518 = vmul.f32 %v3454, 0.5
  %v3519 = vmul.f32 %v3455, 0.5
  %v3520 = vmul.f32 %v3456, 0.5
  %v3521 = vmul.f32 %v3457, 0.5
  %v3522 = vmul.f32 %v3458, 0.5
  %v3523 = vmul.f32 %v3459, 0.5
  %v3524 = vmul.f32 %v3460, 0.5
  %v3525 = vmul.f32 %v3461, 0.5
  %v3526 = vmul.f32 %v3462, 0.5
  %v3527 = vmul.f32 %v3463, 0.5
  %v3528 = vmul.f32 %v3464, 0.5
  %v3529 = vmul.f32 %v3465, 0.5
  %v3530 = vmul.f32 %v3466, 0.5
  %v3531 = vmul.f32 %v3467, 0.5
  %v3532 = vmul.f32 %v3468, 0.5
  %v3533 = vmul.f32 %v3469, 0.5
  %v3534 = vmul.f32 %v3470, 0.5
  %v3535 = vmul.f32 %v3471, 0.5
  %v3536 = vmul.f32 %v3472, 0.5
  %v3537 = vmul.f32 %v3473, 0.5
  %v3538 = vmul.f32 %v3474, 0.5
  %v3539 = vmul.f32 %v3475, 0.5
  %v3540 = vmul.f32 %v3476, 0.5
  %v3541 = vmul.f32 %v3477, 0.5
  %v3542 = vmul.f32 %v3478, 0.5
  %v3543 = vmul.f32 %v3479, 0.5
  %v3544 = vmul.f32 %v3480, 0.5
  %v3545 = vmul.f32 %v3481, 0.5
  %v3546 = vmul.f32 %v3482, 0.5
  %v3547 = vmul.f32 %v3483, 0.5
  %v3548 = vmul.f32 %v3484, 0.5
  %v3549 = vmul.f32 %v3485, 0.5
  %v3550 = vmul.f32 %v3486, 0.5
  %v3551 = vmul.f32 %v3487, 0.5
  %v3552 = vmul.f32 %v3488, 0.5
  %v3553 = vmul.f32 %v3489, 0.5
  %v3554 = vmul.f32 %v3490, 0.5
  %v3555 = vmul.f32 %v3491, 0.5
  %v3556 = vmul.f32 %v3492, 0.5
  %v3557 = vmul.f32 %v3493, 0.5
  %v3558 = vmul.f32 %v3494, 0.5
  %v3559 = vmul.f32 %v3495, 0.5
  %v3560 = vmul.f32 %v3432, %v3432
  %v3561 = vmul.f32 %v3433, %v3433
  %v3562 = vmul.f32 %v3434, %v3434
  %v3563 = vmul.f32 %v3435, %v3435
  %v3564 = vmul.f32 %v3436, %v3436
  %v3565 = vmul.f32 %v3437, %v3437
  %v3566 = vmul.f32 %v3438, %v3438
  %v3567 = vmul.f32 %v3439, %v3439
  %v3568 = vmul.f32 %v3440, %v3440
  %v3569 = vmul.f32 %v3441, %v3441
  %v3570 = vmul.f32 %v3442, %v3442
  %v3571 = vmul.f32 %v3443, %v3443
  %v3572 = vmul.f32 %v3444, %v3444
  %v3573 = vmul.f32 %v3445, %v3445
  %v3574 = vmul.f32 %v3446, %v3446
  %v3575 = vmul.f32 %v3447, %v3447
  %v3576 = vmul.f32 %v3448, %v3448
  %v3577 = vmul.f32 %v3449, %v3449
  %v3578 = vmul.f32 %v3450, %v3450
  %v3579 = vmul.f32 %v3451, %v3451
  %v3580 = vmul.f32 %v3452, %v3452
  %v3581 = vmul.f32 %v3453, %v3453
  %v3582 = vmul.f32 %v3454, %v3454
  %v3583 = vmul.f32 %v3455, %v3455
  %v3584 = vmul.f32 %v3456, %v3456
  %v3585 = vmul.f32 %v3457, %v3457
  %v3586 = vmul.f32 %v3458, %v3458
  %v3587 = vmul.f32 %v3459, %v3459
  %v3588 = vmul.f32 %v3460, %v3460
  %v3589 = vmul.f32 %v3461, %v3461
  %v3590 = vmul.f32 %v3462, %v3462
  %v3591 = vmul.f32 %v3463, %v3463
  %v3592 = vmul.f32 %v3464, %v3464
  %v3593 = vmul.f32 %v3465, %v3465
  %v3594 = vmul.f32 %v3466, %v3466
  %v3595 = vmul.f32 %v3467, %v3467
  %v3596 = vmul.f32 %v3468, %v3468
  %v3597 = vmul.f32 %v3469, %v3469
  %v3598 = vmul.f32 %v3470, %v3470
  %v3599 = vmul.f32 %v3471, %v3471
  %v3600 = vmul.f32 %v3472, %v3472
  %v3601 = vmul.f32 %v3473, %v3473
  %v3602 = vmul.f32 %v3474, %v3474
  %v3603 = vmul.f32 %v3475, %v3475
  %v3604 = vmul.f32 %v3476, %v3476
  %v3605 = vmul.f32 %v3477, %v3477
  %v3606 = vmul.f32 %v3478, %v3478
  %v3607 = vmul.f32 %v3479, %v3479
  %v3608 = vmul.f32 %v3480, %v3480
  %v3609 = vmul.f32 %v3481, %v3481
  %v3610 = vmul.f32 %v3482, %v3482
  %v3611 = vmul.f32 %v3483, %v3483
  %v3612 = vmul.f32 %v3484, %v3484
  %v3613 = vmul.f32 %v3485, %v3485
  %v3614 = vmul.f32 %v3486, %v3486
  %v3615 = vmul.f32 %v3487, %v3487
  %v3616 = vmul.f32 %v3488, %v3488
  %v3617 = vmul.f32 %v3489, %v3489
  %v3618 = vmul.f32 %v3490, %v3490
  %v3619 = vmul.f32 %v3491, %v3491
  %v3620 = vmul.f32 %v3492, %v3492
  %v3621 = vmul.f32 %v3493, %v3493
  %v3622 = vmul.f32 %v3494, %v3494
  %v3623 = vmul.f32 %v3495, %v3495
  %v3624 = vmul.f32 %v3560, 0.044715
  %v3625 = vmul.f32 %v3561, 0.044715
  %v3626 = vmul.f32 %v3562, 0.044715
  %v3627 = vmul.f32 %v3563, 0.044715
  %v3628 = vmul.f32 %v3564, 0.044715
  %v3629 = vmul.f32 %v3565, 0.044715
  %v3630 = vmul.f32 %v3566, 0.044715
  %v3631 = vmul.f32 %v3567, 0.044715
  %v3632 = vmul.f32 %v3568, 0.044715
  %v3633 = vmul.f32 %v3569, 0.044715
  %v3634 = vmul.f32 %v3570, 0.044715
  %v3635 = vmul.f32 %v3571, 0.044715
  %v3636 = vmul.f32 %v3572, 0.044715
  %v3637 = vmul.f32 %v3573, 0.044715
  %v3638 = vmul.f32 %v3574, 0.044715
  %v3639 = vmul.f32 %v3575, 0.044715
  %v3640 = vmul.f32 %v3576, 0.044715
  %v3641 = vmul.f32 %v3577, 0.044715
  %v3642 = vmul.f32 %v3578, 0.044715
  %v3643 = vmul.f32 %v3579, 0.044715
  %v3644 = vmul.f32 %v3580, 0.044715
  %v3645 = vmul.f32 %v3581, 0.044715
  %v3646 = vmul.f32 %v3582, 0.044715
  %v3647 = vmul.f32 %v3583, 0.044715
  %v3648 = vmul.f32 %v3584, 0.044715
  %v3649 = vmul.f32 %v3585, 0.044715
  %v3650 = vmul.f32 %v3586, 0.044715
  %v3651 = vmul.f32 %v3587, 0.044715
  %v3652 = vmul.f32 %v3588, 0.044715
  %v3653 = vmul.f32 %v3589, 0.044715
  %v3654 = vmul.f32 %v3590, 0.044715
  %v3655 = vmul.f32 %v3591, 0.044715
  %v3656 = vmul.f32 %v3592, 0.044715
  %v3657 = vmul.f32 %v3593, 0.044715
  %v3658 = vmul.f32 %v3594, 0.044715
  %v3659 = vmul.f32 %v3595, 0.044715
  %v3660 = vmul.f32 %v3596, 0.044715
  %v3661 = vmul.f32 %v3597, 0.044715
  %v3662 = vmul.f32 %v3598, 0.044715
  %v3663 = vmul.f32 %v3599, 0.044715
  %v3664 = vmul.f32 %v3600, 0.044715
  %v3665 = vmul.f32 %v3601, 0.044715
  %v3666 = vmul.f32 %v3602, 0.044715
  %v3667 = vmul.f32 %v3603, 0.044715
  %v3668 = vmul.f32 %v3604, 0.044715
  %v3669 = vmul.f32 %v3605, 0.044715
  %v3670 = vmul.f32 %v3606, 0.044715
  %v3671 = vmul.f32 %v3607, 0.044715
  %v3672 = vmul.f32 %v3608, 0.044715
  %v3673 = vmul.f32 %v3609, 0.044715
  %v3674 = vmul.f32 %v3610, 0.044715
  %v3675 = vmul.f32 %v3611, 0.044715
  %v3676 = vmul.f32 %v3612, 0.044715
  %v3677 = vmul.f32 %v3613, 0.044715
  %v3678 = vmul.f32 %v3614, 0.044715
  %v3679 = vmul.f32 %v3615, 0.044715
  %v3680 = vmul.f32 %v3616, 0.044715
  %v3681 = vmul.f32 %v3617, 0.044715
  %v3682 = vmul.f32 %v3618, 0.044715
  %v3683 = vmul.f32 %v3619, 0.044715
  %v3684 = vmul.f32 %v3620, 0.044715
  %v3685 = vmul.f32 %v3621, 0.044715
  %v3686 = vmul.f32 %v3622, 0.044715
  %v3687 = vmul.f32 %v3623, 0.044715
  %v3688 = vmul.f32 %v3624, %v3432
  %v3689 = vmul.f32 %v3625, %v3433
  %v3690 = vmul.f32 %v3626, %v3434
  %v3691 = vmul.f32 %v3627, %v3435
  %v3692 = vmul.f32 %v3628, %v3436
  %v3693 = vmul.f32 %v3629, %v3437
  %v3694 = vmul.f32 %v3630, %v3438
  %v3695 = vmul.f32 %v3631, %v3439
  %v3696 = vmul.f32 %v3632, %v3440
  %v3697 = vmul.f32 %v3633, %v3441
  %v3698 = vmul.f32 %v3634, %v3442
  %v3699 = vmul.f32 %v3635, %v3443
  %v3700 = vmul.f32 %v3636, %v3444
  %v3701 = vmul.f32 %v3637, %v3445
  %v3702 = vmul.f32 %v3638, %v3446
  %v3703 = vmul.f32 %v3639, %v3447
  %v3704 = vmul.f32 %v3640, %v3448
  %v3705 = vmul.f32 %v3641, %v3449
  %v3706 = vmul.f32 %v3642, %v3450
  %v3707 = vmul.f32 %v3643, %v3451
  %v3708 = vmul.f32 %v3644, %v3452
  %v3709 = vmul.f32 %v3645, %v3453
  %v3710 = vmul.f32 %v3646, %v3454
  %v3711 = vmul.f32 %v3647, %v3455
  %v3712 = vmul.f32 %v3648, %v3456
  %v3713 = vmul.f32 %v3649, %v3457
  %v3714 = vmul.f32 %v3650, %v3458
  %v3715 = vmul.f32 %v3651, %v3459
  %v3716 = vmul.f32 %v3652, %v3460
  %v3717 = vmul.f32 %v3653, %v3461
  %v3718 = vmul.f32 %v3654, %v3462
  %v3719 = vmul.f32 %v3655, %v3463
  %v3720 = vmul.f32 %v3656, %v3464
  %v3721 = vmul.f32 %v3657, %v3465
  %v3722 = vmul.f32 %v3658, %v3466
  %v3723 = vmul.f32 %v3659, %v3467
  %v3724 = vmul.f32 %v3660, %v3468
  %v3725 = vmul.f32 %v3661, %v3469
  %v3726 = vmul.f32 %v3662, %v3470
  %v3727 = vmul.f32 %v3663, %v3471
  %v3728 = vmul.f32 %v3664, %v3472
  %v3729 = vmul.f32 %v3665, %v3473
  %v3730 = vmul.f32 %v3666, %v3474
  %v3731 = vmul.f32 %v3667, %v3475
  %v3732 = vmul.f32 %v3668, %v3476
  %v3733 = vmul.f32 %v3669, %v3477
  %v3734 = vmul.f32 %v3670, %v3478
  %v3735 = vmul.f32 %v3671, %v3479
  %v3736 = vmul.f32 %v3672, %v3480
  %v3737 = vmul.f32 %v3673, %v3481
  %v3738 = vmul.f32 %v3674, %v3482
  %v3739 = vmul.f32 %v3675, %v3483
  %v3740 = vmul.f32 %v3676, %v3484
  %v3741 = vmul.f32 %v3677, %v3485
  %v3742 = vmul.f32 %v3678, %v3486
  %v3743 = vmul.f32 %v3679, %v3487
  %v3744 = vmul.f32 %v3680, %v3488
  %v3745 = vmul.f32 %v3681, %v3489
  %v3746 = vmul.f32 %v3682, %v3490
  %v3747 = vmul.f32 %v3683, %v3491
  %v3748 = vmul.f32 %v3684, %v3492
  %v3749 = vmul.f32 %v3685, %v3493
  %v3750 = vmul.f32 %v3686, %v3494
  %v3751 = vmul.f32 %v3687, %v3495
  %v3752 = vadd.f32 %v3432, %v3688
  %v3753 = vadd.f32 %v3433, %v3689
  %v3754 = vadd.f32 %v3434, %v3690
  %v3755 = vadd.f32 %v3435, %v3691
  %v3756 = vadd.f32 %v3436, %v3692
  %v3757 = vadd.f32 %v3437, %v3693
  %v3758 = vadd.f32 %v3438, %v3694
  %v3759 = vadd.f32 %v3439, %v3695
  %v3760 = vadd.f32 %v3440, %v3696
  %v3761 = vadd.f32 %v3441, %v3697
  %v3762 = vadd.f32 %v3442, %v3698
  %v3763 = vadd.f32 %v3443, %v3699
  %v3764 = vadd.f32 %v3444, %v3700
  %v3765 = vadd.f32 %v3445, %v3701
  %v3766 = vadd.f32 %v3446, %v3702
  %v3767 = vadd.f32 %v3447, %v3703
  %v3768 = vadd.f32 %v3448, %v3704
  %v3769 = vadd.f32 %v3449, %v3705
  %v3770 = vadd.f32 %v3450, %v3706
  %v3771 = vadd.f32 %v3451, %v3707
  %v3772 = vadd.f32 %v3452, %v3708
  %v3773 = vadd.f32 %v3453, %v3709
  %v3774 = vadd.f32 %v3454, %v3710
  %v3775 = vadd.f32 %v3455, %v3711
  %v3776 = vadd.f32 %v3456, %v3712
  %v3777 = vadd.f32 %v3457, %v3713
  %v3778 = vadd.f32 %v3458, %v3714
  %v3779 = vadd.f32 %v3459, %v3715
  %v3780 = vadd.f32 %v3460, %v3716
  %v3781 = vadd.f32 %v3461, %v3717
  %v3782 = vadd.f32 %v3462, %v3718
  %v3783 = vadd.f32 %v3463, %v3719
  %v3784 = vadd.f32 %v3464, %v3720
  %v3785 = vadd.f32 %v3465, %v3721
  %v3786 = vadd.f32 %v3466, %v3722
  %v3787 = vadd.f32 %v3467, %v3723
  %v3788 = vadd.f32 %v3468, %v3724
  %v3789 = vadd.f32 %v3469, %v3725
  %v3790 = vadd.f32 %v3470, %v3726
  %v3791 = vadd.f32 %v3471, %v3727
  %v3792 = vadd.f32 %v3472, %v3728
  %v3793 = vadd.f32 %v3473, %v3729
  %v3794 = vadd.f32 %v3474, %v3730
  %v3795 = vadd.f32 %v3475, %v3731
  %v3796 = vadd.f32 %v3476, %v3732
  %v3797 = vadd.f32 %v3477, %v3733
  %v3798 = vadd.f32 %v3478, %v3734
  %v3799 = vadd.f32 %v3479, %v3735
  %v3800 = vadd.f32 %v3480, %v3736
  %v3801 = vadd.f32 %v3481, %v3737
  %v3802 = vadd.f32 %v3482, %v3738
  %v3803 = vadd.f32 %v3483, %v3739
  %v3804 = vadd.f32 %v3484, %v3740
  %v3805 = vadd.f32 %v3485, %v3741
  %v3806 = vadd.f32 %v3486, %v3742
  %v3807 = vadd.f32 %v3487, %v3743
  %v3808 = vadd.f32 %v3488, %v3744
  %v3809 = vadd.f32 %v3489, %v3745
  %v3810 = vadd.f32 %v3490, %v3746
  %v3811 = vadd.f32 %v3491, %v3747
  %v3812 = vadd.f32 %v3492, %v3748
  %v3813 = vadd.f32 %v3493, %v3749
  %v3814 = vadd.f32 %v3494, %v3750
  %v3815 = vadd.f32 %v3495, %v3751
  %v3816 = vmul.f32 %v3752, 0.7978846
  %v3817 = vmul.f32 %v3753, 0.7978846
  %v3818 = vmul.f32 %v3754, 0.7978846
  %v3819 = vmul.f32 %v3755, 0.7978846
  %v3820 = vmul.f32 %v3756, 0.7978846
  %v3821 = vmul.f32 %v3757, 0.7978846
  %v3822 = vmul.f32 %v3758, 0.7978846
  %v3823 = vmul.f32 %v3759, 0.7978846
  %v3824 = vmul.f32 %v3760, 0.7978846
  %v3825 = vmul.f32 %v3761, 0.7978846
  %v3826 = vmul.f32 %v3762, 0.7978846
  %v3827 = vmul.f32 %v3763, 0.7978846
  %v3828 = vmul.f32 %v3764, 0.7978846
  %v3829 = vmul.f32 %v3765, 0.7978846
  %v3830 = vmul.f32 %v3766, 0.7978846
  %v3831 = vmul.f32 %v3767, 0.7978846
  %v3832 = vmul.f32 %v3768, 0.7978846
  %v3833 = vmul.f32 %v3769, 0.7978846
  %v3834 = vmul.f32 %v3770, 0.7978846
  %v3835 = vmul.f32 %v3771, 0.7978846
  %v3836 = vmul.f32 %v3772, 0.7978846
  %v3837 = vmul.f32 %v3773, 0.7978846
  %v3838 = vmul.f32 %v3774, 0.7978846
  %v3839 = vmul.f32 %v3775, 0.7978846
  %v3840 = vmul.f32 %v3776, 0.7978846
  %v3841 = vmul.f32 %v3777, 0.7978846
  %v3842 = vmul.f32 %v3778, 0.7978846
  %v3843 = vmul.f32 %v3779, 0.7978846
  %v3844 = vmul.f32 %v3780, 0.7978846
  %v3845 = vmul.f32 %v3781, 0.7978846
  %v3846 = vmul.f32 %v3782, 0.7978846
  %v3847 = vmul.f32 %v3783, 0.7978846
  %v3848 = vmul.f32 %v3784, 0.7978846
  %v3849 = vmul.f32 %v3785, 0.7978846
  %v3850 = vmul.f32 %v3786, 0.7978846
  %v3851 = vmul.f32 %v3787, 0.7978846
  %v3852 = vmul.f32 %v3788, 0.7978846
  %v3853 = vmul.f32 %v3789, 0.7978846
  %v3854 = vmul.f32 %v3790, 0.7978846
  %v3855 = vmul.f32 %v3791, 0.7978846
  %v3856 = vmul.f32 %v3792, 0.7978846
  %v3857 = vmul.f32 %v3793, 0.7978846
  %v3858 = vmul.f32 %v3794, 0.7978846
  %v3859 = vmul.f32 %v3795, 0.7978846
  %v3860 = vmul.f32 %v3796, 0.7978846
  %v3861 = vmul.f32 %v3797, 0.7978846
  %v3862 = vmul.f32 %v3798, 0.7978846
  %v3863 = vmul.f32 %v3799, 0.7978846
  %v3864 = vmul.f32 %v3800, 0.7978846
  %v3865 = vmul.f32 %v3801, 0.7978846
  %v3866 = vmul.f32 %v3802, 0.7978846
  %v3867 = vmul.f32 %v3803, 0.7978846
  %v3868 = vmul.f32 %v3804, 0.7978846
  %v3869 = vmul.f32 %v3805, 0.7978846
  %v3870 = vmul.f32 %v3806, 0.7978846
  %v3871 = vmul.f32 %v3807, 0.7978846
  %v3872 = vmul.f32 %v3808, 0.7978846
  %v3873 = vmul.f32 %v3809, 0.7978846
  %v3874 = vmul.f32 %v3810, 0.7978846
  %v3875 = vmul.f32 %v3811, 0.7978846
  %v3876 = vmul.f32 %v3812, 0.7978846
  %v3877 = vmul.f32 %v3813, 0.7978846
  %v3878 = vmul.f32 %v3814, 0.7978846
  %v3879 = vmul.f32 %v3815, 0.7978846
  %v3880 = vtanh.pop %v3816
  %v3881 = vtanh.pop %v3817
  %v3882 = vtanh.pop %v3818
  %v3883 = vtanh.pop %v3819
  %v3884 = vtanh.pop %v3820
  %v3885 = vtanh.pop %v3821
  %v3886 = vtanh.pop %v3822
  %v3887 = vtanh.pop %v3823
  %v3888 = vtanh.pop %v3824
  %v3889 = vtanh.pop %v3825
  %v3890 = vtanh.pop %v3826
  %v3891 = vtanh.pop %v3827
  %v3892 = vtanh.pop %v3828
  %v3893 = vtanh.pop %v3829
  %v3894 = vtanh.pop %v3830
  %v3895 = vtanh.pop %v3831
  %v3896 = vtanh.pop %v3832
  %v3897 = vtanh.pop %v3833
  %v3898 = vtanh.pop %v3834
  %v3899 = vtanh.pop %v3835
  %v3900 = vtanh.pop %v3836
  %v3901 = vtanh.pop %v3837
  %v3902 = vtanh.pop %v3838
  %v3903 = vtanh.pop %v3839
  %v3904 = vtanh.pop %v3840
  %v3905 = vtanh.pop %v3841
  %v3906 = vtanh.pop %v3842
  %v3907 = vtanh.pop %v3843
  %v3908 = vtanh.pop %v3844
  %v3909 = vtanh.pop %v3845
  %v3910 = vtanh.pop %v3846
  %v3911 = vtanh.pop %v3847
  %v3912 = vtanh.pop %v3848
  %v3913 = vtanh.pop %v3849
  %v3914 = vtanh.pop %v3850
  %v3915 = vtanh.pop %v3851
  %v3916 = vtanh.pop %v3852
  %v3917 = vtanh.pop %v3853
  %v3918 = vtanh.pop %v3854
  %v3919 = vtanh.pop %v3855
  %v3920 = vtanh.pop %v3856
  %v3921 = vtanh.pop %v3857
  %v3922 = vtanh.pop %v3858
  %v3923 = vtanh.pop %v3859
  %v3924 = vtanh.pop %v3860
  %v3925 = vtanh.pop %v3861
  %v3926 = vtanh.pop %v3862
  %v3927 = vtanh.pop %v3863
  %v3928 = vtanh.pop %v3864
  %v3929 = vtanh.pop %v3865
  %v3930 = vtanh.pop %v3866
  %v3931 = vtanh.pop %v3867
  %v3932 = vtanh.pop %v3868
  %v3933 = vtanh.pop %v3869
  %v3934 = vtanh.pop %v3870
  %v3935 = vtanh.pop %v3871
  %v3936 = vtanh.pop %v3872
  %v3937 = vtanh.pop %v3873
  %v3938 = vtanh.pop %v3874
  %v3939 = vtanh.pop %v3875
  %v3940 = vtanh.pop %v3876
  %v3941 = vtanh.pop %v3877
  %v3942 = vtanh.pop %v3878
  %v3943 = vtanh.pop %v3879
  %v3944 = vadd.f32 %v3880, 1.0
  %v3945 = vadd.f32 %v3881, 1.0
  %v3946 = vadd.f32 %v3882, 1.0
  %v3947 = vadd.f32 %v3883, 1.0
  %v3948 = vadd.f32 %v3884, 1.0
  %v3949 = vadd.f32 %v3885, 1.0
  %v3950 = vadd.f32 %v3886, 1.0
  %v3951 = vadd.f32 %v3887, 1.0
  %v3952 = vadd.f32 %v3888, 1.0
  %v3953 = vadd.f32 %v3889, 1.0
  %v3954 = vadd.f32 %v3890, 1.0
  %v3955 = vadd.f32 %v3891, 1.0
  %v3956 = vadd.f32 %v3892, 1.0
  %v3957 = vadd.f32 %v3893, 1.0
  %v3958 = vadd.f32 %v3894, 1.0
  %v3959 = vadd.f32 %v3895, 1.0
  %v3960 = vadd.f32 %v3896, 1.0
  %v3961 = vadd.f32 %v3897, 1.0
  %v3962 = vadd.f32 %v3898, 1.0
  %v3963 = vadd.f32 %v3899, 1.0
  %v3964 = vadd.f32 %v3900, 1.0
  %v3965 = vadd.f32 %v3901, 1.0
  %v3966 = vadd.f32 %v3902, 1.0
  %v3967 = vadd.f32 %v3903, 1.0
  %v3968 = vadd.f32 %v3904, 1.0
  %v3969 = vadd.f32 %v3905, 1.0
  %v3970 = vadd.f32 %v3906, 1.0
  %v3971 = vadd.f32 %v3907, 1.0
  %v3972 = vadd.f32 %v3908, 1.0
  %v3973 = vadd.f32 %v3909, 1.0
  %v3974 = vadd.f32 %v3910, 1.0
  %v3975 = vadd.f32 %v3911, 1.0
  %v3976 = vadd.f32 %v3912, 1.0
  %v3977 = vadd.f32 %v3913, 1.0
  %v3978 = vadd.f32 %v3914, 1.0
  %v3979 = vadd.f32 %v3915, 1.0
  %v3980 = vadd.f32 %v3916, 1.0
  %v3981 = vadd.f32 %v3917, 1.0
  %v3982 = vadd.f32 %v3918, 1.0
  %v3983 = vadd.f32 %v3919, 1.0
  %v3984 = vadd.f32 %v3920, 1.0
  %v3985 = vadd.f32 %v3921, 1.0
  %v3986 = vadd.f32 %v3922, 1.0
  %v3987 = vadd.f32 %v3923, 1.0
  %v3988 = vadd.f32 %v3924, 1.0
  %v3989 = vadd.f32 %v3925, 1.0
  %v3990 = vadd.f32 %v3926, 1.0
  %v3991 = vadd.f32 %v3927, 1.0
  %v3992 = vadd.f32 %v3928, 1.0
  %v3993 = vadd.f32 %v3929, 1.0
  %v3994 = vadd.f32 %v3930, 1.0
  %v3995 = vadd.f32 %v3931, 1.0
  %v3996 = vadd.f32 %v3932, 1.0
  %v3997 = vadd.f32 %v3933, 1.0
  %v3998 = vadd.f32 %v3934, 1.0
  %v3999 = vadd.f32 %v3935, 1.0
  %v4000 = vadd.f32 %v3936, 1.0
  %v4001 = vadd.f32 %v3937, 1.0
  %v4002 = vadd.f32 %v3938, 1.0
  %v4003 = vadd.f32 %v3939, 1.0
  %v4004 = vadd.f32 %v3940, 1.0
  %v4005 = vadd.f32 %v3941, 1.0
  %v4006 = vadd.f32 %v3942, 1.0
  %v4007 = vadd.f32 %v3943, 1.0
  %v4008 = vmul.f32 %v3496, %v3944
  %v4009 = vmul.f32 %v3497, %v3945
  %v4010 = vmul.f32 %v3498, %v3946
  %v4011 = vmul.f32 %v3499, %v3947
  %v4012 = vmul.f32 %v3500, %v3948
  %v4013 = vmul.f32 %v3501, %v3949
  %v4014 = vmul.f32 %v3502, %v3950
  %v4015 = vmul.f32 %v3503, %v3951
  %v4016 = vmul.f32 %v3504, %v3952
  %v4017 = vmul.f32 %v3505, %v3953
  %v4018 = vmul.f32 %v3506, %v3954
  %v4019 = vmul.f32 %v3507, %v3955
  %v4020 = vmul.f32 %v3508, %v3956
  %v4021 = vmul.f32 %v3509, %v3957
  %v4022 = vmul.f32 %v3510, %v3958
  %v4023 = vmul.f32 %v3511, %v3959
  %v4024 = vmul.f32 %v3512, %v3960
  %v4025 = vmul.f32 %v3513, %v3961
  %v4026 = vmul.f32 %v3514, %v3962
  %v4027 = vmul.f32 %v3515, %v3963
  %v4028 = vmul.f32 %v3516, %v3964
  %v4029 = vmul.f32 %v3517, %v3965
  %v4030 = vmul.f32 %v3518, %v3966
  %v4031 = vmul.f32 %v3519, %v3967
  %v4032 = vmul.f32 %v3520, %v3968
  %v4033 = vmul.f32 %v3521, %v3969
  %v4034 = vmul.f32 %v3522, %v3970
  %v4035 = vmul.f32 %v3523, %v3971
  %v4036 = vmul.f32 %v3524, %v3972
  %v4037 = vmul.f32 %v3525, %v3973
  %v4038 = vmul.f32 %v3526, %v3974
  %v4039 = vmul.f32 %v3527, %v3975
  %v4040 = vmul.f32 %v3528, %v3976
  %v4041 = vmul.f32 %v3529, %v3977
  %v4042 = vmul.f32 %v3530, %v3978
  %v4043 = vmul.f32 %v3531, %v3979
  %v4044 = vmul.f32 %v3532, %v3980
  %v4045 = vmul.f32 %v3533, %v3981
  %v4046 = vmul.f32 %v3534, %v3982
  %v4047 = vmul.f32 %v3535, %v3983
  %v4048 = vmul.f32 %v3536, %v3984
  %v4049 = vmul.f32 %v3537, %v3985
  %v4050 = vmul.f32 %v3538, %v3986
  %v4051 = vmul.f32 %v3539, %v3987
  %v4052 = vmul.f32 %v3540, %v3988
  %v4053 = vmul.f32 %v3541, %v3989
  %v4054 = vmul.f32 %v3542, %v3990
  %v4055 = vmul.f32 %v3543, %v3991
  %v4056 = vmul.f32 %v3544, %v3992
  %v4057 = vmul.f32 %v3545, %v3993
  %v4058 = vmul.f32 %v3546, %v3994
  %v4059 = vmul.f32 %v3547, %v3995
  %v4060 = vmul.f32 %v3548, %v3996
  %v4061 = vmul.f32 %v3549, %v3997
  %v4062 = vmul.f32 %v3550, %v3998
  %v4063 = vmul.f32 %v3551, %v3999
  %v4064 = vmul.f32 %v3552, %v4000
  %v4065 = vmul.f32 %v3553, %v4001
  %v4066 = vmul.f32 %v3554, %v4002
  %v4067 = vmul.f32 %v3555, %v4003
  %v4068 = vmul.f32 %v3556, %v4004
  %v4069 = vmul.f32 %v3557, %v4005
  %v4070 = vmul.f32 %v3558, %v4006
  %v4071 = vmul.f32 %v3559, %v4007
  %v4072 = vadd.f32 %v4008, %v4009
  %v4073 = vadd.f32 %v4024, %v4025
  %v4074 = vadd.f32 %v4040, %v4041
  %v4075 = vadd.f32 %v4056, %v4057
  %v4076 = vadd.f32 %v4010, %v4011
  %v4077 = vadd.f32 %v4026, %v4027
  %v4078 = vadd.f32 %v4042, %v4043
  %v4079 = vadd.f32 %v4058, %v4059
  %v4080 = vadd.f32 %v4012, %v4013
  %v4081 = vadd.f32 %v4028, %v4029
  %v4082 = vadd.f32 %v4044, %v4045
  %v4083 = vadd.f32 %v4060, %v4061
  %v4084 = vadd.f32 %v4014, %v4015
  %v4085 = vadd.f32 %v4030, %v4031
  %v4086 = vadd.f32 %v4046, %v4047
  %v4087 = vadd.f32 %v4062, %v4063
  %v4088 = vadd.f32 %v4016, %v4017
  %v4089 = vadd.f32 %v4032, %v4033
  %v4090 = vadd.f32 %v4048, %v4049
  %v4091 = vadd.f32 %v4064, %v4065
  %v4092 = vadd.f32 %v4018, %v4019
  %v4093 = vadd.f32 %v4034, %v4035
  %v4094 = vadd.f32 %v4050, %v4051
  %v4095 = vadd.f32 %v4066, %v4067
  %v4096 = vadd.f32 %v4020, %v4021
  %v4097 = vadd.f32 %v4036, %v4037
  %v4098 = vadd.f32 %v4052, %v4053
  %v4099 = vadd.f32 %v4068, %v4069
  %v4100 = vadd.f32 %v4022, %v4023
  %v4101 = vadd.f32 %v4038, %v4039
  %v4102 = vadd.f32 %v4054, %v4055
  %v4103 = vadd.f32 %v4070, %v4071
  %v4104 = vadd.f32 %v4072, %v4076
  %v4105 = vadd.f32 %v4073, %v4077
  %v4106 = vadd.f32 %v4074, %v4078
  %v4107 = vadd.f32 %v4075, %v4079
  %v4108 = vadd.f32 %v4080, %v4084
  %v4109 = vadd.f32 %v4081, %v4085
  %v4110 = vadd.f32 %v4082, %v4086
  %v4111 = vadd.f32 %v4083, %v4087
  %v4112 = vadd.f32 %v4088, %v4092
  %v4113 = vadd.f32 %v4089, %v4093
  %v4114 = vadd.f32 %v4090, %v4094
  %v4115 = vadd.f32 %v4091, %v4095
  %v4116 = vadd.f32 %v4096, %v4100
  %v4117 = vadd.f32 %v4097, %v4101
  %v4118 = vadd.f32 %v4098, %v4102
  %v4119 = vadd.f32 %v4099, %v4103
  %v4120 = vadd.f32 %v4104, %v4108
  %v4121 = vadd.f32 %v4105, %v4109
  %v4122 = vadd.f32 %v4106, %v4110
  %v4123 = vadd.f32 %v4107, %v4111
  %v4124 = vadd.f32 %v4112, %v4116
  %v4125 = vadd.f32 %v4113, %v4117
  %v4126 = vadd.f32 %v4114, %v4118
  %v4127 = vadd.f32 %v4115, %v4119
  %v4128 = vadd.f32 %v4120, %v4124
  %v4129 = vadd.f32 %v4121, %v4125
  %v4130 = vadd.f32 %v4122, %v4126
  %v4131 = vadd.f32 %v4123, %v4127
  %v4132 = vmul.f32 %v4128, 0.0625
  %v4133 = vmul.f32 %v4129, 0.0625
  %v4134 = vmul.f32 %v4130, 0.0625
  %v4135 = vmul.f32 %v4131, 0.0625
  %4136 = vst [vmem:[%s6] sm:$0xff] %v4132
  %4137 = vst [vmem:[%s6 + $0x8] sm:$0xff] %v4133
  %4138 = vst [vmem:[%s6 + $0x10] sm:$0xff] %v4134
  %4139 = vst [vmem:[%s6 + $0x18] sm:$0xff] %v4135
  // Predicated region
  $region26: #{edgeconv1_forward.1} parent=0 // pred_check
    _
  $region27: #{edgeconv1_forward.1} parent=0 // pred_check_branch
    %4141 = sbr.rel (0) target = $region29
  $region28: #{edgeconv1_forward.1} parent=0 // pred_region
    _
  $region29: #{edgeconv1_forward.1} parent=0 // pred_fallthru
    _
  // Predicated region
  $region30: #{edgeconv1_forward.1} parent=0 // pred_check
    _
  $region31: #{edgeconv1_forward.1} parent=0 // pred_check_branch
    %4143 = sbr.rel (0) target = $region33
  $region32: #{edgeconv1_forward.1} parent=0 // pred_region
    _
  $region33: #{edgeconv1_forward.1} parent=0 // pred_fallthru
    _

</llo_original>
